<compile_context>
chip_gen: v7x
topology: tpu7x:2x2x1
jax: 0.10.0
libtpu: 0.0.40
codegen_flags: <defaults>
</compile_context>

<pallas_src>
import functools

import jax
import jax.numpy as jnp
from jax.experimental import pallas as pl
from jax.experimental.pallas import tpu as pltpu


# ---------------------------------------------------------------------------
# Pallas kernel 1: fused conv-matmul + bias + ReLU + 2x2 max-pool
# ---------------------------------------------------------------------------
def _conv_relu_pool_kernel(p_ref, w_ref, b_ref, o_ref):
    """p_ref: (4, tm, 9*Cin) bf16 (4 pool-phase patch blocks)
       w_ref: (9*Cin, Cout) bf16, b_ref: (1, Cout) f32, o_ref: (tm, Cout) bf16."""
    w = w_ref[...]
    b = b_ref[...]

    def conv_phase(p):
        acc = jnp.dot(p_ref[p], w, preferred_element_type=jnp.float32)
        return jnp.maximum(acc + b, 0.0)          # bias + ReLU in f32

    pooled = jnp.maximum(jnp.maximum(conv_phase(0), conv_phase(1)),
                         jnp.maximum(conv_phase(2), conv_phase(3)))
    o_ref[...] = pooled.astype(o_ref.dtype)


def conv_relu_pool(patches4, w, b_row, *, tm=512):
    """patches4: (4, M, K) bf16, w: (K, N) bf16, b_row: (1, N) f32 -> (M, N) bf16.

    M = B * Ho * Wo (pooled spatial positions).  Tiled over M only; K and N
    (<=288 / <=64) are full-extent blocks.  Per grid step the double-buffered
    VMEM footprint is 2*(4*tm*K + tm*N)*2B + K*N*2B; with tm=512 that is
    ~2.5 MiB for conv2 — well inside the 32 MiB scoped-VMEM default of v7x
    (64 MiB physical), leaving headroom for pipelining.
    """
    _, M, K = patches4.shape
    Kw, N = w.shape
    assert Kw == K and b_row.shape == (1, N)
    tm = M if M <= tm else tm                     # single full block at small M
    grid = (pl.cdiv(M, tm),)
    return pl.pallas_call(
        _conv_relu_pool_kernel,
        out_shape=jax.ShapeDtypeStruct((M, N), jnp.bfloat16),
        grid=grid,
        in_specs=[pl.BlockSpec((4, tm, K), lambda i: (0, i, 0)),
                  pl.BlockSpec((K, N), lambda i: (0, 0)),
                  pl.BlockSpec((1, N), lambda i: (0, 0))],
        out_specs=pl.BlockSpec((tm, N), lambda i: (i, 0)),
        compiler_params=pltpu.CompilerParams(
            dimension_semantics=("parallel",)),
    )(patches4, w, b_row)


# ---------------------------------------------------------------------------
# Pallas kernel 2: fused Linear(3136,128) -> ReLU -> Linear(128,10)
# ---------------------------------------------------------------------------
def _fc_fused_kernel(x_ref, w1_ref, b1_ref, w2_ref, b2_ref, o_ref):
    h = jnp.dot(x_ref[...], w1_ref[...], preferred_element_type=jnp.float32)
    h = jnp.maximum(h + b1_ref[...], 0.0)
    o = jnp.dot(h.astype(jnp.bfloat16), w2_ref[...],
                preferred_element_type=jnp.float32)
    o_ref[...] = (o + b2_ref[...]).astype(o_ref.dtype)


def fc_fused(x, w1, b1, w2, b2, *, tb=256):
    """x: (B, K1) bf16; w1: (K1, N1) bf16; w2: (N1, N2) bf16; biases (1, Ni) f32."""
    M, K1 = x.shape
    N1 = w1.shape[1]
    N2 = w2.shape[1]
    tb = M if M <= tb else tb
    grid = (pl.cdiv(M, tb),)
    # TODO(synk): quantize w1 (int8 on v5e/v6e, fp8-e4m3 on v7x) with a
    # per-column f32 scale to halve the dominant fc1-weight DMA.
    return pl.pallas_call(
        _fc_fused_kernel,
        out_shape=jax.ShapeDtypeStruct((M, N2), jnp.float32),
        grid=grid,
        in_specs=[pl.BlockSpec((tb, K1), lambda i: (i, 0)),
                  pl.BlockSpec((K1, N1), lambda i: (0, 0)),
                  pl.BlockSpec((1, N1), lambda i: (0, 0)),
                  pl.BlockSpec((N1, N2), lambda i: (0, 0)),
                  pl.BlockSpec((1, N2), lambda i: (0, 0))],
        out_specs=pl.BlockSpec((tb, N2), lambda i: (i, 0)),
        compiler_params=pltpu.CompilerParams(
            dimension_semantics=("parallel",)),
    )(x, w1, b1, w2, b2)


# ---------------------------------------------------------------------------
# XLA glue: pool-phase im2col patch construction (3x3, stride 1, padding 1)
# ---------------------------------------------------------------------------
def build_pool_phase_patches(x_nhwc):
    """x: (B, H, W, Cin) bf16 -> (4, B*(H//2)*(W//2), 9*Cin) bf16.

    Phase (pi, pj) holds the im2col patches of conv positions
    (2*ho + pi, 2*wo + pj) so the kernel can do conv + ReLU + pool in VMEM.
    Feature order of the 9*Cin axis is (kh, kw, cin) and matches conv_w repack.
    """
    B, H, W, Cin = x_nhwc.shape
    Ho, Wo = H // 2, W // 2
    xp = jnp.pad(x_nhwc, ((0, 0), (1, 1), (1, 1), (0, 0)))
    # TODO(synk): assemble these taps inside the kernel from the padded NHWC
    # block in VMEM to avoid materialising the 9x-expanded patches in HBM.
    phases = []
    for pi in range(2):
        for pj in range(2):
            taps = [xp[:, pi + di::2, pj + dj::2, :][:, :Ho, :Wo, :]
                    for di in range(3) for dj in range(3)]
            phases.append(jnp.concatenate(taps, axis=-1)
                          .reshape(B * Ho * Wo, 9 * Cin))
    return jnp.stack(phases, axis=0)


# ---------------------------------------------------------------------------
# Parameters (PyTorch layouts) + one-time repacking outside the forward
# ---------------------------------------------------------------------------
def init_params(key):
    ks = jax.random.split(key, 8)
    s = 0.05
    return {
        "conv1_w": s * jax.random.normal(ks[0], (32, 1, 3, 3), jnp.float32),
        "conv1_b": s * jax.random.normal(ks[1], (32,), jnp.float32),
        "conv2_w": s * jax.random.normal(ks[2], (64, 32, 3, 3), jnp.float32),
        "conv2_b": s * jax.random.normal(ks[3], (64,), jnp.float32),
        "fc1_w": s * jax.random.normal(ks[4], (128, 64 * 7 * 7), jnp.float32),
        "fc1_b": s * jax.random.normal(ks[5], (128,), jnp.float32),
        "fc2_w": s * jax.random.normal(ks[6], (10, 128), jnp.float32),
        "fc2_b": s * jax.random.normal(ks[7], (10,), jnp.float32),
    }


def prepare_params(params):
    """One-time weight repack (runs once, outside the jitted forward).

    conv (Cout,Cin,3,3) -> (9*Cin, Cout) bf16 in (kh,kw,cin) row order;
    fc1 (128, 3136 NCHW-ordered) -> (3136 NHWC-ordered, 128) bf16, folding the
    Flatten permutation into the weight so the forward needs no transpose;
    fc2 -> (128, 10) bf16; biases -> (1, N) f32.
    """
    def conv_w(w):
        return (jnp.transpose(w, (2, 3, 1, 0))
                .reshape(-1, w.shape[0]).astype(jnp.bfloat16))

    fc1 = params["fc1_w"].reshape(128, 64, 7, 7)          # (n, c, h, w)
    fc1 = jnp.transpose(fc1, (2, 3, 1, 0)).reshape(64 * 7 * 7, 128)  # NHWC rows

    return {
        "conv1_w": conv_w(params["conv1_w"]),                       # (9, 32)    bf16
        "conv1_b": params["conv1_b"].reshape(1, -1).astype(jnp.float32),
        "conv2_w": conv_w(params["conv2_w"]),                       # (288, 64)  bf16
        "conv2_b": params["conv2_b"].reshape(1, -1).astype(jnp.float32),
        "fc1_w": fc1.astype(jnp.bfloat16),                          # (3136, 128) bf16
        "fc1_b": params["fc1_b"].reshape(1, -1).astype(jnp.float32),
        "fc2_w": params["fc2_w"].T.astype(jnp.bfloat16),            # (128, 10)  bf16
        "fc2_b": params["fc2_b"].reshape(1, -1).astype(jnp.float32),
    }


# ---------------------------------------------------------------------------
# Full forward pass: 3 pallas_calls, bf16 inter-kernel activations
# ---------------------------------------------------------------------------
@jax.jit
def cnn_forward(x_nchw, prepared):
    B, _, H, W = x_nchw.shape
    x = jnp.transpose(x_nchw, (0, 2, 3, 1)).astype(jnp.bfloat16)   # NHWC bf16

    p1 = build_pool_phase_patches(x)                               # (4, B*H/2*W/2, 9)
    h1 = conv_relu_pool(p1, prepared["conv1_w"], prepared["conv1_b"])
    h1 = h1.reshape(B, H // 2, W // 2, 32)                         # (B,14,14,32) bf16

    p2 = build_pool_phase_patches(h1)                              # (4, B*H/4*W/4, 288)
    h2 = conv_relu_pool(p2, prepared["conv2_w"], prepared["conv2_b"])
    x_fc = h2.reshape(B, (H // 4) * (W // 4) * 64)                 # NHWC flatten (B,3136)

    return fc_fused(x_fc, prepared["fc1_w"], prepared["fc1_b"],
                    prepared["fc2_w"], prepared["fc2_b"])          # (B, 10) f32


if __name__ == "__main__":
    key = jax.random.PRNGKey(0)
    pkey, xkey = jax.random.split(key)
    params = init_params(pkey)
    prepared = prepare_params(params)       # one-time repack, hoisted out of forward
    # 28x28 single-channel input is implied by Linear(64*7*7, 128)
    x = jax.random.normal(xkey, (2, 1, 28, 28), jnp.float32)
    out = cnn_forward(x, prepared)
    out = jax.block_until_ready(out)
    assert out.shape == (2, 10) and out.dtype == jnp.float32
    assert bool(jnp.all(jnp.isfinite(out)))
    print("KERNEL_OK")
</pallas_src>

<mosaic_0001>
module attributes {stable_mosaic.version = 11 : i64} {
  func.func @_conv_relu_pool_kernel(%arg0: i32, %arg1: memref<4x392x9xbf16, #tpu.memory_space<vmem>>, %arg2: memref<9x32xbf16, #tpu.memory_space<vmem>>, %arg3: memref<1x32xf32, #tpu.memory_space<vmem>>, %arg4: memref<392x32xbf16, #tpu.memory_space<vmem>>) attributes {dimension_semantics = [#tpu.dimension_semantics<parallel>], iteration_bounds = array<i64: 1>, scalar_prefetch = 0 : i64, scratch_operands = 0 : i64, tpu.core_type = #tpu.core_type<tc>, window_params = [{transform_indices = @transform_0, window_bounds = array<i64: 4, 392, 9>}, {pipeline_mode = #tpu.pipeline_mode<synchronous>, transform_indices = @transform_1, window_bounds = array<i64: 9, 32>}, {pipeline_mode = #tpu.pipeline_mode<synchronous>, transform_indices = @transform_2, window_bounds = array<i64: 1, 32>}, {transform_indices = @transform_3, window_bounds = array<i64: 392, 32>}]} {
    %c0 = arith.constant 0 : index
    %c0_0 = arith.constant 0 : index
    %0 = vector.load %arg2[%c0, %c0_0] : memref<9x32xbf16, #tpu.memory_space<vmem>>, vector<9x32xbf16>
    %c0_1 = arith.constant 0 : index
    %c0_2 = arith.constant 0 : index
    %1 = vector.load %arg3[%c0_1, %c0_2] : memref<1x32xf32, #tpu.memory_space<vmem>>, vector<1x32xf32>
    %c0_3 = arith.constant 0 : index
    %c0_4 = arith.constant 0 : index
    %c0_5 = arith.constant 0 : index
    %2 = vector.load %arg1[%c0_3, %c0_4, %c0_5] : memref<4x392x9xbf16, #tpu.memory_space<vmem>>, vector<1x392x9xbf16>
    %3 = vector.shape_cast %2 : vector<1x392x9xbf16> to vector<392x9xbf16>
    %cst = arith.constant dense<0.000000e+00> : vector<392x32xf32>
    %4 = tpu.matmul %3, %0, %cst {dimension_numbers = #tpu.dot_dimension_numbers<[1], [0], [0], [1], [0, 0, 1, 1], [], []>} : vector<392x9xbf16>, vector<9x32xbf16>, vector<392x32xf32> -> vector<392x32xf32>
    %5 = vector.broadcast %1 : vector<1x32xf32> to vector<392x32xf32>
    %6 = arith.addf %4, %5 : vector<392x32xf32>
    %cst_6 = arith.constant 0.000000e+00 : f32
    %7 = vector.broadcast %cst_6 : f32 to vector<392x32xf32>
    %8 = arith.maximumf %6, %7 : vector<392x32xf32>
    %c1 = arith.constant 1 : index
    %c0_7 = arith.constant 0 : index
    %c0_8 = arith.constant 0 : index
    %9 = vector.load %arg1[%c1, %c0_7, %c0_8] : memref<4x392x9xbf16, #tpu.memory_space<vmem>>, vector<1x392x9xbf16>
    %10 = vector.shape_cast %9 : vector<1x392x9xbf16> to vector<392x9xbf16>
    %cst_9 = arith.constant dense<0.000000e+00> : vector<392x32xf32>
    %11 = tpu.matmul %10, %0, %cst_9 {dimension_numbers = #tpu.dot_dimension_numbers<[1], [0], [0], [1], [0, 0, 1, 1], [], []>} : vector<392x9xbf16>, vector<9x32xbf16>, vector<392x32xf32> -> vector<392x32xf32>
    %12 = vector.broadcast %1 : vector<1x32xf32> to vector<392x32xf32>
    %13 = arith.addf %11, %12 : vector<392x32xf32>
    %cst_10 = arith.constant 0.000000e+00 : f32
    %14 = vector.broadcast %cst_10 : f32 to vector<392x32xf32>
    %15 = arith.maximumf %13, %14 : vector<392x32xf32>
    %16 = arith.maximumf %8, %15 : vector<392x32xf32>
    %c2 = arith.constant 2 : index
    %c0_11 = arith.constant 0 : index
    %c0_12 = arith.constant 0 : index
    %17 = vector.load %arg1[%c2, %c0_11, %c0_12] : memref<4x392x9xbf16, #tpu.memory_space<vmem>>, vector<1x392x9xbf16>
    %18 = vector.shape_cast %17 : vector<1x392x9xbf16> to vector<392x9xbf16>
    %cst_13 = arith.constant dense<0.000000e+00> : vector<392x32xf32>
    %19 = tpu.matmul %18, %0, %cst_13 {dimension_numbers = #tpu.dot_dimension_numbers<[1], [0], [0], [1], [0, 0, 1, 1], [], []>} : vector<392x9xbf16>, vector<9x32xbf16>, vector<392x32xf32> -> vector<392x32xf32>
    %20 = vector.broadcast %1 : vector<1x32xf32> to vector<392x32xf32>
    %21 = arith.addf %19, %20 : vector<392x32xf32>
    %cst_14 = arith.constant 0.000000e+00 : f32
    %22 = vector.broadcast %cst_14 : f32 to vector<392x32xf32>
    %23 = arith.maximumf %21, %22 : vector<392x32xf32>
    %c3 = arith.constant 3 : index
    %c0_15 = arith.constant 0 : index
    %c0_16 = arith.constant 0 : index
    %24 = vector.load %arg1[%c3, %c0_15, %c0_16] : memref<4x392x9xbf16, #tpu.memory_space<vmem>>, vector<1x392x9xbf16>
    %25 = vector.shape_cast %24 : vector<1x392x9xbf16> to vector<392x9xbf16>
    %cst_17 = arith.constant dense<0.000000e+00> : vector<392x32xf32>
    %26 = tpu.matmul %25, %0, %cst_17 {dimension_numbers = #tpu.dot_dimension_numbers<[1], [0], [0], [1], [0, 0, 1, 1], [], []>} : vector<392x9xbf16>, vector<9x32xbf16>, vector<392x32xf32> -> vector<392x32xf32>
    %27 = vector.broadcast %1 : vector<1x32xf32> to vector<392x32xf32>
    %28 = arith.addf %26, %27 : vector<392x32xf32>
    %cst_18 = arith.constant 0.000000e+00 : f32
    %29 = vector.broadcast %cst_18 : f32 to vector<392x32xf32>
    %30 = arith.maximumf %28, %29 : vector<392x32xf32>
    %31 = arith.maximumf %23, %30 : vector<392x32xf32>
    %32 = arith.maximumf %16, %31 : vector<392x32xf32>
    %33 = arith.truncf %32 : vector<392x32xf32> to vector<392x32xbf16>
    %c0_19 = arith.constant 0 : index
    %c0_20 = arith.constant 0 : index
    %34 = vector.load %arg4[%c0_19, %c0_20] : memref<392x32xbf16, #tpu.memory_space<vmem>>, vector<392x32xbf16>
    tpu.vector_store %arg4[%c0_19, %c0_20], %33 {strides = array<i32>} : memref<392x32xbf16, #tpu.memory_space<vmem>>, vector<392x32xbf16>,
    return
  }
  func.func @transform_0(%arg0: i32) -> (i32, i32, i32) {
    %c0_i32 = arith.constant 0 : i32
    %c0_i32_0 = arith.constant 0 : i32
    %c0_i32_1 = arith.constant 0 : i32
    return %c0_i32, %arg0, %c0_i32_0 : i32, i32, i32
  }
  func.func @transform_1(%arg0: i32) -> (i32, i32) {
    %c0_i32 = arith.constant 0 : i32
    %c0_i32_0 = arith.constant 0 : i32
    %c0_i32_1 = arith.constant 0 : i32
    return %c0_i32, %c0_i32_0 : i32, i32
  }
  func.func @transform_2(%arg0: i32) -> (i32, i32) {
    %c0_i32 = arith.constant 0 : i32
    %c0_i32_0 = arith.constant 0 : i32
    %c0_i32_1 = arith.constant 0 : i32
    return %c0_i32, %c0_i32_0 : i32, i32
  }
  func.func @transform_3(%arg0: i32) -> (i32, i32) {
    %c0_i32 = arith.constant 0 : i32
    %c0_i32_0 = arith.constant 0 : i32
    return %arg0, %c0_i32 : i32, i32
  }
}

module attributes {stable_mosaic.version = 11 : i64} {
  func.func @_conv_relu_pool_kernel(%arg0: i32, %arg1: memref<4x98x288xbf16, #tpu.memory_space<vmem>>, %arg2: memref<288x64xbf16, #tpu.memory_space<vmem>>, %arg3: memref<1x64xf32, #tpu.memory_space<vmem>>, %arg4: memref<98x64xbf16, #tpu.memory_space<vmem>>) attributes {dimension_semantics = [#tpu.dimension_semantics<parallel>], iteration_bounds = array<i64: 1>, scalar_prefetch = 0 : i64, scratch_operands = 0 : i64, tpu.core_type = #tpu.core_type<tc>, window_params = [{transform_indices = @transform_0, window_bounds = array<i64: 4, 98, 288>}, {pipeline_mode = #tpu.pipeline_mode<synchronous>, transform_indices = @transform_1, window_bounds = array<i64: 288, 64>}, {pipeline_mode = #tpu.pipeline_mode<synchronous>, transform_indices = @transform_2, window_bounds = array<i64: 1, 64>}, {transform_indices = @transform_3, window_bounds = array<i64: 98, 64>}]} {
    %c0 = arith.constant 0 : index
    %c0_0 = arith.constant 0 : index
    %0 = vector.load %arg2[%c0, %c0_0] : memref<288x64xbf16, #tpu.memory_space<vmem>>, vector<288x64xbf16>
    %c0_1 = arith.constant 0 : index
    %c0_2 = arith.constant 0 : index
    %1 = vector.load %arg3[%c0_1, %c0_2] : memref<1x64xf32, #tpu.memory_space<vmem>>, vector<1x64xf32>
    %c0_3 = arith.constant 0 : index
    %c0_4 = arith.constant 0 : index
    %c0_5 = arith.constant 0 : index
    %2 = vector.load %arg1[%c0_3, %c0_4, %c0_5] : memref<4x98x288xbf16, #tpu.memory_space<vmem>>, vector<1x98x288xbf16>
    %3 = vector.shape_cast %2 : vector<1x98x288xbf16> to vector<98x288xbf16>
    %cst = arith.constant dense<0.000000e+00> : vector<98x64xf32>
    %4 = tpu.matmul %3, %0, %cst {dimension_numbers = #tpu.dot_dimension_numbers<[1], [0], [0], [1], [0, 0, 1, 1], [], []>} : vector<98x288xbf16>, vector<288x64xbf16>, vector<98x64xf32> -> vector<98x64xf32>
    %5 = vector.broadcast %1 : vector<1x64xf32> to vector<98x64xf32>
    %6 = arith.addf %4, %5 : vector<98x64xf32>
    %cst_6 = arith.constant 0.000000e+00 : f32
    %7 = vector.broadcast %cst_6 : f32 to vector<98x64xf32>
    %8 = arith.maximumf %6, %7 : vector<98x64xf32>
    %c1 = arith.constant 1 : index
    %c0_7 = arith.constant 0 : index
    %c0_8 = arith.constant 0 : index
    %9 = vector.load %arg1[%c1, %c0_7, %c0_8] : memref<4x98x288xbf16, #tpu.memory_space<vmem>>, vector<1x98x288xbf16>
    %10 = vector.shape_cast %9 : vector<1x98x288xbf16> to vector<98x288xbf16>
    %cst_9 = arith.constant dense<0.000000e+00> : vector<98x64xf32>
    %11 = tpu.matmul %10, %0, %cst_9 {dimension_numbers = #tpu.dot_dimension_numbers<[1], [0], [0], [1], [0, 0, 1, 1], [], []>} : vector<98x288xbf16>, vector<288x64xbf16>, vector<98x64xf32> -> vector<98x64xf32>
    %12 = vector.broadcast %1 : vector<1x64xf32> to vector<98x64xf32>
    %13 = arith.addf %11, %12 : vector<98x64xf32>
    %cst_10 = arith.constant 0.000000e+00 : f32
    %14 = vector.broadcast %cst_10 : f32 to vector<98x64xf32>
    %15 = arith.maximumf %13, %14 : vector<98x64xf32>
    %16 = arith.maximumf %8, %15 : vector<98x64xf32>
    %c2 = arith.constant 2 : index
    %c0_11 = arith.constant 0 : index
    %c0_12 = arith.constant 0 : index
    %17 = vector.load %arg1[%c2, %c0_11, %c0_12] : memref<4x98x288xbf16, #tpu.memory_space<vmem>>, vector<1x98x288xbf16>
    %18 = vector.shape_cast %17 : vector<1x98x288xbf16> to vector<98x288xbf16>
    %cst_13 = arith.constant dense<0.000000e+00> : vector<98x64xf32>
    %19 = tpu.matmul %18, %0, %cst_13 {dimension_numbers = #tpu.dot_dimension_numbers<[1], [0], [0], [1], [0, 0, 1, 1], [], []>} : vector<98x288xbf16>, vector<288x64xbf16>, vector<98x64xf32> -> vector<98x64xf32>
    %20 = vector.broadcast %1 : vector<1x64xf32> to vector<98x64xf32>
    %21 = arith.addf %19, %20 : vector<98x64xf32>
    %cst_14 = arith.constant 0.000000e+00 : f32
    %22 = vector.broadcast %cst_14 : f32 to vector<98x64xf32>
    %23 = arith.maximumf %21, %22 : vector<98x64xf32>
    %c3 = arith.constant 3 : index
    %c0_15 = arith.constant 0 : index
    %c0_16 = arith.constant 0 : index
    %24 = vector.load %arg1[%c3, %c0_15, %c0_16] : memref<4x98x288xbf16, #tpu.memory_space<vmem>>, vector<1x98x288xbf16>
    %25 = vector.shape_cast %24 : vector<1x98x288xbf16> to vector<98x288xbf16>
    %cst_17 = arith.constant dense<0.000000e+00> : vector<98x64xf32>
    %26 = tpu.matmul %25, %0, %cst_17 {dimension_numbers = #tpu.dot_dimension_numbers<[1], [0], [0], [1], [0, 0, 1, 1], [], []>} : vector<98x288xbf16>, vector<288x64xbf16>, vector<98x64xf32> -> vector<98x64xf32>
    %27 = vector.broadcast %1 : vector<1x64xf32> to vector<98x64xf32>
    %28 = arith.addf %26, %27 : vector<98x64xf32>
    %cst_18 = arith.constant 0.000000e+00 : f32
    %29 = vector.broadcast %cst_18 : f32 to vector<98x64xf32>
    %30 = arith.maximumf %28, %29 : vector<98x64xf32>
    %31 = arith.maximumf %23, %30 : vector<98x64xf32>
    %32 = arith.maximumf %16, %31 : vector<98x64xf32>
    %33 = arith.truncf %32 : vector<98x64xf32> to vector<98x64xbf16>
    %c0_19 = arith.constant 0 : index
    %c0_20 = arith.constant 0 : index
    %34 = vector.load %arg4[%c0_19, %c0_20] : memref<98x64xbf16, #tpu.memory_space<vmem>>, vector<98x64xbf16>
    tpu.vector_store %arg4[%c0_19, %c0_20], %33 {strides = array<i32>} : memref<98x64xbf16, #tpu.memory_space<vmem>>, vector<98x64xbf16>,
    return
  }
  func.func @transform_0(%arg0: i32) -> (i32, i32, i32) {
    %c0_i32 = arith.constant 0 : i32
    %c0_i32_0 = arith.constant 0 : i32
    %c0_i32_1 = arith.constant 0 : i32
    return %c0_i32, %arg0, %c0_i32_0 : i32, i32, i32
  }
  func.func @transform_1(%arg0: i32) -> (i32, i32) {
    %c0_i32 = arith.constant 0 : i32
    %c0_i32_0 = arith.constant 0 : i32
    %c0_i32_1 = arith.constant 0 : i32
    return %c0_i32, %c0_i32_0 : i32, i32
  }
  func.func @transform_2(%arg0: i32) -> (i32, i32) {
    %c0_i32 = arith.constant 0 : i32
    %c0_i32_0 = arith.constant 0 : i32
    %c0_i32_1 = arith.constant 0 : i32
    return %c0_i32, %c0_i32_0 : i32, i32
  }
  func.func @transform_3(%arg0: i32) -> (i32, i32) {
    %c0_i32 = arith.constant 0 : i32
    %c0_i32_0 = arith.constant 0 : i32
    return %arg0, %c0_i32 : i32, i32
  }
}

module attributes {stable_mosaic.version = 11 : i64} {
  func.func @_fc_fused_kernel(%arg0: i32, %arg1: memref<2x3136xbf16, #tpu.memory_space<vmem>>, %arg2: memref<3136x128xbf16, #tpu.memory_space<vmem>>, %arg3: memref<1x128xf32, #tpu.memory_space<vmem>>, %arg4: memref<128x10xbf16, #tpu.memory_space<vmem>>, %arg5: memref<1x10xf32, #tpu.memory_space<vmem>>, %arg6: memref<2x10xf32, #tpu.memory_space<vmem>>) attributes {dimension_semantics = [#tpu.dimension_semantics<parallel>], iteration_bounds = array<i64: 1>, scalar_prefetch = 0 : i64, scratch_operands = 0 : i64, tpu.core_type = #tpu.core_type<tc>, window_params = [{transform_indices = @transform_0, window_bounds = array<i64: 2, 3136>}, {pipeline_mode = #tpu.pipeline_mode<synchronous>, transform_indices = @transform_1, window_bounds = array<i64: 3136, 128>}, {pipeline_mode = #tpu.pipeline_mode<synchronous>, transform_indices = @transform_2, window_bounds = array<i64: 1, 128>}, {pipeline_mode = #tpu.pipeline_mode<synchronous>, transform_indices = @transform_3, window_bounds = array<i64: 128, 10>}, {pipeline_mode = #tpu.pipeline_mode<synchronous>, transform_indices = @transform_4, window_bounds = array<i64: 1, 10>}, {transform_indices = @transform_5, window_bounds = array<i64: 2, 10>}]} {
    %c0 = arith.constant 0 : index
    %c0_0 = arith.constant 0 : index
    %0 = vector.load %arg1[%c0, %c0_0] : memref<2x3136xbf16, #tpu.memory_space<vmem>>, vector<2x3136xbf16>
    %c0_1 = arith.constant 0 : index
    %c0_2 = arith.constant 0 : index
    %1 = vector.load %arg2[%c0_1, %c0_2] : memref<3136x128xbf16, #tpu.memory_space<vmem>>, vector<3136x128xbf16>
    %cst = arith.constant dense<0.000000e+00> : vector<2x128xf32>
    %2 = tpu.matmul %0, %1, %cst {dimension_numbers = #tpu.dot_dimension_numbers<[1], [0], [0], [1], [0, 0, 1, 1], [], []>} : vector<2x3136xbf16>, vector<3136x128xbf16>, vector<2x128xf32> -> vector<2x128xf32>
    %c0_3 = arith.constant 0 : index
    %c0_4 = arith.constant 0 : index
    %3 = vector.load %arg3[%c0_3, %c0_4] : memref<1x128xf32, #tpu.memory_space<vmem>>, vector<1x128xf32>
    %4 = vector.broadcast %3 : vector<1x128xf32> to vector<2x128xf32>
    %5 = arith.addf %2, %4 : vector<2x128xf32>
    %cst_5 = arith.constant 0.000000e+00 : f32
    %6 = vector.broadcast %cst_5 : f32 to vector<2x128xf32>
    %7 = arith.maximumf %5, %6 : vector<2x128xf32>
    %8 = arith.truncf %7 : vector<2x128xf32> to vector<2x128xbf16>
    %c0_6 = arith.constant 0 : index
    %c0_7 = arith.constant 0 : index
    %9 = vector.load %arg4[%c0_6, %c0_7] : memref<128x10xbf16, #tpu.memory_space<vmem>>, vector<128x10xbf16>
    %cst_8 = arith.constant dense<0.000000e+00> : vector<2x10xf32>
    %10 = tpu.matmul %8, %9, %cst_8 {dimension_numbers = #tpu.dot_dimension_numbers<[1], [0], [0], [1], [0, 0, 1, 1], [], []>} : vector<2x128xbf16>, vector<128x10xbf16>, vector<2x10xf32> -> vector<2x10xf32>
    %c0_9 = arith.constant 0 : index
    %c0_10 = arith.constant 0 : index
    %11 = vector.load %arg5[%c0_9, %c0_10] : memref<1x10xf32, #tpu.memory_space<vmem>>, vector<1x10xf32>
    %12 = vector.broadcast %11 : vector<1x10xf32> to vector<2x10xf32>
    %13 = arith.addf %10, %12 : vector<2x10xf32>
    %c0_11 = arith.constant 0 : index
    %c0_12 = arith.constant 0 : index
    %14 = vector.load %arg6[%c0_11, %c0_12] : memref<2x10xf32, #tpu.memory_space<vmem>>, vector<2x10xf32>
    tpu.vector_store %arg6[%c0_11, %c0_12], %13 {strides = array<i32>} : memref<2x10xf32, #tpu.memory_space<vmem>>, vector<2x10xf32>,
    return
  }
  func.func @transform_0(%arg0: i32) -> (i32, i32) {
    %c0_i32 = arith.constant 0 : i32
    %c0_i32_0 = arith.constant 0 : i32
    return %arg0, %c0_i32 : i32, i32
  }
  func.func @transform_1(%arg0: i32) -> (i32, i32) {
    %c0_i32 = arith.constant 0 : i32
    %c0_i32_0 = arith.constant 0 : i32
    %c0_i32_1 = arith.constant 0 : i32
    return %c0_i32, %c0_i32_0 : i32, i32
  }
  func.func @transform_2(%arg0: i32) -> (i32, i32) {
    %c0_i32 = arith.constant 0 : i32
    %c0_i32_0 = arith.constant 0 : i32
    %c0_i32_1 = arith.constant 0 : i32
    return %c0_i32, %c0_i32_0 : i32, i32
  }
  func.func @transform_3(%arg0: i32) -> (i32, i32) {
    %c0_i32 = arith.constant 0 : i32
    %c0_i32_0 = arith.constant 0 : i32
    %c0_i32_1 = arith.constant 0 : i32
    return %c0_i32, %c0_i32_0 : i32, i32
  }
  func.func @transform_4(%arg0: i32) -> (i32, i32) {
    %c0_i32 = arith.constant 0 : i32
    %c0_i32_0 = arith.constant 0 : i32
    %c0_i32_1 = arith.constant 0 : i32
    return %c0_i32, %c0_i32_0 : i32, i32
  }
  func.func @transform_5(%arg0: i32) -> (i32, i32) {
    %c0_i32 = arith.constant 0 : i32
    %c0_i32_0 = arith.constant 0 : i32
    return %arg0, %c0_i32 : i32, i32
  }
}

</mosaic_0001>

<llo_original>
// kernel: cnn_forward.3
$region0: #{cnn_forward.3}
  #allocation0 [shape = 'u32[]', space=smem, size = 0x4, offset = 0x4, fixed_abs, tag = 'smem constant byte address 0x4 - core index']
  #allocation1 [shape = 'u32[144,128]{1,0:T(1,128)}', space=vmem, size = 0x12000, scoped, tag = 'internal scratch']
  %s0 = inlined_call_operand.vmem [shape: bf16[4,392,9], index: 0, kind: input, shape index: {}]
  %s1 = inlined_call_operand.vmem [shape: bf16[9,32], index: 1, kind: input, shape index: {}]
  %s2 = inlined_call_operand.vmem [shape: f32[1,32], index: 2, kind: input, shape index: {}]
  %s3 = inlined_call_operand.vmem [shape: bf16[392,32], index: 3, kind: output, shape index: {}]
  %s4 = sld [smem:[#allocation0]]
  $region22: #{cnn_forward.3} parent=0
    _
  %s6 = ssub.s32 1, %s4
  %s7 = scalar_select 0, %s6, %s4
  // Predicated region
  $region2: #{cnn_forward.3} parent=0 // pred_check
    _
  $region3: #{cnn_forward.3} parent=0 // pred_check_branch
    %9 = sbr.rel (0) target = $region5
  $region4: #{cnn_forward.3} parent=0 // pred_region
    _
  $region5: #{cnn_forward.3} parent=0 // pred_fallthru
    _
  // Predicated region
  $region6: #{cnn_forward.3} parent=0 // pred_check
    _
  $region7: #{cnn_forward.3} parent=0 // pred_check_branch
    %11 = sbr.rel (0) target = $region9
  $region8: #{cnn_forward.3} parent=0 // pred_region
    _
  $region9: #{cnn_forward.3} parent=0 // pred_fallthru
    _
  // Predicated region
  $region10: #{cnn_forward.3} parent=0 // pred_check
    _
  $region11: #{cnn_forward.3} parent=0 // pred_check_branch
    %13 = sbr.rel (0) target = $region13
  $region12: #{cnn_forward.3} parent=0 // pred_region
    _
  $region13: #{cnn_forward.3} parent=0 // pred_fallthru
    _
  %v15 = vld [vmem:[%s1] sm:$0xf]
  %v16 = vld [vmem:[%s1 + $0x4] sm:$0x1]
  %v17 = vld [vmem:[%s2] sm:$0x1]
  %v18 = vld [vmem:[%s0] sm:$0xf]
  %v19 = vld [vmem:[%s0 + $0x4] sm:$0xf]
  %v20 = vld [vmem:[%s0 + $0x8] sm:$0xf]
  %v21 = vld [vmem:[%s0 + $0xc] sm:$0xf]
  %v22 = vld [vmem:[%s0 + $0x10] sm:$0xf]
  %v23 = vld [vmem:[%s0 + $0x14] sm:$0xf]
  %v24 = vld [vmem:[%s0 + $0x18] sm:$0xf]
  %v25 = vld [vmem:[%s0 + $0x1c] sm:$0xf]
  %v26 = vld [vmem:[%s0 + $0x20] sm:$0xf]
  %v27 = vld [vmem:[%s0 + $0x24] sm:$0xf]
  %v28 = vld [vmem:[%s0 + $0x28] sm:$0xf]
  %v29 = vld [vmem:[%s0 + $0x2c] sm:$0xf]
  %v30 = vld [vmem:[%s0 + $0x30] sm:$0xf]
  %v31 = vld [vmem:[%s0 + $0x34] sm:$0xf]
  %v32 = vld [vmem:[%s0 + $0x38] sm:$0xf]
  %v33 = vld [vmem:[%s0 + $0x3c] sm:$0xf]
  %v34 = vld [vmem:[%s0 + $0x40] sm:$0xf]
  %v35 = vld [vmem:[%s0 + $0x44] sm:$0xf]
  %v36 = vld [vmem:[%s0 + $0x48] sm:$0xf]
  %v37 = vld [vmem:[%s0 + $0x4c] sm:$0xf]
  %v38 = vld [vmem:[%s0 + $0x50] sm:$0xf]
  %v39 = vld [vmem:[%s0 + $0x54] sm:$0xf]
  %v40 = vld [vmem:[%s0 + $0x58] sm:$0xf]
  %v41 = vld [vmem:[%s0 + $0x5c] sm:$0xf]
  %v42 = vld [vmem:[%s0 + $0x60] sm:$0xf]
  %v43 = vld [vmem:[%s0 + $0x64] sm:$0xf]
  %v44 = vld [vmem:[%s0 + $0x68] sm:$0xf]
  %v45 = vld [vmem:[%s0 + $0x6c] sm:$0xf]
  %v46 = vld [vmem:[%s0 + $0x70] sm:$0xf]
  %v47 = vld [vmem:[%s0 + $0x74] sm:$0xf]
  %v48 = vld [vmem:[%s0 + $0x78] sm:$0xf]
  %v49 = vld [vmem:[%s0 + $0x7c] sm:$0xf]
  %v50 = vld [vmem:[%s0 + $0x80] sm:$0xf]
  %v51 = vld [vmem:[%s0 + $0x84] sm:$0xf]
  %v52 = vld [vmem:[%s0 + $0x88] sm:$0xf]
  %v53 = vld [vmem:[%s0 + $0x8c] sm:$0xf]
  %v54 = vld [vmem:[%s0 + $0x90] sm:$0xf]
  %v55 = vld [vmem:[%s0 + $0x94] sm:$0xf]
  %v56 = vld [vmem:[%s0 + $0x98] sm:$0xf]
  %v57 = vld [vmem:[%s0 + $0x9c] sm:$0xf]
  %v58 = vld [vmem:[%s0 + $0xa0] sm:$0xf]
  %v59 = vld [vmem:[%s0 + $0xa4] sm:$0xf]
  %v60 = vld [vmem:[%s0 + $0xa8] sm:$0xf]
  %v61 = vld [vmem:[%s0 + $0xac] sm:$0xf]
  %v62 = vld [vmem:[%s0 + $0xb0] sm:$0xf]
  %v63 = vld [vmem:[%s0 + $0xb4] sm:$0xf]
  %v64 = vld [vmem:[%s0 + $0xb8] sm:$0xf]
  %v65 = vld [vmem:[%s0 + $0xbc] sm:$0xf]
  %v66 = vld [vmem:[%s0 + $0xc0] sm:$0xf]
  %v68 = vlaneseq
  %v69 = vshrl.u32 %v68, 7
  %v70 = vsub.s32 0, %v69
  %v71 = vrot.slane %v17, %v70
  %v122 = vunpack.c.l.b16 %v18
  %v123 = vunpack.c.l.b16 %v19
  %v124 = vunpack.c.l.b16 %v20
  %v125 = vunpack.c.l.b16 %v21
  %v126 = vunpack.c.l.b16 %v22
  %v127 = vunpack.c.l.b16 %v23
  %v128 = vunpack.c.l.b16 %v24
  %v129 = vunpack.c.l.b16 %v25
  %v130 = vunpack.c.l.b16 %v26
  %v131 = vunpack.c.l.b16 %v27
  %v132 = vunpack.c.l.b16 %v28
  %v133 = vunpack.c.l.b16 %v29
  %v134 = vunpack.c.l.b16 %v30
  %v135 = vunpack.c.l.b16 %v31
  %v136 = vunpack.c.l.b16 %v32
  %v137 = vunpack.c.l.b16 %v33
  %v138 = vunpack.c.l.b16 %v34
  %v139 = vunpack.c.l.b16 %v35
  %v140 = vunpack.c.l.b16 %v36
  %v141 = vunpack.c.l.b16 %v37
  %v142 = vunpack.c.l.b16 %v38
  %v143 = vunpack.c.l.b16 %v39
  %v144 = vunpack.c.l.b16 %v40
  %v145 = vunpack.c.l.b16 %v41
  %v146 = vunpack.c.l.b16 %v42
  %v147 = vunpack.c.l.b16 %v43
  %v148 = vunpack.c.l.b16 %v44
  %v149 = vunpack.c.l.b16 %v45
  %v150 = vunpack.c.l.b16 %v46
  %v151 = vunpack.c.l.b16 %v47
  %v152 = vunpack.c.l.b16 %v48
  %v153 = vunpack.c.l.b16 %v49
  %v154 = vunpack.c.l.b16 %v50
  %v155 = vunpack.c.l.b16 %v51
  %v156 = vunpack.c.l.b16 %v52
  %v157 = vunpack.c.l.b16 %v53
  %v158 = vunpack.c.l.b16 %v54
  %v159 = vunpack.c.l.b16 %v55
  %v160 = vunpack.c.l.b16 %v56
  %v161 = vunpack.c.l.b16 %v57
  %v162 = vunpack.c.l.b16 %v58
  %v163 = vunpack.c.l.b16 %v59
  %v164 = vunpack.c.l.b16 %v60
  %v165 = vunpack.c.l.b16 %v61
  %v166 = vunpack.c.l.b16 %v62
  %v167 = vunpack.c.l.b16 %v63
  %v168 = vunpack.c.l.b16 %v64
  %v169 = vunpack.c.l.b16 %v65
  %v170 = vunpack.c.l.b16 %v66
  %v171 = vpack.c.b16 %v123, %v122
  %v172 = vpack.c.b16 %v125, %v124
  %v173 = vpack.c.b16 %v127, %v126
  %v174 = vpack.c.b16 %v129, %v128
  %v175 = vpack.c.b16 %v131, %v130
  %v176 = vpack.c.b16 %v133, %v132
  %v177 = vpack.c.b16 %v135, %v134
  %v178 = vpack.c.b16 %v137, %v136
  %v179 = vpack.c.b16 %v139, %v138
  %v180 = vpack.c.b16 %v141, %v140
  %v181 = vpack.c.b16 %v143, %v142
  %v182 = vpack.c.b16 %v145, %v144
  %v183 = vpack.c.b16 %v147, %v146
  %v184 = vpack.c.b16 %v149, %v148
  %v185 = vpack.c.b16 %v151, %v150
  %v186 = vpack.c.b16 %v153, %v152
  %v187 = vpack.c.b16 %v155, %v154
  %v188 = vpack.c.b16 %v157, %v156
  %v189 = vpack.c.b16 %v159, %v158
  %v190 = vpack.c.b16 %v161, %v160
  %v191 = vpack.c.b16 %v163, %v162
  %v192 = vpack.c.b16 %v165, %v164
  %v193 = vpack.c.b16 %v167, %v166
  %v194 = vpack.c.b16 %v169, %v168
  %v195 = vpack.c.b16 %v170, %v170
  %v198 = vunpack.c.l.b16 %v15
  %v199 = vunpack.c.l.b16 %v16
  %v200 = vpack.c.b16 %v199, %v198
  %vm201 = vcmask 72704
  %v203 = vsel %vm201, %v171, 0
  %v206 = vsel %vm201, %v172, 0
  %v209 = vsel %vm201, %v173, 0
  %v212 = vsel %vm201, %v174, 0
  %v215 = vsel %vm201, %v175, 0
  %v218 = vsel %vm201, %v176, 0
  %v221 = vsel %vm201, %v177, 0
  %v224 = vsel %vm201, %v178, 0
  %v227 = vsel %vm201, %v179, 0
  %v230 = vsel %vm201, %v180, 0
  %v233 = vsel %vm201, %v181, 0
  %v236 = vsel %vm201, %v182, 0
  %v239 = vsel %vm201, %v183, 0
  %v242 = vsel %vm201, %v184, 0
  %v245 = vsel %vm201, %v185, 0
  %v248 = vsel %vm201, %v186, 0
  %v251 = vsel %vm201, %v187, 0
  %v254 = vsel %vm201, %v188, 0
  %v257 = vsel %vm201, %v189, 0
  %v260 = vsel %vm201, %v190, 0
  %v263 = vsel %vm201, %v191, 0
  %v266 = vsel %vm201, %v192, 0
  %v269 = vsel %vm201, %v193, 0
  %v272 = vsel %vm201, %v194, 0
  %v275 = vsel %vm201, %v195, 0
  %vm277 = vcmask 1043456
  %vm278 = vcmask 1044480
  %v279 = vsel %vm277, 4294967295, 65535
  %v280 = vsel %vm278, %v279, 0
  %v282 = vand.u32 %v200, %v280
  %284 = vmatprep.subr.bf16.mxu0 0
  %285 = vmatpush1.bf16.msra.mxu0 %v282
  %286 = vmatprep.subr.bf16.mxu0 0
  %287 = vmatpush1.bf16.msra.mxu0 0
  %288 = vmatprep.subr.bf16.mxu0 0
  %289 = vmatpush1.bf16.msra.mxu0 0
  %290 = vmatprep.subr.bf16.mxu0 0
  %291 = vmatpush1.bf16.msra.mxu0 0
  %292 = vmatprep.subr.bf16.mxu0 0
  %293 = vmatpush1.bf16.msra.mxu0 0
  %294 = vmatprep.subr.bf16.mxu0 0
  %295 = vmatpush1.bf16.msra.mxu0 0
  %296 = vmatprep.subr.bf16.mxu0 0
  %297 = vmatpush1.bf16.msra.mxu0 0
  %298 = vmatprep.subr.bf16.mxu0 0
  %299 = vmatpush1.bf16.msra.mxu0 0
  %300 = vmatprep.subr.bf16.mxu0 0
  %301 = vmatpush1.bf16.msra.mxu0 0
  %302 = vmatprep.subr.bf16.mxu0 0
  %303 = vmatpush1.bf16.msra.mxu0 0
  %304 = vmatprep.subr.bf16.mxu0 0
  %305 = vmatpush1.bf16.msra.mxu0 0
  %306 = vmatprep.subr.bf16.mxu0 0
  %307 = vmatpush1.bf16.msra.mxu0 0
  %308 = vmatprep.subr.bf16.mxu0 0
  %309 = vmatpush1.bf16.msra.mxu0 0
  %310 = vmatprep.subr.bf16.mxu0 0
  %311 = vmatpush1.bf16.msra.mxu0 0
  %312 = vmatprep.subr.bf16.mxu0 0
  %313 = vmatpush1.bf16.msra.mxu0 0
  %314 = vmatprep.subr.bf16.mxu0 0
  %315 = vmatpush1.bf16.msra.mxu0 0
  %316 = vmatprep.mubr.bf16.mxu0 0
  %317 = vmatmul.mubr.bf16.gmra.mrb[0].mxu0 %v203
  %v318 = vpop.f32.mrb[0].mxu0
  %v319 = vadd.f32 %v71, %v318
  %v320 = vpop.f32.mrb[0].mxu0
  %v321 = vpop.f32.mrb[0].mxu0
  %v322 = vadd.f32 %v71, %v321
  %v323 = vpop.f32.mrb[0].mxu0
  %324 = vmatprep.mubr.bf16.mxu0 0
  %325 = vmatmul.mubr.bf16.gmra.mrb[0].mxu0 %v206
  %v326 = vpop.f32.mrb[0].mxu0
  %v327 = vadd.f32 %v71, %v326
  %v328 = vpop.f32.mrb[0].mxu0
  %v329 = vpop.f32.mrb[0].mxu0
  %v330 = vadd.f32 %v71, %v329
  %v331 = vpop.f32.mrb[0].mxu0
  %332 = vmatprep.mubr.bf16.mxu0 0
  %333 = vmatmul.mubr.bf16.gmra.mrb[0].mxu0 %v209
  %v334 = vpop.f32.mrb[0].mxu0
  %v335 = vadd.f32 %v71, %v334
  %v336 = vpop.f32.mrb[0].mxu0
  %v337 = vpop.f32.mrb[0].mxu0
  %v338 = vadd.f32 %v71, %v337
  %v339 = vpop.f32.mrb[0].mxu0
  %340 = vmatprep.mubr.bf16.mxu0 0
  %341 = vmatmul.mubr.bf16.gmra.mrb[0].mxu0 %v212
  %v342 = vpop.f32.mrb[0].mxu0
  %v343 = vadd.f32 %v71, %v342
  %v344 = vpop.f32.mrb[0].mxu0
  %v345 = vpop.f32.mrb[0].mxu0
  %v346 = vadd.f32 %v71, %v345
  %v347 = vpop.f32.mrb[0].mxu0
  %348 = vmatprep.mubr.bf16.mxu0 0
  %349 = vmatmul.mubr.bf16.gmra.mrb[0].mxu0 %v215
  %v350 = vpop.f32.mrb[0].mxu0
  %v351 = vadd.f32 %v71, %v350
  %v352 = vpop.f32.mrb[0].mxu0
  %v353 = vpop.f32.mrb[0].mxu0
  %v354 = vadd.f32 %v71, %v353
  %v355 = vpop.f32.mrb[0].mxu0
  %356 = vmatprep.mubr.bf16.mxu0 0
  %357 = vmatmul.mubr.bf16.gmra.mrb[0].mxu0 %v218
  %v358 = vpop.f32.mrb[0].mxu0
  %v359 = vadd.f32 %v71, %v358
  %v360 = vpop.f32.mrb[0].mxu0
  %v361 = vpop.f32.mrb[0].mxu0
  %v362 = vadd.f32 %v71, %v361
  %v363 = vpop.f32.mrb[0].mxu0
  %364 = vmatprep.mubr.bf16.mxu0 0
  %365 = vmatmul.mubr.bf16.gmra.mrb[0].mxu0 %v221
  %v366 = vpop.f32.mrb[0].mxu0
  %v367 = vadd.f32 %v71, %v366
  %v368 = vpop.f32.mrb[0].mxu0
  %v369 = vpop.f32.mrb[0].mxu0
  %v370 = vadd.f32 %v71, %v369
  %v371 = vpop.f32.mrb[0].mxu0
  %372 = vmatprep.mubr.bf16.mxu0 0
  %373 = vmatmul.mubr.bf16.gmra.mrb[0].mxu0 %v224
  %v374 = vpop.f32.mrb[0].mxu0
  %v375 = vadd.f32 %v71, %v374
  %v376 = vpop.f32.mrb[0].mxu0
  %v377 = vpop.f32.mrb[0].mxu0
  %v378 = vadd.f32 %v71, %v377
  %v379 = vpop.f32.mrb[0].mxu0
  %380 = vmatprep.mubr.bf16.mxu0 0
  %381 = vmatmul.mubr.bf16.gmra.mrb[0].mxu0 %v227
  %v382 = vpop.f32.mrb[0].mxu0
  %v383 = vadd.f32 %v71, %v382
  %v384 = vpop.f32.mrb[0].mxu0
  %v385 = vpop.f32.mrb[0].mxu0
  %v386 = vadd.f32 %v71, %v385
  %v387 = vpop.f32.mrb[0].mxu0
  %388 = vmatprep.mubr.bf16.mxu0 0
  %389 = vmatmul.mubr.bf16.gmra.mrb[0].mxu0 %v230
  %v390 = vpop.f32.mrb[0].mxu0
  %v391 = vadd.f32 %v71, %v390
  %v392 = vpop.f32.mrb[0].mxu0
  %v393 = vpop.f32.mrb[0].mxu0
  %v394 = vadd.f32 %v71, %v393
  %v395 = vpop.f32.mrb[0].mxu0
  %396 = vmatprep.mubr.bf16.mxu0 0
  %397 = vmatmul.mubr.bf16.gmra.mrb[0].mxu0 %v233
  %v398 = vpop.f32.mrb[0].mxu0
  %v399 = vadd.f32 %v71, %v398
  %v400 = vpop.f32.mrb[0].mxu0
  %v401 = vpop.f32.mrb[0].mxu0
  %v402 = vadd.f32 %v71, %v401
  %v403 = vpop.f32.mrb[0].mxu0
  %404 = vmatprep.mubr.bf16.mxu0 0
  %405 = vmatmul.mubr.bf16.gmra.mrb[0].mxu0 %v236
  %v406 = vpop.f32.mrb[0].mxu0
  %v407 = vadd.f32 %v71, %v406
  %v408 = vpop.f32.mrb[0].mxu0
  %v409 = vpop.f32.mrb[0].mxu0
  %v410 = vadd.f32 %v71, %v409
  %v411 = vpop.f32.mrb[0].mxu0
  %412 = vmatprep.mubr.bf16.mxu0 0
  %413 = vmatmul.mubr.bf16.gmra.mrb[0].mxu0 %v239
  %v414 = vpop.f32.mrb[0].mxu0
  %v415 = vadd.f32 %v71, %v414
  %v416 = vpop.f32.mrb[0].mxu0
  %v417 = vpop.f32.mrb[0].mxu0
  %v418 = vadd.f32 %v71, %v417
  %v419 = vpop.f32.mrb[0].mxu0
  %420 = vmatprep.mubr.bf16.mxu0 0
  %421 = vmatmul.mubr.bf16.gmra.mrb[0].mxu0 %v242
  %v422 = vpop.f32.mrb[0].mxu0
  %v423 = vadd.f32 %v71, %v422
  %v424 = vpop.f32.mrb[0].mxu0
  %v425 = vpop.f32.mrb[0].mxu0
  %v426 = vadd.f32 %v71, %v425
  %v427 = vpop.f32.mrb[0].mxu0
  %428 = vmatprep.mubr.bf16.mxu0 0
  %429 = vmatmul.mubr.bf16.gmra.mrb[0].mxu0 %v245
  %v430 = vpop.f32.mrb[0].mxu0
  %v431 = vadd.f32 %v71, %v430
  %v432 = vpop.f32.mrb[0].mxu0
  %v433 = vpop.f32.mrb[0].mxu0
  %v434 = vadd.f32 %v71, %v433
  %v435 = vpop.f32.mrb[0].mxu0
  %436 = vmatprep.mubr.bf16.mxu0 0
  %437 = vmatmul.mubr.bf16.gmra.mrb[0].mxu0 %v248
  %v438 = vpop.f32.mrb[0].mxu0
  %v439 = vadd.f32 %v71, %v438
  %v440 = vpop.f32.mrb[0].mxu0
  %v441 = vpop.f32.mrb[0].mxu0
  %v442 = vadd.f32 %v71, %v441
  %v443 = vpop.f32.mrb[0].mxu0
  %444 = vmatprep.mubr.bf16.mxu0 0
  %445 = vmatmul.mubr.bf16.gmra.mrb[0].mxu0 %v251
  %v446 = vpop.f32.mrb[0].mxu0
  %v447 = vadd.f32 %v71, %v446
  %v448 = vpop.f32.mrb[0].mxu0
  %v449 = vpop.f32.mrb[0].mxu0
  %v450 = vadd.f32 %v71, %v449
  %v451 = vpop.f32.mrb[0].mxu0
  %452 = vmatprep.mubr.bf16.mxu0 0
  %453 = vmatmul.mubr.bf16.gmra.mrb[0].mxu0 %v254
  %v454 = vpop.f32.mrb[0].mxu0
  %v455 = vadd.f32 %v71, %v454
  %v456 = vpop.f32.mrb[0].mxu0
  %v457 = vpop.f32.mrb[0].mxu0
  %v458 = vadd.f32 %v71, %v457
  %v459 = vpop.f32.mrb[0].mxu0
  %460 = vmatprep.mubr.bf16.mxu0 0
  %461 = vmatmul.mubr.bf16.gmra.mrb[0].mxu0 %v257
  %v462 = vpop.f32.mrb[0].mxu0
  %v463 = vadd.f32 %v71, %v462
  %v464 = vpop.f32.mrb[0].mxu0
  %v465 = vpop.f32.mrb[0].mxu0
  %v466 = vadd.f32 %v71, %v465
  %v467 = vpop.f32.mrb[0].mxu0
  %468 = vmatprep.mubr.bf16.mxu0 0
  %469 = vmatmul.mubr.bf16.gmra.mrb[0].mxu0 %v260
  %v470 = vpop.f32.mrb[0].mxu0
  %v471 = vadd.f32 %v71, %v470
  %v472 = vpop.f32.mrb[0].mxu0
  %v473 = vpop.f32.mrb[0].mxu0
  %v474 = vadd.f32 %v71, %v473
  %v475 = vpop.f32.mrb[0].mxu0
  %476 = vmatprep.mubr.bf16.mxu0 0
  %477 = vmatmul.mubr.bf16.gmra.mrb[0].mxu0 %v263
  %v478 = vpop.f32.mrb[0].mxu0
  %v479 = vadd.f32 %v71, %v478
  %v480 = vpop.f32.mrb[0].mxu0
  %v481 = vpop.f32.mrb[0].mxu0
  %v482 = vadd.f32 %v71, %v481
  %v483 = vpop.f32.mrb[0].mxu0
  %484 = vmatprep.mubr.bf16.mxu0 0
  %485 = vmatmul.mubr.bf16.gmra.mrb[0].mxu0 %v266
  %v486 = vpop.f32.mrb[0].mxu0
  %v487 = vadd.f32 %v71, %v486
  %v488 = vpop.f32.mrb[0].mxu0
  %v489 = vpop.f32.mrb[0].mxu0
  %v490 = vadd.f32 %v71, %v489
  %v491 = vpop.f32.mrb[0].mxu0
  %492 = vmatprep.mubr.bf16.mxu0 0
  %493 = vmatmul.mubr.bf16.gmra.mrb[0].mxu0 %v269
  %v494 = vpop.f32.mrb[0].mxu0
  %v495 = vadd.f32 %v71, %v494
  %v496 = vpop.f32.mrb[0].mxu0
  %v497 = vpop.f32.mrb[0].mxu0
  %v498 = vadd.f32 %v71, %v497
  %v499 = vpop.f32.mrb[0].mxu0
  %500 = vmatprep.mubr.bf16.mxu0 0
  %501 = vmatmul.mubr.bf16.gmra.mrb[0].mxu0 %v272
  %v502 = vpop.f32.mrb[0].mxu0
  %v503 = vadd.f32 %v71, %v502
  %v504 = vpop.f32.mrb[0].mxu0
  %v505 = vpop.f32.mrb[0].mxu0
  %v506 = vadd.f32 %v71, %v505
  %v507 = vpop.f32.mrb[0].mxu0
  %508 = vmatprep.mubr.bf16.mxu0 0
  %509 = vmatmul.mubr.bf16.gmra.mrb[0].mxu0 %v275
  %v510 = vpop.f32.mrb[0].mxu0
  %v511 = vadd.f32 %v71, %v510
  %v512 = vpop.f32.mrb[0].mxu0
  %v513 = vpop.f32.mrb[0].mxu0
  %v514 = vpop.f32.mrb[0].mxu0
  %515 = vdwg.mxu0
  %v516 = vmax.f32 %v319, 0.0
  %v517 = vmax.f32 %v322, 0.0
  %v518 = vmax.f32 %v327, 0.0
  %v519 = vmax.f32 %v330, 0.0
  %v520 = vmax.f32 %v335, 0.0
  %v521 = vmax.f32 %v338, 0.0
  %v522 = vmax.f32 %v343, 0.0
  %v523 = vmax.f32 %v346, 0.0
  %v524 = vmax.f32 %v351, 0.0
  %v525 = vmax.f32 %v354, 0.0
  %v526 = vmax.f32 %v359, 0.0
  %v527 = vmax.f32 %v362, 0.0
  %v528 = vmax.f32 %v367, 0.0
  %v529 = vmax.f32 %v370, 0.0
  %v530 = vmax.f32 %v375, 0.0
  %v531 = vmax.f32 %v378, 0.0
  %v532 = vmax.f32 %v383, 0.0
  %v533 = vmax.f32 %v386, 0.0
  %v534 = vmax.f32 %v391, 0.0
  %v535 = vmax.f32 %v394, 0.0
  %v536 = vmax.f32 %v399, 0.0
  %v537 = vmax.f32 %v402, 0.0
  %v538 = vmax.f32 %v407, 0.0
  %v539 = vmax.f32 %v410, 0.0
  %v540 = vmax.f32 %v415, 0.0
  %v541 = vmax.f32 %v418, 0.0
  %v542 = vmax.f32 %v423, 0.0
  %v543 = vmax.f32 %v426, 0.0
  %v544 = vmax.f32 %v431, 0.0
  %v545 = vmax.f32 %v434, 0.0
  %v546 = vmax.f32 %v439, 0.0
  %v547 = vmax.f32 %v442, 0.0
  %v548 = vmax.f32 %v447, 0.0
  %v549 = vmax.f32 %v450, 0.0
  %v550 = vmax.f32 %v455, 0.0
  %v551 = vmax.f32 %v458, 0.0
  %v552 = vmax.f32 %v463, 0.0
  %v553 = vmax.f32 %v466, 0.0
  %v554 = vmax.f32 %v471, 0.0
  %v555 = vmax.f32 %v474, 0.0
  %v556 = vmax.f32 %v479, 0.0
  %v557 = vmax.f32 %v482, 0.0
  %v558 = vmax.f32 %v487, 0.0
  %v559 = vmax.f32 %v490, 0.0
  %v560 = vmax.f32 %v495, 0.0
  %v561 = vmax.f32 %v498, 0.0
  %v562 = vmax.f32 %v503, 0.0
  %v563 = vmax.f32 %v506, 0.0
  %v564 = vmax.f32 %v511, 0.0
  %s565 = scalar_lea.vmem %s0, 196
  %v566 = vld [vmem:[%s565] sm:$0xf]
  %v567 = vld [vmem:[%s565 + $0x4] sm:$0xf]
  %v568 = vld [vmem:[%s565 + $0x8] sm:$0xf]
  %v569 = vld [vmem:[%s565 + $0xc] sm:$0xf]
  %v570 = vld [vmem:[%s565 + $0x10] sm:$0xf]
  %v571 = vld [vmem:[%s565 + $0x14] sm:$0xf]
  %v572 = vld [vmem:[%s565 + $0x18] sm:$0xf]
  %v573 = vld [vmem:[%s565 + $0x1c] sm:$0xf]
  %v574 = vld [vmem:[%s565 + $0x20] sm:$0xf]
  %v575 = vld [vmem:[%s565 + $0x24] sm:$0xf]
  %v576 = vld [vmem:[%s565 + $0x28] sm:$0xf]
  %v577 = vld [vmem:[%s565 + $0x2c] sm:$0xf]
  %v578 = vld [vmem:[%s565 + $0x30] sm:$0xf]
  %v579 = vld [vmem:[%s565 + $0x34] sm:$0xf]
  %v580 = vld [vmem:[%s565 + $0x38] sm:$0xf]
  %v581 = vld [vmem:[%s565 + $0x3c] sm:$0xf]
  %v582 = vld [vmem:[%s565 + $0x40] sm:$0xf]
  %v583 = vld [vmem:[%s565 + $0x44] sm:$0xf]
  %v584 = vld [vmem:[%s565 + $0x48] sm:$0xf]
  %v585 = vld [vmem:[%s565 + $0x4c] sm:$0xf]
  %v586 = vld [vmem:[%s565 + $0x50] sm:$0xf]
  %v587 = vld [vmem:[%s565 + $0x54] sm:$0xf]
  %v588 = vld [vmem:[%s565 + $0x58] sm:$0xf]
  %v589 = vld [vmem:[%s565 + $0x5c] sm:$0xf]
  %v590 = vld [vmem:[%s565 + $0x60] sm:$0xf]
  %v591 = vld [vmem:[%s565 + $0x64] sm:$0xf]
  %v592 = vld [vmem:[%s565 + $0x68] sm:$0xf]
  %v593 = vld [vmem:[%s565 + $0x6c] sm:$0xf]
  %v594 = vld [vmem:[%s565 + $0x70] sm:$0xf]
  %v595 = vld [vmem:[%s565 + $0x74] sm:$0xf]
  %v596 = vld [vmem:[%s565 + $0x78] sm:$0xf]
  %v597 = vld [vmem:[%s565 + $0x7c] sm:$0xf]
  %v598 = vld [vmem:[%s565 + $0x80] sm:$0xf]
  %v599 = vld [vmem:[%s565 + $0x84] sm:$0xf]
  %v600 = vld [vmem:[%s565 + $0x88] sm:$0xf]
  %v601 = vld [vmem:[%s565 + $0x8c] sm:$0xf]
  %v602 = vld [vmem:[%s565 + $0x90] sm:$0xf]
  %v603 = vld [vmem:[%s565 + $0x94] sm:$0xf]
  %v604 = vld [vmem:[%s565 + $0x98] sm:$0xf]
  %v605 = vld [vmem:[%s565 + $0x9c] sm:$0xf]
  %v606 = vld [vmem:[%s565 + $0xa0] sm:$0xf]
  %v607 = vld [vmem:[%s565 + $0xa4] sm:$0xf]
  %v608 = vld [vmem:[%s565 + $0xa8] sm:$0xf]
  %v609 = vld [vmem:[%s565 + $0xac] sm:$0xf]
  %v610 = vld [vmem:[%s565 + $0xb0] sm:$0xf]
  %v611 = vld [vmem:[%s565 + $0xb4] sm:$0xf]
  %v612 = vld [vmem:[%s565 + $0xb8] sm:$0xf]
  %v613 = vld [vmem:[%s565 + $0xbc] sm:$0xf]
  %v614 = vld [vmem:[%s565 + $0xc0] sm:$0xf]
  %v664 = vunpack.c.l.b16 %v566
  %v665 = vunpack.c.l.b16 %v567
  %v666 = vunpack.c.l.b16 %v568
  %v667 = vunpack.c.l.b16 %v569
  %v668 = vunpack.c.l.b16 %v570
  %v669 = vunpack.c.l.b16 %v571
  %v670 = vunpack.c.l.b16 %v572
  %v671 = vunpack.c.l.b16 %v573
  %v672 = vunpack.c.l.b16 %v574
  %v673 = vunpack.c.l.b16 %v575
  %v674 = vunpack.c.l.b16 %v576
  %v675 = vunpack.c.l.b16 %v577
  %v676 = vunpack.c.l.b16 %v578
  %v677 = vunpack.c.l.b16 %v579
  %v678 = vunpack.c.l.b16 %v580
  %v679 = vunpack.c.l.b16 %v581
  %v680 = vunpack.c.l.b16 %v582
  %v681 = vunpack.c.l.b16 %v583
  %v682 = vunpack.c.l.b16 %v584
  %v683 = vunpack.c.l.b16 %v585
  %v684 = vunpack.c.l.b16 %v586
  %v685 = vunpack.c.l.b16 %v587
  %v686 = vunpack.c.l.b16 %v588
  %v687 = vunpack.c.l.b16 %v589
  %v688 = vunpack.c.l.b16 %v590
  %v689 = vunpack.c.l.b16 %v591
  %v690 = vunpack.c.l.b16 %v592
  %v691 = vunpack.c.l.b16 %v593
  %v692 = vunpack.c.l.b16 %v594
  %v693 = vunpack.c.l.b16 %v595
  %v694 = vunpack.c.l.b16 %v596
  %v695 = vunpack.c.l.b16 %v597
  %v696 = vunpack.c.l.b16 %v598
  %v697 = vunpack.c.l.b16 %v599
  %v698 = vunpack.c.l.b16 %v600
  %v699 = vunpack.c.l.b16 %v601
  %v700 = vunpack.c.l.b16 %v602
  %v701 = vunpack.c.l.b16 %v603
  %v702 = vunpack.c.l.b16 %v604
  %v703 = vunpack.c.l.b16 %v605
  %v704 = vunpack.c.l.b16 %v606
  %v705 = vunpack.c.l.b16 %v607
  %v706 = vunpack.c.l.b16 %v608
  %v707 = vunpack.c.l.b16 %v609
  %v708 = vunpack.c.l.b16 %v610
  %v709 = vunpack.c.l.b16 %v611
  %v710 = vunpack.c.l.b16 %v612
  %v711 = vunpack.c.l.b16 %v613
  %v712 = vunpack.c.l.b16 %v614
  %v713 = vpack.c.b16 %v665, %v664
  %v714 = vpack.c.b16 %v667, %v666
  %v715 = vpack.c.b16 %v669, %v668
  %v716 = vpack.c.b16 %v671, %v670
  %v717 = vpack.c.b16 %v673, %v672
  %v718 = vpack.c.b16 %v675, %v674
  %v719 = vpack.c.b16 %v677, %v676
  %v720 = vpack.c.b16 %v679, %v678
  %v721 = vpack.c.b16 %v681, %v680
  %v722 = vpack.c.b16 %v683, %v682
  %v723 = vpack.c.b16 %v685, %v684
  %v724 = vpack.c.b16 %v687, %v686
  %v725 = vpack.c.b16 %v689, %v688
  %v726 = vpack.c.b16 %v691, %v690
  %v727 = vpack.c.b16 %v693, %v692
  %v728 = vpack.c.b16 %v695, %v694
  %v729 = vpack.c.b16 %v697, %v696
  %v730 = vpack.c.b16 %v699, %v698
  %v731 = vpack.c.b16 %v701, %v700
  %v732 = vpack.c.b16 %v703, %v702
  %v733 = vpack.c.b16 %v705, %v704
  %v734 = vpack.c.b16 %v707, %v706
  %v735 = vpack.c.b16 %v709, %v708
  %v736 = vpack.c.b16 %v711, %v710
  %v737 = vpack.c.b16 %v712, %v712
  %v739 = vsel %vm201, %v713, 0
  %v742 = vsel %vm201, %v714, 0
  %v745 = vsel %vm201, %v715, 0
  %v748 = vsel %vm201, %v716, 0
  %v751 = vsel %vm201, %v717, 0
  %v754 = vsel %vm201, %v718, 0
  %v757 = vsel %vm201, %v719, 0
  %v760 = vsel %vm201, %v720, 0
  %v763 = vsel %vm201, %v721, 0
  %v766 = vsel %vm201, %v722, 0
  %v769 = vsel %vm201, %v723, 0
  %v772 = vsel %vm201, %v724, 0
  %v775 = vsel %vm201, %v725, 0
  %v778 = vsel %vm201, %v726, 0
  %v781 = vsel %vm201, %v727, 0
  %v784 = vsel %vm201, %v728, 0
  %v787 = vsel %vm201, %v729, 0
  %v790 = vsel %vm201, %v730, 0
  %v793 = vsel %vm201, %v731, 0
  %v796 = vsel %vm201, %v732, 0
  %v799 = vsel %vm201, %v733, 0
  %v802 = vsel %vm201, %v734, 0
  %v805 = vsel %vm201, %v735, 0
  %v808 = vsel %vm201, %v736, 0
  %v811 = vsel %vm201, %v737, 0
  %813 = vmatprep.subr.bf16.mxu0 0
  %814 = vmatpush1.bf16.msra.mxu0 %v282
  %815 = vmatprep.subr.bf16.mxu0 0
  %816 = vmatpush1.bf16.msra.mxu0 0
  %817 = vmatprep.subr.bf16.mxu0 0
  %818 = vmatpush1.bf16.msra.mxu0 0
  %819 = vmatprep.subr.bf16.mxu0 0
  %820 = vmatpush1.bf16.msra.mxu0 0
  %821 = vmatprep.subr.bf16.mxu0 0
  %822 = vmatpush1.bf16.msra.mxu0 0
  %823 = vmatprep.subr.bf16.mxu0 0
  %824 = vmatpush1.bf16.msra.mxu0 0
  %825 = vmatprep.subr.bf16.mxu0 0
  %826 = vmatpush1.bf16.msra.mxu0 0
  %827 = vmatprep.subr.bf16.mxu0 0
  %828 = vmatpush1.bf16.msra.mxu0 0
  %829 = vmatprep.subr.bf16.mxu0 0
  %830 = vmatpush1.bf16.msra.mxu0 0
  %831 = vmatprep.subr.bf16.mxu0 0
  %832 = vmatpush1.bf16.msra.mxu0 0
  %833 = vmatprep.subr.bf16.mxu0 0
  %834 = vmatpush1.bf16.msra.mxu0 0
  %835 = vmatprep.subr.bf16.mxu0 0
  %836 = vmatpush1.bf16.msra.mxu0 0
  %837 = vmatprep.subr.bf16.mxu0 0
  %838 = vmatpush1.bf16.msra.mxu0 0
  %839 = vmatprep.subr.bf16.mxu0 0
  %840 = vmatpush1.bf16.msra.mxu0 0
  %841 = vmatprep.subr.bf16.mxu0 0
  %842 = vmatpush1.bf16.msra.mxu0 0
  %843 = vmatprep.subr.bf16.mxu0 0
  %844 = vmatpush1.bf16.msra.mxu0 0
  %845 = vmatprep.mubr.bf16.mxu0 0
  %846 = vmatmul.mubr.bf16.gmra.mrb[0].mxu0 %v739
  %v847 = vpop.f32.mrb[0].mxu0
  %v848 = vadd.f32 %v71, %v847
  %v849 = vpop.f32.mrb[0].mxu0
  %v850 = vpop.f32.mrb[0].mxu0
  %v851 = vadd.f32 %v71, %v850
  %v852 = vpop.f32.mrb[0].mxu0
  %853 = vmatprep.mubr.bf16.mxu0 0
  %854 = vmatmul.mubr.bf16.gmra.mrb[0].mxu0 %v742
  %v855 = vpop.f32.mrb[0].mxu0
  %v856 = vadd.f32 %v71, %v855
  %v857 = vpop.f32.mrb[0].mxu0
  %v858 = vpop.f32.mrb[0].mxu0
  %v859 = vadd.f32 %v71, %v858
  %v860 = vpop.f32.mrb[0].mxu0
  %861 = vmatprep.mubr.bf16.mxu0 0
  %862 = vmatmul.mubr.bf16.gmra.mrb[0].mxu0 %v745
  %v863 = vpop.f32.mrb[0].mxu0
  %v864 = vadd.f32 %v71, %v863
  %v865 = vpop.f32.mrb[0].mxu0
  %v866 = vpop.f32.mrb[0].mxu0
  %v867 = vadd.f32 %v71, %v866
  %v868 = vpop.f32.mrb[0].mxu0
  %869 = vmatprep.mubr.bf16.mxu0 0
  %870 = vmatmul.mubr.bf16.gmra.mrb[0].mxu0 %v748
  %v871 = vpop.f32.mrb[0].mxu0
  %v872 = vadd.f32 %v71, %v871
  %v873 = vpop.f32.mrb[0].mxu0
  %v874 = vpop.f32.mrb[0].mxu0
  %v875 = vadd.f32 %v71, %v874
  %v876 = vpop.f32.mrb[0].mxu0
  %877 = vmatprep.mubr.bf16.mxu0 0
  %878 = vmatmul.mubr.bf16.gmra.mrb[0].mxu0 %v751
  %v879 = vpop.f32.mrb[0].mxu0
  %v880 = vadd.f32 %v71, %v879
  %v881 = vpop.f32.mrb[0].mxu0
  %v882 = vpop.f32.mrb[0].mxu0
  %v883 = vadd.f32 %v71, %v882
  %v884 = vpop.f32.mrb[0].mxu0
  %885 = vmatprep.mubr.bf16.mxu0 0
  %886 = vmatmul.mubr.bf16.gmra.mrb[0].mxu0 %v754
  %v887 = vpop.f32.mrb[0].mxu0
  %v888 = vadd.f32 %v71, %v887
  %v889 = vpop.f32.mrb[0].mxu0
  %v890 = vpop.f32.mrb[0].mxu0
  %v891 = vadd.f32 %v71, %v890
  %v892 = vpop.f32.mrb[0].mxu0
  %893 = vmatprep.mubr.bf16.mxu0 0
  %894 = vmatmul.mubr.bf16.gmra.mrb[0].mxu0 %v757
  %v895 = vpop.f32.mrb[0].mxu0
  %v896 = vadd.f32 %v71, %v895
  %v897 = vpop.f32.mrb[0].mxu0
  %v898 = vpop.f32.mrb[0].mxu0
  %v899 = vadd.f32 %v71, %v898
  %v900 = vpop.f32.mrb[0].mxu0
  %901 = vmatprep.mubr.bf16.mxu0 0
  %902 = vmatmul.mubr.bf16.gmra.mrb[0].mxu0 %v760
  %v903 = vpop.f32.mrb[0].mxu0
  %v904 = vadd.f32 %v71, %v903
  %v905 = vpop.f32.mrb[0].mxu0
  %v906 = vpop.f32.mrb[0].mxu0
  %v907 = vadd.f32 %v71, %v906
  %v908 = vpop.f32.mrb[0].mxu0
  %909 = vmatprep.mubr.bf16.mxu0 0
  %910 = vmatmul.mubr.bf16.gmra.mrb[0].mxu0 %v763
  %v911 = vpop.f32.mrb[0].mxu0
  %v912 = vadd.f32 %v71, %v911
  %v913 = vpop.f32.mrb[0].mxu0
  %v914 = vpop.f32.mrb[0].mxu0
  %v915 = vadd.f32 %v71, %v914
  %v916 = vpop.f32.mrb[0].mxu0
  %917 = vmatprep.mubr.bf16.mxu0 0
  %918 = vmatmul.mubr.bf16.gmra.mrb[0].mxu0 %v766
  %v919 = vpop.f32.mrb[0].mxu0
  %v920 = vadd.f32 %v71, %v919
  %v921 = vpop.f32.mrb[0].mxu0
  %v922 = vpop.f32.mrb[0].mxu0
  %v923 = vadd.f32 %v71, %v922
  %v924 = vpop.f32.mrb[0].mxu0
  %925 = vmatprep.mubr.bf16.mxu0 0
  %926 = vmatmul.mubr.bf16.gmra.mrb[0].mxu0 %v769
  %v927 = vpop.f32.mrb[0].mxu0
  %v928 = vadd.f32 %v71, %v927
  %v929 = vpop.f32.mrb[0].mxu0
  %v930 = vpop.f32.mrb[0].mxu0
  %v931 = vadd.f32 %v71, %v930
  %v932 = vpop.f32.mrb[0].mxu0
  %933 = vmatprep.mubr.bf16.mxu0 0
  %934 = vmatmul.mubr.bf16.gmra.mrb[0].mxu0 %v772
  %v935 = vpop.f32.mrb[0].mxu0
  %v936 = vadd.f32 %v71, %v935
  %v937 = vpop.f32.mrb[0].mxu0
  %v938 = vpop.f32.mrb[0].mxu0
  %v939 = vadd.f32 %v71, %v938
  %v940 = vpop.f32.mrb[0].mxu0
  %941 = vmatprep.mubr.bf16.mxu0 0
  %942 = vmatmul.mubr.bf16.gmra.mrb[0].mxu0 %v775
  %v943 = vpop.f32.mrb[0].mxu0
  %v944 = vadd.f32 %v71, %v943
  %v945 = vpop.f32.mrb[0].mxu0
  %v946 = vpop.f32.mrb[0].mxu0
  %v947 = vadd.f32 %v71, %v946
  %v948 = vpop.f32.mrb[0].mxu0
  %949 = vmatprep.mubr.bf16.mxu0 0
  %950 = vmatmul.mubr.bf16.gmra.mrb[0].mxu0 %v778
  %v951 = vpop.f32.mrb[0].mxu0
  %v952 = vadd.f32 %v71, %v951
  %v953 = vpop.f32.mrb[0].mxu0
  %v954 = vpop.f32.mrb[0].mxu0
  %v955 = vadd.f32 %v71, %v954
  %v956 = vpop.f32.mrb[0].mxu0
  %957 = vmatprep.mubr.bf16.mxu0 0
  %958 = vmatmul.mubr.bf16.gmra.mrb[0].mxu0 %v781
  %v959 = vpop.f32.mrb[0].mxu0
  %v960 = vadd.f32 %v71, %v959
  %v961 = vpop.f32.mrb[0].mxu0
  %v962 = vpop.f32.mrb[0].mxu0
  %v963 = vadd.f32 %v71, %v962
  %v964 = vpop.f32.mrb[0].mxu0
  %965 = vmatprep.mubr.bf16.mxu0 0
  %966 = vmatmul.mubr.bf16.gmra.mrb[0].mxu0 %v784
  %v967 = vpop.f32.mrb[0].mxu0
  %v968 = vadd.f32 %v71, %v967
  %v969 = vpop.f32.mrb[0].mxu0
  %v970 = vpop.f32.mrb[0].mxu0
  %v971 = vadd.f32 %v71, %v970
  %v972 = vpop.f32.mrb[0].mxu0
  %973 = vmatprep.mubr.bf16.mxu0 0
  %974 = vmatmul.mubr.bf16.gmra.mrb[0].mxu0 %v787
  %v975 = vpop.f32.mrb[0].mxu0
  %v976 = vadd.f32 %v71, %v975
  %v977 = vpop.f32.mrb[0].mxu0
  %v978 = vpop.f32.mrb[0].mxu0
  %v979 = vadd.f32 %v71, %v978
  %v980 = vpop.f32.mrb[0].mxu0
  %981 = vmatprep.mubr.bf16.mxu0 0
  %982 = vmatmul.mubr.bf16.gmra.mrb[0].mxu0 %v790
  %v983 = vpop.f32.mrb[0].mxu0
  %v984 = vadd.f32 %v71, %v983
  %v985 = vpop.f32.mrb[0].mxu0
  %v986 = vpop.f32.mrb[0].mxu0
  %v987 = vadd.f32 %v71, %v986
  %v988 = vpop.f32.mrb[0].mxu0
  %989 = vmatprep.mubr.bf16.mxu0 0
  %990 = vmatmul.mubr.bf16.gmra.mrb[0].mxu0 %v793
  %v991 = vpop.f32.mrb[0].mxu0
  %v992 = vadd.f32 %v71, %v991
  %v993 = vpop.f32.mrb[0].mxu0
  %v994 = vpop.f32.mrb[0].mxu0
  %v995 = vadd.f32 %v71, %v994
  %v996 = vpop.f32.mrb[0].mxu0
  %997 = vmatprep.mubr.bf16.mxu0 0
  %998 = vmatmul.mubr.bf16.gmra.mrb[0].mxu0 %v796
  %v999 = vpop.f32.mrb[0].mxu0
  %v1000 = vadd.f32 %v71, %v999
  %v1001 = vpop.f32.mrb[0].mxu0
  %v1002 = vpop.f32.mrb[0].mxu0
  %v1003 = vadd.f32 %v71, %v1002
  %v1004 = vpop.f32.mrb[0].mxu0
  %1005 = vmatprep.mubr.bf16.mxu0 0
  %1006 = vmatmul.mubr.bf16.gmra.mrb[0].mxu0 %v799
  %v1007 = vpop.f32.mrb[0].mxu0
  %v1008 = vadd.f32 %v71, %v1007
  %v1009 = vpop.f32.mrb[0].mxu0
  %v1010 = vpop.f32.mrb[0].mxu0
  %v1011 = vadd.f32 %v71, %v1010
  %v1012 = vpop.f32.mrb[0].mxu0
  %1013 = vmatprep.mubr.bf16.mxu0 0
  %1014 = vmatmul.mubr.bf16.gmra.mrb[0].mxu0 %v802
  %v1015 = vpop.f32.mrb[0].mxu0
  %v1016 = vadd.f32 %v71, %v1015
  %v1017 = vpop.f32.mrb[0].mxu0
  %v1018 = vpop.f32.mrb[0].mxu0
  %v1019 = vadd.f32 %v71, %v1018
  %v1020 = vpop.f32.mrb[0].mxu0
  %1021 = vmatprep.mubr.bf16.mxu0 0
  %1022 = vmatmul.mubr.bf16.gmra.mrb[0].mxu0 %v805
  %v1023 = vpop.f32.mrb[0].mxu0
  %v1024 = vadd.f32 %v71, %v1023
  %v1025 = vpop.f32.mrb[0].mxu0
  %v1026 = vpop.f32.mrb[0].mxu0
  %v1027 = vadd.f32 %v71, %v1026
  %v1028 = vpop.f32.mrb[0].mxu0
  %1029 = vmatprep.mubr.bf16.mxu0 0
  %1030 = vmatmul.mubr.bf16.gmra.mrb[0].mxu0 %v808
  %v1031 = vpop.f32.mrb[0].mxu0
  %v1032 = vadd.f32 %v71, %v1031
  %v1033 = vpop.f32.mrb[0].mxu0
  %v1034 = vpop.f32.mrb[0].mxu0
  %v1035 = vadd.f32 %v71, %v1034
  %v1036 = vpop.f32.mrb[0].mxu0
  %1037 = vmatprep.mubr.bf16.mxu0 0
  %1038 = vmatmul.mubr.bf16.gmra.mrb[0].mxu0 %v811
  %v1039 = vpop.f32.mrb[0].mxu0
  %v1040 = vadd.f32 %v71, %v1039
  %v1041 = vpop.f32.mrb[0].mxu0
  %v1042 = vpop.f32.mrb[0].mxu0
  %v1043 = vpop.f32.mrb[0].mxu0
  %1044 = vdwg.mxu0
  %v1045 = vmax.f32 %v848, 0.0
  %v1046 = vmax.f32 %v851, 0.0
  %v1047 = vmax.f32 %v856, 0.0
  %v1048 = vmax.f32 %v859, 0.0
  %v1049 = vmax.f32 %v864, 0.0
  %v1050 = vmax.f32 %v867, 0.0
  %v1051 = vmax.f32 %v872, 0.0
  %v1052 = vmax.f32 %v875, 0.0
  %v1053 = vmax.f32 %v880, 0.0
  %v1054 = vmax.f32 %v883, 0.0
  %v1055 = vmax.f32 %v888, 0.0
  %v1056 = vmax.f32 %v891, 0.0
  %v1057 = vmax.f32 %v896, 0.0
  %v1058 = vmax.f32 %v899, 0.0
  %v1059 = vmax.f32 %v904, 0.0
  %v1060 = vmax.f32 %v907, 0.0
  %v1061 = vmax.f32 %v912, 0.0
  %v1062 = vmax.f32 %v915, 0.0
  %v1063 = vmax.f32 %v920, 0.0
  %v1064 = vmax.f32 %v923, 0.0
  %v1065 = vmax.f32 %v928, 0.0
  %v1066 = vmax.f32 %v931, 0.0
  %v1067 = vmax.f32 %v936, 0.0
  %v1068 = vmax.f32 %v939, 0.0
  %v1069 = vmax.f32 %v944, 0.0
  %v1070 = vmax.f32 %v947, 0.0
  %v1071 = vmax.f32 %v952, 0.0
  %v1072 = vmax.f32 %v955, 0.0
  %v1073 = vmax.f32 %v960, 0.0
  %v1074 = vmax.f32 %v963, 0.0
  %v1075 = vmax.f32 %v968, 0.0
  %v1076 = vmax.f32 %v971, 0.0
  %v1077 = vmax.f32 %v976, 0.0
  %v1078 = vmax.f32 %v979, 0.0
  %v1079 = vmax.f32 %v984, 0.0
  %v1080 = vmax.f32 %v987, 0.0
  %v1081 = vmax.f32 %v992, 0.0
  %v1082 = vmax.f32 %v995, 0.0
  %v1083 = vmax.f32 %v1000, 0.0
  %v1084 = vmax.f32 %v1003, 0.0
  %v1085 = vmax.f32 %v1008, 0.0
  %v1086 = vmax.f32 %v1011, 0.0
  %v1087 = vmax.f32 %v1016, 0.0
  %v1088 = vmax.f32 %v1019, 0.0
  %v1089 = vmax.f32 %v1024, 0.0
  %v1090 = vmax.f32 %v1027, 0.0
  %v1091 = vmax.f32 %v1032, 0.0
  %v1092 = vmax.f32 %v1035, 0.0
  %v1093 = vmax.f32 %v1040, 0.0
  %v1094 = vmax.f32 %v516, %v1045
  %v1095 = vmax.f32 %v517, %v1046
  %v1096 = vmax.f32 %v518, %v1047
  %v1097 = vmax.f32 %v519, %v1048
  %v1098 = vmax.f32 %v520, %v1049
  %v1099 = vmax.f32 %v521, %v1050
  %v1100 = vmax.f32 %v522, %v1051
  %v1101 = vmax.f32 %v523, %v1052
  %v1102 = vmax.f32 %v524, %v1053
  %v1103 = vmax.f32 %v525, %v1054
  %v1104 = vmax.f32 %v526, %v1055
  %v1105 = vmax.f32 %v527, %v1056
  %v1106 = vmax.f32 %v528, %v1057
  %v1107 = vmax.f32 %v529, %v1058
  %v1108 = vmax.f32 %v530, %v1059
  %v1109 = vmax.f32 %v531, %v1060
  %v1110 = vmax.f32 %v532, %v1061
  %v1111 = vmax.f32 %v533, %v1062
  %v1112 = vmax.f32 %v534, %v1063
  %v1113 = vmax.f32 %v535, %v1064
  %v1114 = vmax.f32 %v536, %v1065
  %v1115 = vmax.f32 %v537, %v1066
  %v1116 = vmax.f32 %v538, %v1067
  %v1117 = vmax.f32 %v539, %v1068
  %v1118 = vmax.f32 %v540, %v1069
  %v1119 = vmax.f32 %v541, %v1070
  %v1120 = vmax.f32 %v542, %v1071
  %v1121 = vmax.f32 %v543, %v1072
  %v1122 = vmax.f32 %v544, %v1073
  %v1123 = vmax.f32 %v545, %v1074
  %v1124 = vmax.f32 %v546, %v1075
  %v1125 = vmax.f32 %v547, %v1076
  %v1126 = vmax.f32 %v548, %v1077
  %v1127 = vmax.f32 %v549, %v1078
  %v1128 = vmax.f32 %v550, %v1079
  %v1129 = vmax.f32 %v551, %v1080
  %v1130 = vmax.f32 %v552, %v1081
  %v1131 = vmax.f32 %v553, %v1082
  %v1132 = vmax.f32 %v554, %v1083
  %v1133 = vmax.f32 %v555, %v1084
  %v1134 = vmax.f32 %v556, %v1085
  %v1135 = vmax.f32 %v557, %v1086
  %v1136 = vmax.f32 %v558, %v1087
  %v1137 = vmax.f32 %v559, %v1088
  %v1138 = vmax.f32 %v560, %v1089
  %v1139 = vmax.f32 %v561, %v1090
  %v1140 = vmax.f32 %v562, %v1091
  %v1141 = vmax.f32 %v563, %v1092
  %v1142 = vmax.f32 %v564, %v1093
  %s1143 = scalar_lea.vmem %s0, 392
  %v1144 = vld [vmem:[%s1143] sm:$0xf]
  %v1145 = vld [vmem:[%s1143 + $0x4] sm:$0xf]
  %v1146 = vld [vmem:[%s1143 + $0x8] sm:$0xf]
  %v1147 = vld [vmem:[%s1143 + $0xc] sm:$0xf]
  %v1148 = vld [vmem:[%s1143 + $0x10] sm:$0xf]
  %v1149 = vld [vmem:[%s1143 + $0x14] sm:$0xf]
  %v1150 = vld [vmem:[%s1143 + $0x18] sm:$0xf]
  %v1151 = vld [vmem:[%s1143 + $0x1c] sm:$0xf]
  %v1152 = vld [vmem:[%s1143 + $0x20] sm:$0xf]
  %v1153 = vld [vmem:[%s1143 + $0x24] sm:$0xf]
  %v1154 = vld [vmem:[%s1143 + $0x28] sm:$0xf]
  %v1155 = vld [vmem:[%s1143 + $0x2c] sm:$0xf]
  %v1156 = vld [vmem:[%s1143 + $0x30] sm:$0xf]
  %v1157 = vld [vmem:[%s1143 + $0x34] sm:$0xf]
  %v1158 = vld [vmem:[%s1143 + $0x38] sm:$0xf]
  %v1159 = vld [vmem:[%s1143 + $0x3c] sm:$0xf]
  %v1160 = vld [vmem:[%s1143 + $0x40] sm:$0xf]
  %v1161 = vld [vmem:[%s1143 + $0x44] sm:$0xf]
  %v1162 = vld [vmem:[%s1143 + $0x48] sm:$0xf]
  %v1163 = vld [vmem:[%s1143 + $0x4c] sm:$0xf]
  %v1164 = vld [vmem:[%s1143 + $0x50] sm:$0xf]
  %v1165 = vld [vmem:[%s1143 + $0x54] sm:$0xf]
  %v1166 = vld [vmem:[%s1143 + $0x58] sm:$0xf]
  %v1167 = vld [vmem:[%s1143 + $0x5c] sm:$0xf]
  %v1168 = vld [vmem:[%s1143 + $0x60] sm:$0xf]
  %v1169 = vld [vmem:[%s1143 + $0x64] sm:$0xf]
  %v1170 = vld [vmem:[%s1143 + $0x68] sm:$0xf]
  %v1171 = vld [vmem:[%s1143 + $0x6c] sm:$0xf]
  %v1172 = vld [vmem:[%s1143 + $0x70] sm:$0xf]
  %v1173 = vld [vmem:[%s1143 + $0x74] sm:$0xf]
  %v1174 = vld [vmem:[%s1143 + $0x78] sm:$0xf]
  %v1175 = vld [vmem:[%s1143 + $0x7c] sm:$0xf]
  %v1176 = vld [vmem:[%s1143 + $0x80] sm:$0xf]
  %v1177 = vld [vmem:[%s1143 + $0x84] sm:$0xf]
  %v1178 = vld [vmem:[%s1143 + $0x88] sm:$0xf]
  %v1179 = vld [vmem:[%s1143 + $0x8c] sm:$0xf]
  %v1180 = vld [vmem:[%s1143 + $0x90] sm:$0xf]
  %v1181 = vld [vmem:[%s1143 + $0x94] sm:$0xf]
  %v1182 = vld [vmem:[%s1143 + $0x98] sm:$0xf]
  %v1183 = vld [vmem:[%s1143 + $0x9c] sm:$0xf]
  %v1184 = vld [vmem:[%s1143 + $0xa0] sm:$0xf]
  %v1185 = vld [vmem:[%s1143 + $0xa4] sm:$0xf]
  %v1186 = vld [vmem:[%s1143 + $0xa8] sm:$0xf]
  %v1187 = vld [vmem:[%s1143 + $0xac] sm:$0xf]
  %v1188 = vld [vmem:[%s1143 + $0xb0] sm:$0xf]
  %v1189 = vld [vmem:[%s1143 + $0xb4] sm:$0xf]
  %v1190 = vld [vmem:[%s1143 + $0xb8] sm:$0xf]
  %v1191 = vld [vmem:[%s1143 + $0xbc] sm:$0xf]
  %v1192 = vld [vmem:[%s1143 + $0xc0] sm:$0xf]
  %v1242 = vunpack.c.l.b16 %v1144
  %v1243 = vunpack.c.l.b16 %v1145
  %v1244 = vunpack.c.l.b16 %v1146
  %v1245 = vunpack.c.l.b16 %v1147
  %v1246 = vunpack.c.l.b16 %v1148
  %v1247 = vunpack.c.l.b16 %v1149
  %v1248 = vunpack.c.l.b16 %v1150
  %v1249 = vunpack.c.l.b16 %v1151
  %v1250 = vunpack.c.l.b16 %v1152
  %v1251 = vunpack.c.l.b16 %v1153
  %v1252 = vunpack.c.l.b16 %v1154
  %v1253 = vunpack.c.l.b16 %v1155
  %v1254 = vunpack.c.l.b16 %v1156
  %v1255 = vunpack.c.l.b16 %v1157
  %v1256 = vunpack.c.l.b16 %v1158
  %v1257 = vunpack.c.l.b16 %v1159
  %v1258 = vunpack.c.l.b16 %v1160
  %v1259 = vunpack.c.l.b16 %v1161
  %v1260 = vunpack.c.l.b16 %v1162
  %v1261 = vunpack.c.l.b16 %v1163
  %v1262 = vunpack.c.l.b16 %v1164
  %v1263 = vunpack.c.l.b16 %v1165
  %v1264 = vunpack.c.l.b16 %v1166
  %v1265 = vunpack.c.l.b16 %v1167
  %v1266 = vunpack.c.l.b16 %v1168
  %v1267 = vunpack.c.l.b16 %v1169
  %v1268 = vunpack.c.l.b16 %v1170
  %v1269 = vunpack.c.l.b16 %v1171
  %v1270 = vunpack.c.l.b16 %v1172
  %v1271 = vunpack.c.l.b16 %v1173
  %v1272 = vunpack.c.l.b16 %v1174
  %v1273 = vunpack.c.l.b16 %v1175
  %v1274 = vunpack.c.l.b16 %v1176
  %v1275 = vunpack.c.l.b16 %v1177
  %v1276 = vunpack.c.l.b16 %v1178
  %v1277 = vunpack.c.l.b16 %v1179
  %v1278 = vunpack.c.l.b16 %v1180
  %v1279 = vunpack.c.l.b16 %v1181
  %v1280 = vunpack.c.l.b16 %v1182
  %v1281 = vunpack.c.l.b16 %v1183
  %v1282 = vunpack.c.l.b16 %v1184
  %v1283 = vunpack.c.l.b16 %v1185
  %v1284 = vunpack.c.l.b16 %v1186
  %v1285 = vunpack.c.l.b16 %v1187
  %v1286 = vunpack.c.l.b16 %v1188
  %v1287 = vunpack.c.l.b16 %v1189
  %v1288 = vunpack.c.l.b16 %v1190
  %v1289 = vunpack.c.l.b16 %v1191
  %v1290 = vunpack.c.l.b16 %v1192
  %v1291 = vpack.c.b16 %v1243, %v1242
  %v1292 = vpack.c.b16 %v1245, %v1244
  %v1293 = vpack.c.b16 %v1247, %v1246
  %v1294 = vpack.c.b16 %v1249, %v1248
  %v1295 = vpack.c.b16 %v1251, %v1250
  %v1296 = vpack.c.b16 %v1253, %v1252
  %v1297 = vpack.c.b16 %v1255, %v1254
  %v1298 = vpack.c.b16 %v1257, %v1256
  %v1299 = vpack.c.b16 %v1259, %v1258
  %v1300 = vpack.c.b16 %v1261, %v1260
  %v1301 = vpack.c.b16 %v1263, %v1262
  %v1302 = vpack.c.b16 %v1265, %v1264
  %v1303 = vpack.c.b16 %v1267, %v1266
  %v1304 = vpack.c.b16 %v1269, %v1268
  %v1305 = vpack.c.b16 %v1271, %v1270
  %v1306 = vpack.c.b16 %v1273, %v1272
  %v1307 = vpack.c.b16 %v1275, %v1274
  %v1308 = vpack.c.b16 %v1277, %v1276
  %v1309 = vpack.c.b16 %v1279, %v1278
  %v1310 = vpack.c.b16 %v1281, %v1280
  %v1311 = vpack.c.b16 %v1283, %v1282
  %v1312 = vpack.c.b16 %v1285, %v1284
  %v1313 = vpack.c.b16 %v1287, %v1286
  %v1314 = vpack.c.b16 %v1289, %v1288
  %v1315 = vpack.c.b16 %v1290, %v1290
  %v1317 = vsel %vm201, %v1291, 0
  %v1320 = vsel %vm201, %v1292, 0
  %v1323 = vsel %vm201, %v1293, 0
  %v1326 = vsel %vm201, %v1294, 0
  %v1329 = vsel %vm201, %v1295, 0
  %v1332 = vsel %vm201, %v1296, 0
  %v1335 = vsel %vm201, %v1297, 0
  %v1338 = vsel %vm201, %v1298, 0
  %v1341 = vsel %vm201, %v1299, 0
  %v1344 = vsel %vm201, %v1300, 0
  %v1347 = vsel %vm201, %v1301, 0
  %v1350 = vsel %vm201, %v1302, 0
  %v1353 = vsel %vm201, %v1303, 0
  %v1356 = vsel %vm201, %v1304, 0
  %v1359 = vsel %vm201, %v1305, 0
  %v1362 = vsel %vm201, %v1306, 0
  %v1365 = vsel %vm201, %v1307, 0
  %v1368 = vsel %vm201, %v1308, 0
  %v1371 = vsel %vm201, %v1309, 0
  %v1374 = vsel %vm201, %v1310, 0
  %v1377 = vsel %vm201, %v1311, 0
  %v1380 = vsel %vm201, %v1312, 0
  %v1383 = vsel %vm201, %v1313, 0
  %v1386 = vsel %vm201, %v1314, 0
  %v1389 = vsel %vm201, %v1315, 0
  %1391 = vmatprep.subr.bf16.mxu0 0
  %1392 = vmatpush1.bf16.msra.mxu0 %v282
  %1393 = vmatprep.subr.bf16.mxu0 0
  %1394 = vmatpush1.bf16.msra.mxu0 0
  %1395 = vmatprep.subr.bf16.mxu0 0
  %1396 = vmatpush1.bf16.msra.mxu0 0
  %1397 = vmatprep.subr.bf16.mxu0 0
  %1398 = vmatpush1.bf16.msra.mxu0 0
  %1399 = vmatprep.subr.bf16.mxu0 0
  %1400 = vmatpush1.bf16.msra.mxu0 0
  %1401 = vmatprep.subr.bf16.mxu0 0
  %1402 = vmatpush1.bf16.msra.mxu0 0
  %1403 = vmatprep.subr.bf16.mxu0 0
  %1404 = vmatpush1.bf16.msra.mxu0 0
  %1405 = vmatprep.subr.bf16.mxu0 0
  %1406 = vmatpush1.bf16.msra.mxu0 0
  %1407 = vmatprep.subr.bf16.mxu0 0
  %1408 = vmatpush1.bf16.msra.mxu0 0
  %1409 = vmatprep.subr.bf16.mxu0 0
  %1410 = vmatpush1.bf16.msra.mxu0 0
  %1411 = vmatprep.subr.bf16.mxu0 0
  %1412 = vmatpush1.bf16.msra.mxu0 0
  %1413 = vmatprep.subr.bf16.mxu0 0
  %1414 = vmatpush1.bf16.msra.mxu0 0
  %1415 = vmatprep.subr.bf16.mxu0 0
  %1416 = vmatpush1.bf16.msra.mxu0 0
  %1417 = vmatprep.subr.bf16.mxu0 0
  %1418 = vmatpush1.bf16.msra.mxu0 0
  %1419 = vmatprep.subr.bf16.mxu0 0
  %1420 = vmatpush1.bf16.msra.mxu0 0
  %1421 = vmatprep.subr.bf16.mxu0 0
  %1422 = vmatpush1.bf16.msra.mxu0 0
  %1423 = vmatprep.mubr.bf16.mxu0 0
  %1424 = vmatmul.mubr.bf16.gmra.mrb[0].mxu0 %v1317
  %v1425 = vpop.f32.mrb[0].mxu0
  %v1426 = vadd.f32 %v71, %v1425
  %v1427 = vpop.f32.mrb[0].mxu0
  %v1428 = vpop.f32.mrb[0].mxu0
  %v1429 = vadd.f32 %v71, %v1428
  %v1430 = vpop.f32.mrb[0].mxu0
  %1431 = vmatprep.mubr.bf16.mxu0 0
  %1432 = vmatmul.mubr.bf16.gmra.mrb[0].mxu0 %v1320
  %v1433 = vpop.f32.mrb[0].mxu0
  %v1434 = vadd.f32 %v71, %v1433
  %v1435 = vpop.f32.mrb[0].mxu0
  %v1436 = vpop.f32.mrb[0].mxu0
  %v1437 = vadd.f32 %v71, %v1436
  %v1438 = vpop.f32.mrb[0].mxu0
  %1439 = vmatprep.mubr.bf16.mxu0 0
  %1440 = vmatmul.mubr.bf16.gmra.mrb[0].mxu0 %v1323
  %v1441 = vpop.f32.mrb[0].mxu0
  %v1442 = vadd.f32 %v71, %v1441
  %v1443 = vpop.f32.mrb[0].mxu0
  %v1444 = vpop.f32.mrb[0].mxu0
  %v1445 = vadd.f32 %v71, %v1444
  %v1446 = vpop.f32.mrb[0].mxu0
  %1447 = vmatprep.mubr.bf16.mxu0 0
  %1448 = vmatmul.mubr.bf16.gmra.mrb[0].mxu0 %v1326
  %v1449 = vpop.f32.mrb[0].mxu0
  %v1450 = vadd.f32 %v71, %v1449
  %v1451 = vpop.f32.mrb[0].mxu0
  %v1452 = vpop.f32.mrb[0].mxu0
  %v1453 = vadd.f32 %v71, %v1452
  %v1454 = vpop.f32.mrb[0].mxu0
  %1455 = vmatprep.mubr.bf16.mxu0 0
  %1456 = vmatmul.mubr.bf16.gmra.mrb[0].mxu0 %v1329
  %v1457 = vpop.f32.mrb[0].mxu0
  %v1458 = vadd.f32 %v71, %v1457
  %v1459 = vpop.f32.mrb[0].mxu0
  %v1460 = vpop.f32.mrb[0].mxu0
  %v1461 = vadd.f32 %v71, %v1460
  %v1462 = vpop.f32.mrb[0].mxu0
  %1463 = vmatprep.mubr.bf16.mxu0 0
  %1464 = vmatmul.mubr.bf16.gmra.mrb[0].mxu0 %v1332
  %v1465 = vpop.f32.mrb[0].mxu0
  %v1466 = vadd.f32 %v71, %v1465
  %v1467 = vpop.f32.mrb[0].mxu0
  %v1468 = vpop.f32.mrb[0].mxu0
  %v1469 = vadd.f32 %v71, %v1468
  %v1470 = vpop.f32.mrb[0].mxu0
  %1471 = vmatprep.mubr.bf16.mxu0 0
  %1472 = vmatmul.mubr.bf16.gmra.mrb[0].mxu0 %v1335
  %v1473 = vpop.f32.mrb[0].mxu0
  %v1474 = vadd.f32 %v71, %v1473
  %v1475 = vpop.f32.mrb[0].mxu0
  %v1476 = vpop.f32.mrb[0].mxu0
  %v1477 = vadd.f32 %v71, %v1476
  %v1478 = vpop.f32.mrb[0].mxu0
  %1479 = vmatprep.mubr.bf16.mxu0 0
  %1480 = vmatmul.mubr.bf16.gmra.mrb[0].mxu0 %v1338
  %v1481 = vpop.f32.mrb[0].mxu0
  %v1482 = vadd.f32 %v71, %v1481
  %v1483 = vpop.f32.mrb[0].mxu0
  %v1484 = vpop.f32.mrb[0].mxu0
  %v1485 = vadd.f32 %v71, %v1484
  %v1486 = vpop.f32.mrb[0].mxu0
  %1487 = vmatprep.mubr.bf16.mxu0 0
  %1488 = vmatmul.mubr.bf16.gmra.mrb[0].mxu0 %v1341
  %v1489 = vpop.f32.mrb[0].mxu0
  %v1490 = vadd.f32 %v71, %v1489
  %v1491 = vpop.f32.mrb[0].mxu0
  %v1492 = vpop.f32.mrb[0].mxu0
  %v1493 = vadd.f32 %v71, %v1492
  %v1494 = vpop.f32.mrb[0].mxu0
  %1495 = vmatprep.mubr.bf16.mxu0 0
  %1496 = vmatmul.mubr.bf16.gmra.mrb[0].mxu0 %v1344
  %v1497 = vpop.f32.mrb[0].mxu0
  %v1498 = vadd.f32 %v71, %v1497
  %v1499 = vpop.f32.mrb[0].mxu0
  %v1500 = vpop.f32.mrb[0].mxu0
  %v1501 = vadd.f32 %v71, %v1500
  %v1502 = vpop.f32.mrb[0].mxu0
  %1503 = vmatprep.mubr.bf16.mxu0 0
  %1504 = vmatmul.mubr.bf16.gmra.mrb[0].mxu0 %v1347
  %v1505 = vpop.f32.mrb[0].mxu0
  %v1506 = vadd.f32 %v71, %v1505
  %v1507 = vpop.f32.mrb[0].mxu0
  %v1508 = vpop.f32.mrb[0].mxu0
  %v1509 = vadd.f32 %v71, %v1508
  %v1510 = vpop.f32.mrb[0].mxu0
  %1511 = vmatprep.mubr.bf16.mxu0 0
  %1512 = vmatmul.mubr.bf16.gmra.mrb[0].mxu0 %v1350
  %v1513 = vpop.f32.mrb[0].mxu0
  %v1514 = vadd.f32 %v71, %v1513
  %v1515 = vpop.f32.mrb[0].mxu0
  %v1516 = vpop.f32.mrb[0].mxu0
  %v1517 = vadd.f32 %v71, %v1516
  %v1518 = vpop.f32.mrb[0].mxu0
  %1519 = vmatprep.mubr.bf16.mxu0 0
  %1520 = vmatmul.mubr.bf16.gmra.mrb[0].mxu0 %v1353
  %v1521 = vpop.f32.mrb[0].mxu0
  %v1522 = vadd.f32 %v71, %v1521
  %v1523 = vpop.f32.mrb[0].mxu0
  %v1524 = vpop.f32.mrb[0].mxu0
  %v1525 = vadd.f32 %v71, %v1524
  %v1526 = vpop.f32.mrb[0].mxu0
  %1527 = vmatprep.mubr.bf16.mxu0 0
  %1528 = vmatmul.mubr.bf16.gmra.mrb[0].mxu0 %v1356
  %v1529 = vpop.f32.mrb[0].mxu0
  %v1530 = vadd.f32 %v71, %v1529
  %v1531 = vpop.f32.mrb[0].mxu0
  %v1532 = vpop.f32.mrb[0].mxu0
  %v1533 = vadd.f32 %v71, %v1532
  %v1534 = vpop.f32.mrb[0].mxu0
  %1535 = vmatprep.mubr.bf16.mxu0 0
  %1536 = vmatmul.mubr.bf16.gmra.mrb[0].mxu0 %v1359
  %v1537 = vpop.f32.mrb[0].mxu0
  %v1538 = vadd.f32 %v71, %v1537
  %v1539 = vpop.f32.mrb[0].mxu0
  %v1540 = vpop.f32.mrb[0].mxu0
  %v1541 = vadd.f32 %v71, %v1540
  %v1542 = vpop.f32.mrb[0].mxu0
  %1543 = vmatprep.mubr.bf16.mxu0 0
  %1544 = vmatmul.mubr.bf16.gmra.mrb[0].mxu0 %v1362
  %v1545 = vpop.f32.mrb[0].mxu0
  %v1546 = vadd.f32 %v71, %v1545
  %v1547 = vpop.f32.mrb[0].mxu0
  %v1548 = vpop.f32.mrb[0].mxu0
  %v1549 = vadd.f32 %v71, %v1548
  %v1550 = vpop.f32.mrb[0].mxu0
  %1551 = vmatprep.mubr.bf16.mxu0 0
  %1552 = vmatmul.mubr.bf16.gmra.mrb[0].mxu0 %v1365
  %v1553 = vpop.f32.mrb[0].mxu0
  %v1554 = vadd.f32 %v71, %v1553
  %v1555 = vpop.f32.mrb[0].mxu0
  %v1556 = vpop.f32.mrb[0].mxu0
  %v1557 = vadd.f32 %v71, %v1556
  %v1558 = vpop.f32.mrb[0].mxu0
  %1559 = vmatprep.mubr.bf16.mxu0 0
  %1560 = vmatmul.mubr.bf16.gmra.mrb[0].mxu0 %v1368
  %v1561 = vpop.f32.mrb[0].mxu0
  %v1562 = vadd.f32 %v71, %v1561
  %v1563 = vpop.f32.mrb[0].mxu0
  %v1564 = vpop.f32.mrb[0].mxu0
  %v1565 = vadd.f32 %v71, %v1564
  %v1566 = vpop.f32.mrb[0].mxu0
  %1567 = vmatprep.mubr.bf16.mxu0 0
  %1568 = vmatmul.mubr.bf16.gmra.mrb[0].mxu0 %v1371
  %v1569 = vpop.f32.mrb[0].mxu0
  %v1570 = vadd.f32 %v71, %v1569
  %v1571 = vpop.f32.mrb[0].mxu0
  %v1572 = vpop.f32.mrb[0].mxu0
  %v1573 = vadd.f32 %v71, %v1572
  %v1574 = vpop.f32.mrb[0].mxu0
  %1575 = vmatprep.mubr.bf16.mxu0 0
  %1576 = vmatmul.mubr.bf16.gmra.mrb[0].mxu0 %v1374
  %v1577 = vpop.f32.mrb[0].mxu0
  %v1578 = vadd.f32 %v71, %v1577
  %v1579 = vpop.f32.mrb[0].mxu0
  %v1580 = vpop.f32.mrb[0].mxu0
  %v1581 = vadd.f32 %v71, %v1580
  %v1582 = vpop.f32.mrb[0].mxu0
  %1583 = vmatprep.mubr.bf16.mxu0 0
  %1584 = vmatmul.mubr.bf16.gmra.mrb[0].mxu0 %v1377
  %v1585 = vpop.f32.mrb[0].mxu0
  %v1586 = vadd.f32 %v71, %v1585
  %v1587 = vpop.f32.mrb[0].mxu0
  %v1588 = vpop.f32.mrb[0].mxu0
  %v1589 = vadd.f32 %v71, %v1588
  %v1590 = vpop.f32.mrb[0].mxu0
  %1591 = vmatprep.mubr.bf16.mxu0 0
  %1592 = vmatmul.mubr.bf16.gmra.mrb[0].mxu0 %v1380
  %v1593 = vpop.f32.mrb[0].mxu0
  %v1594 = vadd.f32 %v71, %v1593
  %v1595 = vpop.f32.mrb[0].mxu0
  %v1596 = vpop.f32.mrb[0].mxu0
  %v1597 = vadd.f32 %v71, %v1596
  %v1598 = vpop.f32.mrb[0].mxu0
  %1599 = vmatprep.mubr.bf16.mxu0 0
  %1600 = vmatmul.mubr.bf16.gmra.mrb[0].mxu0 %v1383
  %v1601 = vpop.f32.mrb[0].mxu0
  %v1602 = vadd.f32 %v71, %v1601
  %v1603 = vpop.f32.mrb[0].mxu0
  %v1604 = vpop.f32.mrb[0].mxu0
  %v1605 = vadd.f32 %v71, %v1604
  %v1606 = vpop.f32.mrb[0].mxu0
  %1607 = vmatprep.mubr.bf16.mxu0 0
  %1608 = vmatmul.mubr.bf16.gmra.mrb[0].mxu0 %v1386
  %v1609 = vpop.f32.mrb[0].mxu0
  %v1610 = vadd.f32 %v71, %v1609
  %v1611 = vpop.f32.mrb[0].mxu0
  %v1612 = vpop.f32.mrb[0].mxu0
  %v1613 = vadd.f32 %v71, %v1612
  %v1614 = vpop.f32.mrb[0].mxu0
  %1615 = vmatprep.mubr.bf16.mxu0 0
  %1616 = vmatmul.mubr.bf16.gmra.mrb[0].mxu0 %v1389
  %v1617 = vpop.f32.mrb[0].mxu0
  %v1618 = vadd.f32 %v71, %v1617
  %v1619 = vpop.f32.mrb[0].mxu0
  %v1620 = vpop.f32.mrb[0].mxu0
  %v1621 = vpop.f32.mrb[0].mxu0
  %1622 = vdwg.mxu0
  %v1623 = vmax.f32 %v1426, 0.0
  %v1624 = vmax.f32 %v1429, 0.0
  %v1625 = vmax.f32 %v1434, 0.0
  %v1626 = vmax.f32 %v1437, 0.0
  %v1627 = vmax.f32 %v1442, 0.0
  %v1628 = vmax.f32 %v1445, 0.0
  %v1629 = vmax.f32 %v1450, 0.0
  %v1630 = vmax.f32 %v1453, 0.0
  %v1631 = vmax.f32 %v1458, 0.0
  %v1632 = vmax.f32 %v1461, 0.0
  %v1633 = vmax.f32 %v1466, 0.0
  %v1634 = vmax.f32 %v1469, 0.0
  %v1635 = vmax.f32 %v1474, 0.0
  %v1636 = vmax.f32 %v1477, 0.0
  %v1637 = vmax.f32 %v1482, 0.0
  %v1638 = vmax.f32 %v1485, 0.0
  %v1639 = vmax.f32 %v1490, 0.0
  %v1640 = vmax.f32 %v1493, 0.0
  %v1641 = vmax.f32 %v1498, 0.0
  %v1642 = vmax.f32 %v1501, 0.0
  %v1643 = vmax.f32 %v1506, 0.0
  %v1644 = vmax.f32 %v1509, 0.0
  %v1645 = vmax.f32 %v1514, 0.0
  %v1646 = vmax.f32 %v1517, 0.0
  %v1647 = vmax.f32 %v1522, 0.0
  %v1648 = vmax.f32 %v1525, 0.0
  %v1649 = vmax.f32 %v1530, 0.0
  %v1650 = vmax.f32 %v1533, 0.0
  %v1651 = vmax.f32 %v1538, 0.0
  %v1652 = vmax.f32 %v1541, 0.0
  %v1653 = vmax.f32 %v1546, 0.0
  %v1654 = vmax.f32 %v1549, 0.0
  %v1655 = vmax.f32 %v1554, 0.0
  %v1656 = vmax.f32 %v1557, 0.0
  %v1657 = vmax.f32 %v1562, 0.0
  %v1658 = vmax.f32 %v1565, 0.0
  %v1659 = vmax.f32 %v1570, 0.0
  %v1660 = vmax.f32 %v1573, 0.0
  %v1661 = vmax.f32 %v1578, 0.0
  %v1662 = vmax.f32 %v1581, 0.0
  %v1663 = vmax.f32 %v1586, 0.0
  %v1664 = vmax.f32 %v1589, 0.0
  %v1665 = vmax.f32 %v1594, 0.0
  %v1666 = vmax.f32 %v1597, 0.0
  %v1667 = vmax.f32 %v1602, 0.0
  %v1668 = vmax.f32 %v1605, 0.0
  %v1669 = vmax.f32 %v1610, 0.0
  %v1670 = vmax.f32 %v1613, 0.0
  %v1671 = vmax.f32 %v1618, 0.0
  %s1672 = scalar_lea.vmem %s0, 588
  %v1673 = vld [vmem:[%s1672] sm:$0xf]
  %v1674 = vld [vmem:[%s1672 + $0x4] sm:$0xf]
  %v1675 = vld [vmem:[%s1672 + $0x8] sm:$0xf]
  %v1676 = vld [vmem:[%s1672 + $0xc] sm:$0xf]
  %v1677 = vld [vmem:[%s1672 + $0x10] sm:$0xf]
  %v1678 = vld [vmem:[%s1672 + $0x14] sm:$0xf]
  %v1679 = vld [vmem:[%s1672 + $0x18] sm:$0xf]
  %v1680 = vld [vmem:[%s1672 + $0x1c] sm:$0xf]
  %v1681 = vld [vmem:[%s1672 + $0x20] sm:$0xf]
  %v1682 = vld [vmem:[%s1672 + $0x24] sm:$0xf]
  %v1683 = vld [vmem:[%s1672 + $0x28] sm:$0xf]
  %v1684 = vld [vmem:[%s1672 + $0x2c] sm:$0xf]
  %v1685 = vld [vmem:[%s1672 + $0x30] sm:$0xf]
  %v1686 = vld [vmem:[%s1672 + $0x34] sm:$0xf]
  %v1687 = vld [vmem:[%s1672 + $0x38] sm:$0xf]
  %v1688 = vld [vmem:[%s1672 + $0x3c] sm:$0xf]
  %v1689 = vld [vmem:[%s1672 + $0x40] sm:$0xf]
  %v1690 = vld [vmem:[%s1672 + $0x44] sm:$0xf]
  %v1691 = vld [vmem:[%s1672 + $0x48] sm:$0xf]
  %v1692 = vld [vmem:[%s1672 + $0x4c] sm:$0xf]
  %v1693 = vld [vmem:[%s1672 + $0x50] sm:$0xf]
  %v1694 = vld [vmem:[%s1672 + $0x54] sm:$0xf]
  %v1695 = vld [vmem:[%s1672 + $0x58] sm:$0xf]
  %v1696 = vld [vmem:[%s1672 + $0x5c] sm:$0xf]
  %v1697 = vld [vmem:[%s1672 + $0x60] sm:$0xf]
  %v1698 = vld [vmem:[%s1672 + $0x64] sm:$0xf]
  %v1699 = vld [vmem:[%s1672 + $0x68] sm:$0xf]
  %v1700 = vld [vmem:[%s1672 + $0x6c] sm:$0xf]
  %v1701 = vld [vmem:[%s1672 + $0x70] sm:$0xf]
  %v1702 = vld [vmem:[%s1672 + $0x74] sm:$0xf]
  %v1703 = vld [vmem:[%s1672 + $0x78] sm:$0xf]
  %v1704 = vld [vmem:[%s1672 + $0x7c] sm:$0xf]
  %v1705 = vld [vmem:[%s1672 + $0x80] sm:$0xf]
  %v1706 = vld [vmem:[%s1672 + $0x84] sm:$0xf]
  %v1707 = vld [vmem:[%s1672 + $0x88] sm:$0xf]
  %v1708 = vld [vmem:[%s1672 + $0x8c] sm:$0xf]
  %v1709 = vld [vmem:[%s1672 + $0x90] sm:$0xf]
  %v1710 = vld [vmem:[%s1672 + $0x94] sm:$0xf]
  %v1711 = vld [vmem:[%s1672 + $0x98] sm:$0xf]
  %v1712 = vld [vmem:[%s1672 + $0x9c] sm:$0xf]
  %v1713 = vld [vmem:[%s1672 + $0xa0] sm:$0xf]
  %v1714 = vld [vmem:[%s1672 + $0xa4] sm:$0xf]
  %v1715 = vld [vmem:[%s1672 + $0xa8] sm:$0xf]
  %v1716 = vld [vmem:[%s1672 + $0xac] sm:$0xf]
  %v1717 = vld [vmem:[%s1672 + $0xb0] sm:$0xf]
  %v1718 = vld [vmem:[%s1672 + $0xb4] sm:$0xf]
  %v1719 = vld [vmem:[%s1672 + $0xb8] sm:$0xf]
  %v1720 = vld [vmem:[%s1672 + $0xbc] sm:$0xf]
  %v1721 = vld [vmem:[%s1672 + $0xc0] sm:$0xf]
  %v1771 = vunpack.c.l.b16 %v1673
  %v1772 = vunpack.c.l.b16 %v1674
  %v1773 = vunpack.c.l.b16 %v1675
  %v1774 = vunpack.c.l.b16 %v1676
  %v1775 = vunpack.c.l.b16 %v1677
  %v1776 = vunpack.c.l.b16 %v1678
  %v1777 = vunpack.c.l.b16 %v1679
  %v1778 = vunpack.c.l.b16 %v1680
  %v1779 = vunpack.c.l.b16 %v1681
  %v1780 = vunpack.c.l.b16 %v1682
  %v1781 = vunpack.c.l.b16 %v1683
  %v1782 = vunpack.c.l.b16 %v1684
  %v1783 = vunpack.c.l.b16 %v1685
  %v1784 = vunpack.c.l.b16 %v1686
  %v1785 = vunpack.c.l.b16 %v1687
  %v1786 = vunpack.c.l.b16 %v1688
  %v1787 = vunpack.c.l.b16 %v1689
  %v1788 = vunpack.c.l.b16 %v1690
  %v1789 = vunpack.c.l.b16 %v1691
  %v1790 = vunpack.c.l.b16 %v1692
  %v1791 = vunpack.c.l.b16 %v1693
  %v1792 = vunpack.c.l.b16 %v1694
  %v1793 = vunpack.c.l.b16 %v1695
  %v1794 = vunpack.c.l.b16 %v1696
  %v1795 = vunpack.c.l.b16 %v1697
  %v1796 = vunpack.c.l.b16 %v1698
  %v1797 = vunpack.c.l.b16 %v1699
  %v1798 = vunpack.c.l.b16 %v1700
  %v1799 = vunpack.c.l.b16 %v1701
  %v1800 = vunpack.c.l.b16 %v1702
  %v1801 = vunpack.c.l.b16 %v1703
  %v1802 = vunpack.c.l.b16 %v1704
  %v1803 = vunpack.c.l.b16 %v1705
  %v1804 = vunpack.c.l.b16 %v1706
  %v1805 = vunpack.c.l.b16 %v1707
  %v1806 = vunpack.c.l.b16 %v1708
  %v1807 = vunpack.c.l.b16 %v1709
  %v1808 = vunpack.c.l.b16 %v1710
  %v1809 = vunpack.c.l.b16 %v1711
  %v1810 = vunpack.c.l.b16 %v1712
  %v1811 = vunpack.c.l.b16 %v1713
  %v1812 = vunpack.c.l.b16 %v1714
  %v1813 = vunpack.c.l.b16 %v1715
  %v1814 = vunpack.c.l.b16 %v1716
  %v1815 = vunpack.c.l.b16 %v1717
  %v1816 = vunpack.c.l.b16 %v1718
  %v1817 = vunpack.c.l.b16 %v1719
  %v1818 = vunpack.c.l.b16 %v1720
  %v1819 = vunpack.c.l.b16 %v1721
  %v1820 = vpack.c.b16 %v1772, %v1771
  %v1821 = vpack.c.b16 %v1774, %v1773
  %v1822 = vpack.c.b16 %v1776, %v1775
  %v1823 = vpack.c.b16 %v1778, %v1777
  %v1824 = vpack.c.b16 %v1780, %v1779
  %v1825 = vpack.c.b16 %v1782, %v1781
  %v1826 = vpack.c.b16 %v1784, %v1783
  %v1827 = vpack.c.b16 %v1786, %v1785
  %v1828 = vpack.c.b16 %v1788, %v1787
  %v1829 = vpack.c.b16 %v1790, %v1789
  %v1830 = vpack.c.b16 %v1792, %v1791
  %v1831 = vpack.c.b16 %v1794, %v1793
  %v1832 = vpack.c.b16 %v1796, %v1795
  %v1833 = vpack.c.b16 %v1798, %v1797
  %v1834 = vpack.c.b16 %v1800, %v1799
  %v1835 = vpack.c.b16 %v1802, %v1801
  %v1836 = vpack.c.b16 %v1804, %v1803
  %v1837 = vpack.c.b16 %v1806, %v1805
  %v1838 = vpack.c.b16 %v1808, %v1807
  %v1839 = vpack.c.b16 %v1810, %v1809
  %v1840 = vpack.c.b16 %v1812, %v1811
  %v1841 = vpack.c.b16 %v1814, %v1813
  %v1842 = vpack.c.b16 %v1816, %v1815
  %v1843 = vpack.c.b16 %v1818, %v1817
  %v1844 = vpack.c.b16 %v1819, %v1819
  %v1846 = vsel %vm201, %v1820, 0
  %v1849 = vsel %vm201, %v1821, 0
  %v1852 = vsel %vm201, %v1822, 0
  %v1855 = vsel %vm201, %v1823, 0
  %v1858 = vsel %vm201, %v1824, 0
  %v1861 = vsel %vm201, %v1825, 0
  %v1864 = vsel %vm201, %v1826, 0
  %v1867 = vsel %vm201, %v1827, 0
  %v1870 = vsel %vm201, %v1828, 0
  %v1873 = vsel %vm201, %v1829, 0
  %v1876 = vsel %vm201, %v1830, 0
  %v1879 = vsel %vm201, %v1831, 0
  %v1882 = vsel %vm201, %v1832, 0
  %v1885 = vsel %vm201, %v1833, 0
  %v1888 = vsel %vm201, %v1834, 0
  %v1891 = vsel %vm201, %v1835, 0
  %v1894 = vsel %vm201, %v1836, 0
  %v1897 = vsel %vm201, %v1837, 0
  %v1900 = vsel %vm201, %v1838, 0
  %v1903 = vsel %vm201, %v1839, 0
  %v1906 = vsel %vm201, %v1840, 0
  %v1909 = vsel %vm201, %v1841, 0
  %v1912 = vsel %vm201, %v1842, 0
  %v1915 = vsel %vm201, %v1843, 0
  %v1918 = vsel %vm201, %v1844, 0
  %1920 = vmatprep.subr.bf16.mxu0 0
  %1921 = vmatpush1.bf16.msra.mxu0 %v282
  %1922 = vmatprep.subr.bf16.mxu0 0
  %1923 = vmatpush1.bf16.msra.mxu0 0
  %1924 = vmatprep.subr.bf16.mxu0 0
  %1925 = vmatpush1.bf16.msra.mxu0 0
  %1926 = vmatprep.subr.bf16.mxu0 0
  %1927 = vmatpush1.bf16.msra.mxu0 0
  %1928 = vmatprep.subr.bf16.mxu0 0
  %1929 = vmatpush1.bf16.msra.mxu0 0
  %1930 = vmatprep.subr.bf16.mxu0 0
  %1931 = vmatpush1.bf16.msra.mxu0 0
  %1932 = vmatprep.subr.bf16.mxu0 0
  %1933 = vmatpush1.bf16.msra.mxu0 0
  %1934 = vmatprep.subr.bf16.mxu0 0
  %1935 = vmatpush1.bf16.msra.mxu0 0
  %1936 = vmatprep.subr.bf16.mxu0 0
  %1937 = vmatpush1.bf16.msra.mxu0 0
  %1938 = vmatprep.subr.bf16.mxu0 0
  %1939 = vmatpush1.bf16.msra.mxu0 0
  %1940 = vmatprep.subr.bf16.mxu0 0
  %1941 = vmatpush1.bf16.msra.mxu0 0
  %1942 = vmatprep.subr.bf16.mxu0 0
  %1943 = vmatpush1.bf16.msra.mxu0 0
  %1944 = vmatprep.subr.bf16.mxu0 0
  %1945 = vmatpush1.bf16.msra.mxu0 0
  %1946 = vmatprep.subr.bf16.mxu0 0
  %1947 = vmatpush1.bf16.msra.mxu0 0
  %1948 = vmatprep.subr.bf16.mxu0 0
  %1949 = vmatpush1.bf16.msra.mxu0 0
  %1950 = vmatprep.subr.bf16.mxu0 0
  %1951 = vmatpush1.bf16.msra.mxu0 0
  %1952 = vmatprep.mubr.bf16.mxu0 0
  %1953 = vmatmul.mubr.bf16.gmra.mrb[0].mxu0 %v1846
  %v1954 = vpop.f32.mrb[0].mxu0
  %v1955 = vadd.f32 %v71, %v1954
  %v1956 = vpop.f32.mrb[0].mxu0
  %v1957 = vpop.f32.mrb[0].mxu0
  %v1958 = vadd.f32 %v71, %v1957
  %v1959 = vpop.f32.mrb[0].mxu0
  %1960 = vmatprep.mubr.bf16.mxu0 0
  %1961 = vmatmul.mubr.bf16.gmra.mrb[0].mxu0 %v1849
  %v1962 = vpop.f32.mrb[0].mxu0
  %v1963 = vadd.f32 %v71, %v1962
  %v1964 = vpop.f32.mrb[0].mxu0
  %v1965 = vpop.f32.mrb[0].mxu0
  %v1966 = vadd.f32 %v71, %v1965
  %v1967 = vpop.f32.mrb[0].mxu0
  %1968 = vmatprep.mubr.bf16.mxu0 0
  %1969 = vmatmul.mubr.bf16.gmra.mrb[0].mxu0 %v1852
  %v1970 = vpop.f32.mrb[0].mxu0
  %v1971 = vadd.f32 %v71, %v1970
  %v1972 = vpop.f32.mrb[0].mxu0
  %v1973 = vpop.f32.mrb[0].mxu0
  %v1974 = vadd.f32 %v71, %v1973
  %v1975 = vpop.f32.mrb[0].mxu0
  %1976 = vmatprep.mubr.bf16.mxu0 0
  %1977 = vmatmul.mubr.bf16.gmra.mrb[0].mxu0 %v1855
  %v1978 = vpop.f32.mrb[0].mxu0
  %v1979 = vadd.f32 %v71, %v1978
  %v1980 = vpop.f32.mrb[0].mxu0
  %v1981 = vpop.f32.mrb[0].mxu0
  %v1982 = vadd.f32 %v71, %v1981
  %v1983 = vpop.f32.mrb[0].mxu0
  %1984 = vmatprep.mubr.bf16.mxu0 0
  %1985 = vmatmul.mubr.bf16.gmra.mrb[0].mxu0 %v1858
  %v1986 = vpop.f32.mrb[0].mxu0
  %v1987 = vadd.f32 %v71, %v1986
  %v1988 = vpop.f32.mrb[0].mxu0
  %v1989 = vpop.f32.mrb[0].mxu0
  %v1990 = vadd.f32 %v71, %v1989
  %v1991 = vpop.f32.mrb[0].mxu0
  %1992 = vmatprep.mubr.bf16.mxu0 0
  %1993 = vmatmul.mubr.bf16.gmra.mrb[0].mxu0 %v1861
  %v1994 = vpop.f32.mrb[0].mxu0
  %v1995 = vadd.f32 %v71, %v1994
  %v1996 = vpop.f32.mrb[0].mxu0
  %v1997 = vpop.f32.mrb[0].mxu0
  %v1998 = vadd.f32 %v71, %v1997
  %v1999 = vpop.f32.mrb[0].mxu0
  %2000 = vmatprep.mubr.bf16.mxu0 0
  %2001 = vmatmul.mubr.bf16.gmra.mrb[0].mxu0 %v1864
  %v2002 = vpop.f32.mrb[0].mxu0
  %v2003 = vadd.f32 %v71, %v2002
  %v2004 = vpop.f32.mrb[0].mxu0
  %v2005 = vpop.f32.mrb[0].mxu0
  %v2006 = vadd.f32 %v71, %v2005
  %v2007 = vpop.f32.mrb[0].mxu0
  %2008 = vmatprep.mubr.bf16.mxu0 0
  %2009 = vmatmul.mubr.bf16.gmra.mrb[0].mxu0 %v1867
  %v2010 = vpop.f32.mrb[0].mxu0
  %v2011 = vadd.f32 %v71, %v2010
  %v2012 = vpop.f32.mrb[0].mxu0
  %v2013 = vpop.f32.mrb[0].mxu0
  %v2014 = vadd.f32 %v71, %v2013
  %v2015 = vpop.f32.mrb[0].mxu0
  %2016 = vmatprep.mubr.bf16.mxu0 0
  %2017 = vmatmul.mubr.bf16.gmra.mrb[0].mxu0 %v1870
  %v2018 = vpop.f32.mrb[0].mxu0
  %v2019 = vadd.f32 %v71, %v2018
  %v2020 = vpop.f32.mrb[0].mxu0
  %v2021 = vpop.f32.mrb[0].mxu0
  %v2022 = vadd.f32 %v71, %v2021
  %v2023 = vpop.f32.mrb[0].mxu0
  %2024 = vmatprep.mubr.bf16.mxu0 0
  %2025 = vmatmul.mubr.bf16.gmra.mrb[0].mxu0 %v1873
  %v2026 = vpop.f32.mrb[0].mxu0
  %v2027 = vadd.f32 %v71, %v2026
  %v2028 = vpop.f32.mrb[0].mxu0
  %v2029 = vpop.f32.mrb[0].mxu0
  %v2030 = vadd.f32 %v71, %v2029
  %v2031 = vpop.f32.mrb[0].mxu0
  %2032 = vmatprep.mubr.bf16.mxu0 0
  %2033 = vmatmul.mubr.bf16.gmra.mrb[0].mxu0 %v1876
  %v2034 = vpop.f32.mrb[0].mxu0
  %v2035 = vadd.f32 %v71, %v2034
  %v2036 = vpop.f32.mrb[0].mxu0
  %v2037 = vpop.f32.mrb[0].mxu0
  %v2038 = vadd.f32 %v71, %v2037
  %v2039 = vpop.f32.mrb[0].mxu0
  %2040 = vmatprep.mubr.bf16.mxu0 0
  %2041 = vmatmul.mubr.bf16.gmra.mrb[0].mxu0 %v1879
  %v2042 = vpop.f32.mrb[0].mxu0
  %v2043 = vadd.f32 %v71, %v2042
  %v2044 = vpop.f32.mrb[0].mxu0
  %v2045 = vpop.f32.mrb[0].mxu0
  %v2046 = vadd.f32 %v71, %v2045
  %v2047 = vpop.f32.mrb[0].mxu0
  %2048 = vmatprep.mubr.bf16.mxu0 0
  %2049 = vmatmul.mubr.bf16.gmra.mrb[0].mxu0 %v1882
  %v2050 = vpop.f32.mrb[0].mxu0
  %v2051 = vadd.f32 %v71, %v2050
  %v2052 = vpop.f32.mrb[0].mxu0
  %v2053 = vpop.f32.mrb[0].mxu0
  %v2054 = vadd.f32 %v71, %v2053
  %v2055 = vpop.f32.mrb[0].mxu0
  %2056 = vmatprep.mubr.bf16.mxu0 0
  %2057 = vmatmul.mubr.bf16.gmra.mrb[0].mxu0 %v1885
  %v2058 = vpop.f32.mrb[0].mxu0
  %v2059 = vadd.f32 %v71, %v2058
  %v2060 = vpop.f32.mrb[0].mxu0
  %v2061 = vpop.f32.mrb[0].mxu0
  %v2062 = vadd.f32 %v71, %v2061
  %v2063 = vpop.f32.mrb[0].mxu0
  %2064 = vmatprep.mubr.bf16.mxu0 0
  %2065 = vmatmul.mubr.bf16.gmra.mrb[0].mxu0 %v1888
  %v2066 = vpop.f32.mrb[0].mxu0
  %v2067 = vadd.f32 %v71, %v2066
  %v2068 = vpop.f32.mrb[0].mxu0
  %v2069 = vpop.f32.mrb[0].mxu0
  %v2070 = vadd.f32 %v71, %v2069
  %v2071 = vpop.f32.mrb[0].mxu0
  %2072 = vmatprep.mubr.bf16.mxu0 0
  %2073 = vmatmul.mubr.bf16.gmra.mrb[0].mxu0 %v1891
  %v2074 = vpop.f32.mrb[0].mxu0
  %v2075 = vadd.f32 %v71, %v2074
  %v2076 = vpop.f32.mrb[0].mxu0
  %v2077 = vpop.f32.mrb[0].mxu0
  %v2078 = vadd.f32 %v71, %v2077
  %v2079 = vpop.f32.mrb[0].mxu0
  %2080 = vmatprep.mubr.bf16.mxu0 0
  %2081 = vmatmul.mubr.bf16.gmra.mrb[0].mxu0 %v1894
  %v2082 = vpop.f32.mrb[0].mxu0
  %v2083 = vadd.f32 %v71, %v2082
  %v2084 = vpop.f32.mrb[0].mxu0
  %v2085 = vpop.f32.mrb[0].mxu0
  %v2086 = vadd.f32 %v71, %v2085
  %v2087 = vpop.f32.mrb[0].mxu0
  %2088 = vmatprep.mubr.bf16.mxu0 0
  %2089 = vmatmul.mubr.bf16.gmra.mrb[0].mxu0 %v1897
  %v2090 = vpop.f32.mrb[0].mxu0
  %v2091 = vadd.f32 %v71, %v2090
  %v2092 = vpop.f32.mrb[0].mxu0
  %v2093 = vpop.f32.mrb[0].mxu0
  %v2094 = vadd.f32 %v71, %v2093
  %v2095 = vpop.f32.mrb[0].mxu0
  %2096 = vmatprep.mubr.bf16.mxu0 0
  %2097 = vmatmul.mubr.bf16.gmra.mrb[0].mxu0 %v1900
  %v2098 = vpop.f32.mrb[0].mxu0
  %v2099 = vadd.f32 %v71, %v2098
  %v2100 = vpop.f32.mrb[0].mxu0
  %v2101 = vpop.f32.mrb[0].mxu0
  %v2102 = vadd.f32 %v71, %v2101
  %v2103 = vpop.f32.mrb[0].mxu0
  %2104 = vmatprep.mubr.bf16.mxu0 0
  %2105 = vmatmul.mubr.bf16.gmra.mrb[0].mxu0 %v1903
  %v2106 = vpop.f32.mrb[0].mxu0
  %v2107 = vadd.f32 %v71, %v2106
  %v2108 = vpop.f32.mrb[0].mxu0
  %v2109 = vpop.f32.mrb[0].mxu0
  %v2110 = vadd.f32 %v71, %v2109
  %v2111 = vpop.f32.mrb[0].mxu0
  %2112 = vmatprep.mubr.bf16.mxu0 0
  %2113 = vmatmul.mubr.bf16.gmra.mrb[0].mxu0 %v1906
  %v2114 = vpop.f32.mrb[0].mxu0
  %v2115 = vadd.f32 %v71, %v2114
  %v2116 = vpop.f32.mrb[0].mxu0
  %v2117 = vpop.f32.mrb[0].mxu0
  %v2118 = vadd.f32 %v71, %v2117
  %v2119 = vpop.f32.mrb[0].mxu0
  %2120 = vmatprep.mubr.bf16.mxu0 0
  %2121 = vmatmul.mubr.bf16.gmra.mrb[0].mxu0 %v1909
  %v2122 = vpop.f32.mrb[0].mxu0
  %v2123 = vadd.f32 %v71, %v2122
  %v2124 = vpop.f32.mrb[0].mxu0
  %v2125 = vpop.f32.mrb[0].mxu0
  %v2126 = vadd.f32 %v71, %v2125
  %v2127 = vpop.f32.mrb[0].mxu0
  %2128 = vmatprep.mubr.bf16.mxu0 0
  %2129 = vmatmul.mubr.bf16.gmra.mrb[0].mxu0 %v1912
  %v2130 = vpop.f32.mrb[0].mxu0
  %v2131 = vadd.f32 %v71, %v2130
  %v2132 = vpop.f32.mrb[0].mxu0
  %v2133 = vpop.f32.mrb[0].mxu0
  %v2134 = vadd.f32 %v71, %v2133
  %v2135 = vpop.f32.mrb[0].mxu0
  %2136 = vmatprep.mubr.bf16.mxu0 0
  %2137 = vmatmul.mubr.bf16.gmra.mrb[0].mxu0 %v1915
  %v2138 = vpop.f32.mrb[0].mxu0
  %v2139 = vadd.f32 %v71, %v2138
  %v2140 = vpop.f32.mrb[0].mxu0
  %v2141 = vpop.f32.mrb[0].mxu0
  %v2142 = vadd.f32 %v71, %v2141
  %v2143 = vpop.f32.mrb[0].mxu0
  %2144 = vmatprep.mubr.bf16.mxu0 0
  %2145 = vmatmul.mubr.bf16.gmra.mrb[0].mxu0 %v1918
  %v2146 = vpop.f32.mrb[0].mxu0
  %v2147 = vadd.f32 %v71, %v2146
  %v2148 = vpop.f32.mrb[0].mxu0
  %v2149 = vpop.f32.mrb[0].mxu0
  %v2150 = vpop.f32.mrb[0].mxu0
  %2151 = vdwg.mxu0
  %v2152 = vmax.f32 %v1955, 0.0
  %v2153 = vmax.f32 %v1958, 0.0
  %v2154 = vmax.f32 %v1963, 0.0
  %v2155 = vmax.f32 %v1966, 0.0
  %v2156 = vmax.f32 %v1971, 0.0
  %v2157 = vmax.f32 %v1974, 0.0
  %v2158 = vmax.f32 %v1979, 0.0
  %v2159 = vmax.f32 %v1982, 0.0
  %v2160 = vmax.f32 %v1987, 0.0
  %v2161 = vmax.f32 %v1990, 0.0
  %v2162 = vmax.f32 %v1995, 0.0
  %v2163 = vmax.f32 %v1998, 0.0
  %v2164 = vmax.f32 %v2003, 0.0
  %v2165 = vmax.f32 %v2006, 0.0
  %v2166 = vmax.f32 %v2011, 0.0
  %v2167 = vmax.f32 %v2014, 0.0
  %v2168 = vmax.f32 %v2019, 0.0
  %v2169 = vmax.f32 %v2022, 0.0
  %v2170 = vmax.f32 %v2027, 0.0
  %v2171 = vmax.f32 %v2030, 0.0
  %v2172 = vmax.f32 %v2035, 0.0
  %v2173 = vmax.f32 %v2038, 0.0
  %v2174 = vmax.f32 %v2043, 0.0
  %v2175 = vmax.f32 %v2046, 0.0
  %v2176 = vmax.f32 %v2051, 0.0
  %v2177 = vmax.f32 %v2054, 0.0
  %v2178 = vmax.f32 %v2059, 0.0
  %v2179 = vmax.f32 %v2062, 0.0
  %v2180 = vmax.f32 %v2067, 0.0
  %v2181 = vmax.f32 %v2070, 0.0
  %v2182 = vmax.f32 %v2075, 0.0
  %v2183 = vmax.f32 %v2078, 0.0
  %v2184 = vmax.f32 %v2083, 0.0
  %v2185 = vmax.f32 %v2086, 0.0
  %v2186 = vmax.f32 %v2091, 0.0
  %v2187 = vmax.f32 %v2094, 0.0
  %v2188 = vmax.f32 %v2099, 0.0
  %v2189 = vmax.f32 %v2102, 0.0
  %v2190 = vmax.f32 %v2107, 0.0
  %v2191 = vmax.f32 %v2110, 0.0
  %v2192 = vmax.f32 %v2115, 0.0
  %v2193 = vmax.f32 %v2118, 0.0
  %v2194 = vmax.f32 %v2123, 0.0
  %v2195 = vmax.f32 %v2126, 0.0
  %v2196 = vmax.f32 %v2131, 0.0
  %v2197 = vmax.f32 %v2134, 0.0
  %v2198 = vmax.f32 %v2139, 0.0
  %v2199 = vmax.f32 %v2142, 0.0
  %v2200 = vmax.f32 %v2147, 0.0
  %v2201 = vmax.f32 %v1623, %v2152
  %v2202 = vmax.f32 %v1624, %v2153
  %v2203 = vmax.f32 %v1625, %v2154
  %v2204 = vmax.f32 %v1626, %v2155
  %v2205 = vmax.f32 %v1627, %v2156
  %v2206 = vmax.f32 %v1628, %v2157
  %v2207 = vmax.f32 %v1629, %v2158
  %v2208 = vmax.f32 %v1630, %v2159
  %v2209 = vmax.f32 %v1631, %v2160
  %v2210 = vmax.f32 %v1632, %v2161
  %v2211 = vmax.f32 %v1633, %v2162
  %v2212 = vmax.f32 %v1634, %v2163
  %v2213 = vmax.f32 %v1635, %v2164
  %v2214 = vmax.f32 %v1636, %v2165
  %v2215 = vmax.f32 %v1637, %v2166
  %v2216 = vmax.f32 %v1638, %v2167
  %v2217 = vmax.f32 %v1639, %v2168
  %v2218 = vmax.f32 %v1640, %v2169
  %v2219 = vmax.f32 %v1641, %v2170
  %v2220 = vmax.f32 %v1642, %v2171
  %v2221 = vmax.f32 %v1643, %v2172
  %v2222 = vmax.f32 %v1644, %v2173
  %v2223 = vmax.f32 %v1645, %v2174
  %v2224 = vmax.f32 %v1646, %v2175
  %v2225 = vmax.f32 %v1647, %v2176
  %v2226 = vmax.f32 %v1648, %v2177
  %v2227 = vmax.f32 %v1649, %v2178
  %v2228 = vmax.f32 %v1650, %v2179
  %v2229 = vmax.f32 %v1651, %v2180
  %v2230 = vmax.f32 %v1652, %v2181
  %v2231 = vmax.f32 %v1653, %v2182
  %v2232 = vmax.f32 %v1654, %v2183
  %v2233 = vmax.f32 %v1655, %v2184
  %v2234 = vmax.f32 %v1656, %v2185
  %v2235 = vmax.f32 %v1657, %v2186
  %v2236 = vmax.f32 %v1658, %v2187
  %v2237 = vmax.f32 %v1659, %v2188
  %v2238 = vmax.f32 %v1660, %v2189
  %v2239 = vmax.f32 %v1661, %v2190
  %v2240 = vmax.f32 %v1662, %v2191
  %v2241 = vmax.f32 %v1663, %v2192
  %v2242 = vmax.f32 %v1664, %v2193
  %v2243 = vmax.f32 %v1665, %v2194
  %v2244 = vmax.f32 %v1666, %v2195
  %v2245 = vmax.f32 %v1667, %v2196
  %v2246 = vmax.f32 %v1668, %v2197
  %v2247 = vmax.f32 %v1669, %v2198
  %v2248 = vmax.f32 %v1670, %v2199
  %v2249 = vmax.f32 %v1671, %v2200
  %v2250 = vmax.f32 %v1094, %v2201
  %v2251 = vmax.f32 %v1095, %v2202
  %v2252 = vmax.f32 %v1096, %v2203
  %v2253 = vmax.f32 %v1097, %v2204
  %v2254 = vmax.f32 %v1098, %v2205
  %v2255 = vmax.f32 %v1099, %v2206
  %v2256 = vmax.f32 %v1100, %v2207
  %v2257 = vmax.f32 %v1101, %v2208
  %v2258 = vmax.f32 %v1102, %v2209
  %v2259 = vmax.f32 %v1103, %v2210
  %v2260 = vmax.f32 %v1104, %v2211
  %v2261 = vmax.f32 %v1105, %v2212
  %v2262 = vmax.f32 %v1106, %v2213
  %v2263 = vmax.f32 %v1107, %v2214
  %v2264 = vmax.f32 %v1108, %v2215
  %v2265 = vmax.f32 %v1109, %v2216
  %v2266 = vmax.f32 %v1110, %v2217
  %v2267 = vmax.f32 %v1111, %v2218
  %v2268 = vmax.f32 %v1112, %v2219
  %v2269 = vmax.f32 %v1113, %v2220
  %v2270 = vmax.f32 %v1114, %v2221
  %v2271 = vmax.f32 %v1115, %v2222
  %v2272 = vmax.f32 %v1116, %v2223
  %v2273 = vmax.f32 %v1117, %v2224
  %v2274 = vmax.f32 %v1118, %v2225
  %v2275 = vmax.f32 %v1119, %v2226
  %v2276 = vmax.f32 %v1120, %v2227
  %v2277 = vmax.f32 %v1121, %v2228
  %v2278 = vmax.f32 %v1122, %v2229
  %v2279 = vmax.f32 %v1123, %v2230
  %v2280 = vmax.f32 %v1124, %v2231
  %v2281 = vmax.f32 %v1125, %v2232
  %v2282 = vmax.f32 %v1126, %v2233
  %v2283 = vmax.f32 %v1127, %v2234
  %v2284 = vmax.f32 %v1128, %v2235
  %v2285 = vmax.f32 %v1129, %v2236
  %v2286 = vmax.f32 %v1130, %v2237
  %v2287 = vmax.f32 %v1131, %v2238
  %v2288 = vmax.f32 %v1132, %v2239
  %v2289 = vmax.f32 %v1133, %v2240
  %v2290 = vmax.f32 %v1134, %v2241
  %v2291 = vmax.f32 %v1135, %v2242
  %v2292 = vmax.f32 %v1136, %v2243
  %v2293 = vmax.f32 %v1137, %v2244
  %v2294 = vmax.f32 %v1138, %v2245
  %v2295 = vmax.f32 %v1139, %v2246
  %v2296 = vmax.f32 %v1140, %v2247
  %v2297 = vmax.f32 %v1141, %v2248
  %v2298 = vmax.f32 %v1142, %v2249
  %v2299 = vpack.c.bf16 %v2251, %v2250
  %v2300 = vpack.c.bf16 %v2253, %v2252
  %v2301 = vpack.c.bf16 %v2255, %v2254
  %v2302 = vpack.c.bf16 %v2257, %v2256
  %v2303 = vpack.c.bf16 %v2259, %v2258
  %v2304 = vpack.c.bf16 %v2261, %v2260
  %v2305 = vpack.c.bf16 %v2263, %v2262
  %v2306 = vpack.c.bf16 %v2265, %v2264
  %v2307 = vpack.c.bf16 %v2267, %v2266
  %v2308 = vpack.c.bf16 %v2269, %v2268
  %v2309 = vpack.c.bf16 %v2271, %v2270
  %v2310 = vpack.c.bf16 %v2273, %v2272
  %v2311 = vpack.c.bf16 %v2275, %v2274
  %v2312 = vpack.c.bf16 %v2277, %v2276
  %v2313 = vpack.c.bf16 %v2279, %v2278
  %v2314 = vpack.c.bf16 %v2281, %v2280
  %v2315 = vpack.c.bf16 %v2283, %v2282
  %v2316 = vpack.c.bf16 %v2285, %v2284
  %v2317 = vpack.c.bf16 %v2287, %v2286
  %v2318 = vpack.c.bf16 %v2289, %v2288
  %v2319 = vpack.c.bf16 %v2291, %v2290
  %v2320 = vpack.c.bf16 %v2293, %v2292
  %v2321 = vpack.c.bf16 %v2295, %v2294
  %v2322 = vpack.c.bf16 %v2297, %v2296
  %v2323 = vpack.c.bf16 %v2298, %v2298
  %v2349 = vunpack.c.l.b16 %v2299
  %v2350 = vunpack.c.h.b16 %v2299
  %v2351 = vunpack.c.l.b16 %v2300
  %v2352 = vunpack.c.h.b16 %v2300
  %v2353 = vunpack.c.l.b16 %v2301
  %v2354 = vunpack.c.h.b16 %v2301
  %v2355 = vunpack.c.l.b16 %v2302
  %v2356 = vunpack.c.h.b16 %v2302
  %v2357 = vunpack.c.l.b16 %v2303
  %v2358 = vunpack.c.h.b16 %v2303
  %v2359 = vunpack.c.l.b16 %v2304
  %v2360 = vunpack.c.h.b16 %v2304
  %v2361 = vunpack.c.l.b16 %v2305
  %v2362 = vunpack.c.h.b16 %v2305
  %v2363 = vunpack.c.l.b16 %v2306
  %v2364 = vunpack.c.h.b16 %v2306
  %v2365 = vunpack.c.l.b16 %v2307
  %v2366 = vunpack.c.h.b16 %v2307
  %v2367 = vunpack.c.l.b16 %v2308
  %v2368 = vunpack.c.h.b16 %v2308
  %v2369 = vunpack.c.l.b16 %v2309
  %v2370 = vunpack.c.h.b16 %v2309
  %v2371 = vunpack.c.l.b16 %v2310
  %v2372 = vunpack.c.h.b16 %v2310
  %v2373 = vunpack.c.l.b16 %v2311
  %v2374 = vunpack.c.h.b16 %v2311
  %v2375 = vunpack.c.l.b16 %v2312
  %v2376 = vunpack.c.h.b16 %v2312
  %v2377 = vunpack.c.l.b16 %v2313
  %v2378 = vunpack.c.h.b16 %v2313
  %v2379 = vunpack.c.l.b16 %v2314
  %v2380 = vunpack.c.h.b16 %v2314
  %v2381 = vunpack.c.l.b16 %v2315
  %v2382 = vunpack.c.h.b16 %v2315
  %v2383 = vunpack.c.l.b16 %v2316
  %v2384 = vunpack.c.h.b16 %v2316
  %v2385 = vunpack.c.l.b16 %v2317
  %v2386 = vunpack.c.h.b16 %v2317
  %v2387 = vunpack.c.l.b16 %v2318
  %v2388 = vunpack.c.h.b16 %v2318
  %v2389 = vunpack.c.l.b16 %v2319
  %v2390 = vunpack.c.h.b16 %v2319
  %v2391 = vunpack.c.l.b16 %v2320
  %v2392 = vunpack.c.h.b16 %v2320
  %v2393 = vunpack.c.l.b16 %v2321
  %v2394 = vunpack.c.h.b16 %v2321
  %v2395 = vunpack.c.l.b16 %v2322
  %v2396 = vunpack.c.h.b16 %v2322
  %v2397 = vunpack.c.l.b16 %v2323
  %v2398 = vpack.c.b16 %v2349, %v2349
  %v2399 = vpack.c.b16 %v2350, %v2350
  %v2400 = vpack.c.b16 %v2351, %v2351
  %v2401 = vpack.c.b16 %v2352, %v2352
  %v2402 = vpack.c.b16 %v2353, %v2353
  %v2403 = vpack.c.b16 %v2354, %v2354
  %v2404 = vpack.c.b16 %v2355, %v2355
  %v2405 = vpack.c.b16 %v2356, %v2356
  %v2406 = vpack.c.b16 %v2357, %v2357
  %v2407 = vpack.c.b16 %v2358, %v2358
  %v2408 = vpack.c.b16 %v2359, %v2359
  %v2409 = vpack.c.b16 %v2360, %v2360
  %v2410 = vpack.c.b16 %v2361, %v2361
  %v2411 = vpack.c.b16 %v2362, %v2362
  %v2412 = vpack.c.b16 %v2363, %v2363
  %v2413 = vpack.c.b16 %v2364, %v2364
  %v2414 = vpack.c.b16 %v2365, %v2365
  %v2415 = vpack.c.b16 %v2366, %v2366
  %v2416 = vpack.c.b16 %v2367, %v2367
  %v2417 = vpack.c.b16 %v2368, %v2368
  %v2418 = vpack.c.b16 %v2369, %v2369
  %v2419 = vpack.c.b16 %v2370, %v2370
  %v2420 = vpack.c.b16 %v2371, %v2371
  %v2421 = vpack.c.b16 %v2372, %v2372
  %v2422 = vpack.c.b16 %v2373, %v2373
  %v2423 = vpack.c.b16 %v2374, %v2374
  %v2424 = vpack.c.b16 %v2375, %v2375
  %v2425 = vpack.c.b16 %v2376, %v2376
  %v2426 = vpack.c.b16 %v2377, %v2377
  %v2427 = vpack.c.b16 %v2378, %v2378
  %v2428 = vpack.c.b16 %v2379, %v2379
  %v2429 = vpack.c.b16 %v2380, %v2380
  %v2430 = vpack.c.b16 %v2381, %v2381
  %v2431 = vpack.c.b16 %v2382, %v2382
  %v2432 = vpack.c.b16 %v2383, %v2383
  %v2433 = vpack.c.b16 %v2384, %v2384
  %v2434 = vpack.c.b16 %v2385, %v2385
  %v2435 = vpack.c.b16 %v2386, %v2386
  %v2436 = vpack.c.b16 %v2387, %v2387
  %v2437 = vpack.c.b16 %v2388, %v2388
  %v2438 = vpack.c.b16 %v2389, %v2389
  %v2439 = vpack.c.b16 %v2390, %v2390
  %v2440 = vpack.c.b16 %v2391, %v2391
  %v2441 = vpack.c.b16 %v2392, %v2392
  %v2442 = vpack.c.b16 %v2393, %v2393
  %v2443 = vpack.c.b16 %v2394, %v2394
  %v2444 = vpack.c.b16 %v2395, %v2395
  %v2445 = vpack.c.b16 %v2396, %v2396
  %v2446 = vpack.c.b16 %v2397, %v2397
  %vm2496 = vcmask 257024
  %2497 = vst.msk [vmem:[%s3] sm:$0xf] %vm2496, %v2398
  %2498 = vst.msk [vmem:[%s3 + $0x4] sm:$0xf] %vm2496, %v2399
  %2499 = vst.msk [vmem:[%s3 + $0x8] sm:$0xf] %vm2496, %v2400
  %2500 = vst.msk [vmem:[%s3 + $0xc] sm:$0xf] %vm2496, %v2401
  %2501 = vst.msk [vmem:[%s3 + $0x10] sm:$0xf] %vm2496, %v2402
  %2502 = vst.msk [vmem:[%s3 + $0x14] sm:$0xf] %vm2496, %v2403
  %2503 = vst.msk [vmem:[%s3 + $0x18] sm:$0xf] %vm2496, %v2404
  %2504 = vst.msk [vmem:[%s3 + $0x1c] sm:$0xf] %vm2496, %v2405
  %2505 = vst.msk [vmem:[%s3 + $0x20] sm:$0xf] %vm2496, %v2406
  %2506 = vst.msk [vmem:[%s3 + $0x24] sm:$0xf] %vm2496, %v2407
  %2507 = vst.msk [vmem:[%s3 + $0x28] sm:$0xf] %vm2496, %v2408
  %2508 = vst.msk [vmem:[%s3 + $0x2c] sm:$0xf] %vm2496, %v2409
  %2509 = vst.msk [vmem:[%s3 + $0x30] sm:$0xf] %vm2496, %v2410
  %2510 = vst.msk [vmem:[%s3 + $0x34] sm:$0xf] %vm2496, %v2411
  %2511 = vst.msk [vmem:[%s3 + $0x38] sm:$0xf] %vm2496, %v2412
  %2512 = vst.msk [vmem:[%s3 + $0x3c] sm:$0xf] %vm2496, %v2413
  %2513 = vst.msk [vmem:[%s3 + $0x40] sm:$0xf] %vm2496, %v2414
  %2514 = vst.msk [vmem:[%s3 + $0x44] sm:$0xf] %vm2496, %v2415
  %2515 = vst.msk [vmem:[%s3 + $0x48] sm:$0xf] %vm2496, %v2416
  %2516 = vst.msk [vmem:[%s3 + $0x4c] sm:$0xf] %vm2496, %v2417
  %2517 = vst.msk [vmem:[%s3 + $0x50] sm:$0xf] %vm2496, %v2418
  %2518 = vst.msk [vmem:[%s3 + $0x54] sm:$0xf] %vm2496, %v2419
  %2519 = vst.msk [vmem:[%s3 + $0x58] sm:$0xf] %vm2496, %v2420
  %2520 = vst.msk [vmem:[%s3 + $0x5c] sm:$0xf] %vm2496, %v2421
  %2521 = vst.msk [vmem:[%s3 + $0x60] sm:$0xf] %vm2496, %v2422
  %2522 = vst.msk [vmem:[%s3 + $0x64] sm:$0xf] %vm2496, %v2423
  %2523 = vst.msk [vmem:[%s3 + $0x68] sm:$0xf] %vm2496, %v2424
  %2524 = vst.msk [vmem:[%s3 + $0x6c] sm:$0xf] %vm2496, %v2425
  %2525 = vst.msk [vmem:[%s3 + $0x70] sm:$0xf] %vm2496, %v2426
  %2526 = vst.msk [vmem:[%s3 + $0x74] sm:$0xf] %vm2496, %v2427
  %2527 = vst.msk [vmem:[%s3 + $0x78] sm:$0xf] %vm2496, %v2428
  %2528 = vst.msk [vmem:[%s3 + $0x7c] sm:$0xf] %vm2496, %v2429
  %2529 = vst.msk [vmem:[%s3 + $0x80] sm:$0xf] %vm2496, %v2430
  %2530 = vst.msk [vmem:[%s3 + $0x84] sm:$0xf] %vm2496, %v2431
  %2531 = vst.msk [vmem:[%s3 + $0x88] sm:$0xf] %vm2496, %v2432
  %2532 = vst.msk [vmem:[%s3 + $0x8c] sm:$0xf] %vm2496, %v2433
  %2533 = vst.msk [vmem:[%s3 + $0x90] sm:$0xf] %vm2496, %v2434
  %2534 = vst.msk [vmem:[%s3 + $0x94] sm:$0xf] %vm2496, %v2435
  %2535 = vst.msk [vmem:[%s3 + $0x98] sm:$0xf] %vm2496, %v2436
  %2536 = vst.msk [vmem:[%s3 + $0x9c] sm:$0xf] %vm2496, %v2437
  %2537 = vst.msk [vmem:[%s3 + $0xa0] sm:$0xf] %vm2496, %v2438
  %2538 = vst.msk [vmem:[%s3 + $0xa4] sm:$0xf] %vm2496, %v2439
  %2539 = vst.msk [vmem:[%s3 + $0xa8] sm:$0xf] %vm2496, %v2440
  %2540 = vst.msk [vmem:[%s3 + $0xac] sm:$0xf] %vm2496, %v2441
  %2541 = vst.msk [vmem:[%s3 + $0xb0] sm:$0xf] %vm2496, %v2442
  %2542 = vst.msk [vmem:[%s3 + $0xb4] sm:$0xf] %vm2496, %v2443
  %2543 = vst.msk [vmem:[%s3 + $0xb8] sm:$0xf] %vm2496, %v2444
  %2544 = vst.msk [vmem:[%s3 + $0xbc] sm:$0xf] %vm2496, %v2445
  %2545 = vst.msk [vmem:[%s3 + $0xc0] sm:$0xf] %vm2496, %v2446
  // Predicated region
  $region14: #{cnn_forward.3} parent=0 // pred_check
    _
  $region15: #{cnn_forward.3} parent=0 // pred_check_branch
    %2547 = sbr.rel (0) target = $region17
  $region16: #{cnn_forward.3} parent=0 // pred_region
    _
  $region17: #{cnn_forward.3} parent=0 // pred_fallthru
    _
  // Predicated region
  $region18: #{cnn_forward.3} parent=0 // pred_check
    _
  $region19: #{cnn_forward.3} parent=0 // pred_check_branch
    %2549 = sbr.rel (0) target = $region21
  $region20: #{cnn_forward.3} parent=0 // pred_region
    _
  $region21: #{cnn_forward.3} parent=0 // pred_fallthru
    _

// kernel: cnn_forward.4
$region0: #{cnn_forward.4}
  #allocation0 [shape = 'u32[]', space=smem, size = 0x4, offset = 0x4, fixed_abs, tag = 'smem constant byte address 0x4 - core index']
  #allocation1 [shape = 'u32[144,128]{1,0:T(1,128)}', space=vmem, size = 0x12000, scoped, tag = 'internal scratch']
  %s0 = inlined_call_operand.vmem [shape: bf16[4,98,288], index: 0, kind: input, shape index: {}]
  %s1 = inlined_call_operand.vmem [shape: bf16[288,64], index: 1, kind: input, shape index: {}]
  %s2 = inlined_call_operand.vmem [shape: f32[1,64], index: 2, kind: input, shape index: {}]
  %s3 = inlined_call_operand.vmem [shape: bf16[98,64], index: 3, kind: output, shape index: {}]
  %s4 = sld [smem:[#allocation0]]
  $region22: #{cnn_forward.4} parent=0
    _
  %s6 = ssub.s32 1, %s4
  %s7 = scalar_select 0, %s6, %s4
  // Predicated region
  $region2: #{cnn_forward.4} parent=0 // pred_check
    _
  $region3: #{cnn_forward.4} parent=0 // pred_check_branch
    %9 = sbr.rel (0) target = $region5
  $region4: #{cnn_forward.4} parent=0 // pred_region
    _
  $region5: #{cnn_forward.4} parent=0 // pred_fallthru
    _
  // Predicated region
  $region6: #{cnn_forward.4} parent=0 // pred_check
    _
  $region7: #{cnn_forward.4} parent=0 // pred_check_branch
    %11 = sbr.rel (0) target = $region9
  $region8: #{cnn_forward.4} parent=0 // pred_region
    _
  $region9: #{cnn_forward.4} parent=0 // pred_fallthru
    _
  // Predicated region
  $region10: #{cnn_forward.4} parent=0 // pred_check
    _
  $region11: #{cnn_forward.4} parent=0 // pred_check_branch
    %13 = sbr.rel (0) target = $region13
  $region12: #{cnn_forward.4} parent=0 // pred_region
    _
  $region13: #{cnn_forward.4} parent=0 // pred_fallthru
    _
  %v15 = vld [vmem:[%s1] sm:$0xf]
  %v16 = vld [vmem:[%s1 + $0x4] sm:$0xf]
  %v17 = vld [vmem:[%s1 + $0x8] sm:$0xf]
  %v18 = vld [vmem:[%s1 + $0xc] sm:$0xf]
  %v19 = vld [vmem:[%s1 + $0x10] sm:$0xf]
  %v20 = vld [vmem:[%s1 + $0x14] sm:$0xf]
  %v21 = vld [vmem:[%s1 + $0x18] sm:$0xf]
  %v22 = vld [vmem:[%s1 + $0x1c] sm:$0xf]
  %v23 = vld [vmem:[%s1 + $0x20] sm:$0xf]
  %v24 = vld [vmem:[%s1 + $0x24] sm:$0xf]
  %v25 = vld [vmem:[%s1 + $0x28] sm:$0xf]
  %v26 = vld [vmem:[%s1 + $0x2c] sm:$0xf]
  %v27 = vld [vmem:[%s1 + $0x30] sm:$0xf]
  %v28 = vld [vmem:[%s1 + $0x34] sm:$0xf]
  %v29 = vld [vmem:[%s1 + $0x38] sm:$0xf]
  %v30 = vld [vmem:[%s1 + $0x3c] sm:$0xf]
  %v31 = vld [vmem:[%s1 + $0x40] sm:$0xf]
  %v32 = vld [vmem:[%s1 + $0x44] sm:$0xf]
  %v33 = vld [vmem:[%s1 + $0x48] sm:$0xf]
  %v34 = vld [vmem:[%s1 + $0x4c] sm:$0xf]
  %v35 = vld [vmem:[%s1 + $0x50] sm:$0xf]
  %v36 = vld [vmem:[%s1 + $0x54] sm:$0xf]
  %v37 = vld [vmem:[%s1 + $0x58] sm:$0xf]
  %v38 = vld [vmem:[%s1 + $0x5c] sm:$0xf]
  %v39 = vld [vmem:[%s1 + $0x60] sm:$0xf]
  %v40 = vld [vmem:[%s1 + $0x64] sm:$0xf]
  %v41 = vld [vmem:[%s1 + $0x68] sm:$0xf]
  %v42 = vld [vmem:[%s1 + $0x6c] sm:$0xf]
  %v43 = vld [vmem:[%s1 + $0x70] sm:$0xf]
  %v44 = vld [vmem:[%s1 + $0x74] sm:$0xf]
  %v45 = vld [vmem:[%s1 + $0x78] sm:$0xf]
  %v46 = vld [vmem:[%s1 + $0x7c] sm:$0xf]
  %v47 = vld [vmem:[%s1 + $0x80] sm:$0xf]
  %v48 = vld [vmem:[%s1 + $0x84] sm:$0xf]
  %v49 = vld [vmem:[%s1 + $0x88] sm:$0xf]
  %v50 = vld [vmem:[%s1 + $0x8c] sm:$0xf]
  %v51 = vld [vmem:[%s2] sm:$0x1]
  %v52 = vld [vmem:[%s0] sm:$0xff]
  %v53 = vld [vmem:[%s0 + $0x8] sm:$0xf]
  %v54 = vld [vmem:[%s0 + $0xc] sm:$0xff]
  %v55 = vld [vmem:[%s0 + $0x14] sm:$0xf]
  %v56 = vld [vmem:[%s0 + $0x18] sm:$0xff]
  %v57 = vld [vmem:[%s0 + $0x20] sm:$0xf]
  %v58 = vld [vmem:[%s0 + $0x24] sm:$0xff]
  %v59 = vld [vmem:[%s0 + $0x2c] sm:$0xf]
  %v60 = vld [vmem:[%s0 + $0x30] sm:$0xff]
  %v61 = vld [vmem:[%s0 + $0x38] sm:$0xf]
  %v62 = vld [vmem:[%s0 + $0x3c] sm:$0xff]
  %v63 = vld [vmem:[%s0 + $0x44] sm:$0xf]
  %v64 = vld [vmem:[%s0 + $0x48] sm:$0xff]
  %v65 = vld [vmem:[%s0 + $0x50] sm:$0xf]
  %v66 = vld [vmem:[%s0 + $0x54] sm:$0xff]
  %v67 = vld [vmem:[%s0 + $0x5c] sm:$0xf]
  %v68 = vld [vmem:[%s0 + $0x60] sm:$0xff]
  %v69 = vld [vmem:[%s0 + $0x68] sm:$0xf]
  %v70 = vld [vmem:[%s0 + $0x6c] sm:$0xff]
  %v71 = vld [vmem:[%s0 + $0x74] sm:$0xf]
  %v72 = vld [vmem:[%s0 + $0x78] sm:$0xff]
  %v73 = vld [vmem:[%s0 + $0x80] sm:$0xf]
  %v74 = vld [vmem:[%s0 + $0x84] sm:$0xff]
  %v75 = vld [vmem:[%s0 + $0x8c] sm:$0xf]
  %v76 = vld [vmem:[%s0 + $0x90] sm:$0x11]
  %v77 = vld [vmem:[%s0 + $0x98] sm:$0x1]
  %v79 = vlaneseq
  %v80 = vshrl.u32 %v79, 7
  %v81 = vsub.s32 0, %v80
  %v82 = vrot.slane %v51, %v81
  %v110 = vunpack.c.l.b16 %v52
  %v111 = vunpack.c.h.b16 %v52
  %v112 = vunpack.c.l.b16 %v53
  %v113 = vunpack.c.l.b16 %v54
  %v114 = vunpack.c.h.b16 %v54
  %v115 = vunpack.c.l.b16 %v55
  %v116 = vunpack.c.l.b16 %v56
  %v117 = vunpack.c.h.b16 %v56
  %v118 = vunpack.c.l.b16 %v57
  %v119 = vunpack.c.l.b16 %v58
  %v120 = vunpack.c.h.b16 %v58
  %v121 = vunpack.c.l.b16 %v59
  %v122 = vunpack.c.l.b16 %v60
  %v123 = vunpack.c.h.b16 %v60
  %v124 = vunpack.c.l.b16 %v61
  %v125 = vunpack.c.l.b16 %v62
  %v126 = vunpack.c.h.b16 %v62
  %v127 = vunpack.c.l.b16 %v63
  %v128 = vunpack.c.l.b16 %v64
  %v129 = vunpack.c.h.b16 %v64
  %v130 = vunpack.c.l.b16 %v65
  %v131 = vunpack.c.l.b16 %v66
  %v132 = vunpack.c.h.b16 %v66
  %v133 = vunpack.c.l.b16 %v67
  %v134 = vunpack.c.l.b16 %v68
  %v135 = vunpack.c.h.b16 %v68
  %v136 = vunpack.c.l.b16 %v69
  %v137 = vunpack.c.l.b16 %v70
  %v138 = vunpack.c.h.b16 %v70
  %v139 = vunpack.c.l.b16 %v71
  %v140 = vunpack.c.l.b16 %v72
  %v141 = vunpack.c.h.b16 %v72
  %v142 = vunpack.c.l.b16 %v73
  %v143 = vunpack.c.l.b16 %v74
  %v144 = vunpack.c.h.b16 %v74
  %v145 = vunpack.c.l.b16 %v75
  %v146 = vunpack.c.l.b16 %v76
  %v147 = vunpack.c.h.b16 %v76
  %v148 = vunpack.c.l.b16 %v77
  %v149 = vpack.c.b16 %v113, %v110
  %v150 = vpack.c.b16 %v114, %v111
  %v151 = vpack.c.b16 %v115, %v112
  %v152 = vpack.c.b16 %v119, %v116
  %v153 = vpack.c.b16 %v120, %v117
  %v154 = vpack.c.b16 %v121, %v118
  %v155 = vpack.c.b16 %v125, %v122
  %v156 = vpack.c.b16 %v126, %v123
  %v157 = vpack.c.b16 %v127, %v124
  %v158 = vpack.c.b16 %v131, %v128
  %v159 = vpack.c.b16 %v132, %v129
  %v160 = vpack.c.b16 %v133, %v130
  %v161 = vpack.c.b16 %v137, %v134
  %v162 = vpack.c.b16 %v138, %v135
  %v163 = vpack.c.b16 %v139, %v136
  %v164 = vpack.c.b16 %v143, %v140
  %v165 = vpack.c.b16 %v144, %v141
  %v166 = vpack.c.b16 %v145, %v142
  %v167 = vpack.c.b16 %v146, %v146
  %v168 = vpack.c.b16 %v147, %v147
  %v169 = vpack.c.b16 %v148, %v148
  %v220 = vunpack.c.l.b16 %v15
  %v221 = vunpack.c.l.b16 %v16
  %v222 = vunpack.c.l.b16 %v17
  %v223 = vunpack.c.l.b16 %v18
  %v224 = vunpack.c.l.b16 %v19
  %v225 = vunpack.c.l.b16 %v20
  %v226 = vunpack.c.l.b16 %v21
  %v227 = vunpack.c.l.b16 %v22
  %v228 = vunpack.c.l.b16 %v23
  %v229 = vunpack.c.l.b16 %v24
  %v230 = vunpack.c.l.b16 %v25
  %v231 = vunpack.c.l.b16 %v26
  %v232 = vunpack.c.l.b16 %v27
  %v233 = vunpack.c.l.b16 %v28
  %v234 = vunpack.c.l.b16 %v29
  %v235 = vunpack.c.l.b16 %v30
  %v236 = vunpack.c.l.b16 %v31
  %v237 = vunpack.c.l.b16 %v32
  %v238 = vunpack.c.l.b16 %v33
  %v239 = vunpack.c.l.b16 %v34
  %v240 = vunpack.c.l.b16 %v35
  %v241 = vunpack.c.l.b16 %v36
  %v242 = vunpack.c.l.b16 %v37
  %v243 = vunpack.c.l.b16 %v38
  %v244 = vunpack.c.l.b16 %v39
  %v245 = vunpack.c.l.b16 %v40
  %v246 = vunpack.c.l.b16 %v41
  %v247 = vunpack.c.l.b16 %v42
  %v248 = vunpack.c.l.b16 %v43
  %v249 = vunpack.c.l.b16 %v44
  %v250 = vunpack.c.l.b16 %v45
  %v251 = vunpack.c.l.b16 %v46
  %v252 = vunpack.c.l.b16 %v47
  %v253 = vunpack.c.l.b16 %v48
  %v254 = vunpack.c.l.b16 %v49
  %v255 = vunpack.c.l.b16 %v50
  %v256 = vpack.c.b16 %v221, %v220
  %v257 = vpack.c.b16 %v223, %v222
  %v258 = vpack.c.b16 %v225, %v224
  %v259 = vpack.c.b16 %v227, %v226
  %v260 = vpack.c.b16 %v229, %v228
  %v261 = vpack.c.b16 %v231, %v230
  %v262 = vpack.c.b16 %v233, %v232
  %v263 = vpack.c.b16 %v235, %v234
  %v264 = vpack.c.b16 %v237, %v236
  %v265 = vpack.c.b16 %v239, %v238
  %v266 = vpack.c.b16 %v241, %v240
  %v267 = vpack.c.b16 %v243, %v242
  %v268 = vpack.c.b16 %v245, %v244
  %v269 = vpack.c.b16 %v247, %v246
  %v270 = vpack.c.b16 %v249, %v248
  %v271 = vpack.c.b16 %v251, %v250
  %v272 = vpack.c.b16 %v253, %v252
  %v273 = vpack.c.b16 %v255, %v254
  %vm292 = vcmask 261120
  %v294 = vsel %vm292, %v151, 0
  %v297 = vsel %vm292, %v154, 0
  %v300 = vsel %vm292, %v157, 0
  %v303 = vsel %vm292, %v160, 0
  %v306 = vsel %vm292, %v163, 0
  %v309 = vsel %vm292, %v166, 0
  %v312 = vsel %vm292, %v169, 0
  %314 = vmatprep.subr.bf16.mxu0 0
  %315 = vmatpush1.bf16.msra.mxu0 %v256
  %316 = vmatprep.subr.bf16.mxu0 0
  %317 = vmatpush1.bf16.msra.mxu0 %v257
  %318 = vmatprep.subr.bf16.mxu0 0
  %319 = vmatpush1.bf16.msra.mxu0 %v258
  %320 = vmatprep.subr.bf16.mxu0 0
  %321 = vmatpush1.bf16.msra.mxu0 %v259
  %322 = vmatprep.subr.bf16.mxu0 0
  %323 = vmatpush1.bf16.msra.mxu0 %v260
  %324 = vmatprep.subr.bf16.mxu0 0
  %325 = vmatpush1.bf16.msra.mxu0 %v261
  %326 = vmatprep.subr.bf16.mxu0 0
  %327 = vmatpush1.bf16.msra.mxu0 %v262
  %328 = vmatprep.subr.bf16.mxu0 0
  %329 = vmatpush1.bf16.msra.mxu0 %v263
  %330 = vmatprep.subr.bf16.mxu0 0
  %331 = vmatpush1.bf16.msra.mxu0 %v264
  %332 = vmatprep.subr.bf16.mxu0 0
  %333 = vmatpush1.bf16.msra.mxu0 %v265
  %334 = vmatprep.subr.bf16.mxu0 0
  %335 = vmatpush1.bf16.msra.mxu0 %v266
  %336 = vmatprep.subr.bf16.mxu0 0
  %337 = vmatpush1.bf16.msra.mxu0 %v267
  %338 = vmatprep.subr.bf16.mxu0 0
  %339 = vmatpush1.bf16.msra.mxu0 %v268
  %340 = vmatprep.subr.bf16.mxu0 0
  %341 = vmatpush1.bf16.msra.mxu0 %v269
  %342 = vmatprep.subr.bf16.mxu0 0
  %343 = vmatpush1.bf16.msra.mxu0 %v270
  %344 = vmatprep.subr.bf16.mxu0 0
  %345 = vmatpush1.bf16.msra.mxu0 %v271
  %346 = vmatprep.mubr.bf16.mxu0 %v150
  %347 = vmatmul.mubr.bf16.gmra.mrb[0].mxu0 %v149
  %v348 = vpop.f32.mrb[0].mxu0
  %v349 = vadd.f32 %v82, %v348
  %v350 = vpop.f32.mrb[0].mxu0
  %v351 = vpop.f32.mrb[0].mxu0
  %v352 = vadd.f32 %v82, %v351
  %v353 = vpop.f32.mrb[0].mxu0
  %354 = vmatprep.mubr.bf16.mxu0 %v153
  %355 = vmatmul.mubr.bf16.gmra.mrb[0].mxu0 %v152
  %v356 = vpop.f32.mrb[0].mxu0
  %v357 = vadd.f32 %v82, %v356
  %v358 = vpop.f32.mrb[0].mxu0
  %v359 = vpop.f32.mrb[0].mxu0
  %v360 = vadd.f32 %v82, %v359
  %v361 = vpop.f32.mrb[0].mxu0
  %362 = vmatprep.mubr.bf16.mxu0 %v156
  %363 = vmatmul.mubr.bf16.gmra.mrb[0].mxu0 %v155
  %v364 = vpop.f32.mrb[0].mxu0
  %v365 = vadd.f32 %v82, %v364
  %v366 = vpop.f32.mrb[0].mxu0
  %v367 = vpop.f32.mrb[0].mxu0
  %v368 = vadd.f32 %v82, %v367
  %v369 = vpop.f32.mrb[0].mxu0
  %370 = vmatprep.mubr.bf16.mxu0 %v159
  %371 = vmatmul.mubr.bf16.gmra.mrb[0].mxu0 %v158
  %v372 = vpop.f32.mrb[0].mxu0
  %v373 = vadd.f32 %v82, %v372
  %v374 = vpop.f32.mrb[0].mxu0
  %v375 = vpop.f32.mrb[0].mxu0
  %v376 = vadd.f32 %v82, %v375
  %v377 = vpop.f32.mrb[0].mxu0
  %378 = vmatprep.mubr.bf16.mxu0 %v162
  %379 = vmatmul.mubr.bf16.gmra.mrb[0].mxu0 %v161
  %v380 = vpop.f32.mrb[0].mxu0
  %v381 = vadd.f32 %v82, %v380
  %v382 = vpop.f32.mrb[0].mxu0
  %v383 = vpop.f32.mrb[0].mxu0
  %v384 = vadd.f32 %v82, %v383
  %v385 = vpop.f32.mrb[0].mxu0
  %386 = vmatprep.mubr.bf16.mxu0 %v165
  %387 = vmatmul.mubr.bf16.gmra.mrb[0].mxu0 %v164
  %v388 = vpop.f32.mrb[0].mxu0
  %v389 = vadd.f32 %v82, %v388
  %v390 = vpop.f32.mrb[0].mxu0
  %v391 = vpop.f32.mrb[0].mxu0
  %v392 = vadd.f32 %v82, %v391
  %v393 = vpop.f32.mrb[0].mxu0
  %394 = vmatprep.mubr.bf16.mxu0 %v168
  %395 = vmatmul.mubr.bf16.gmra.mrb[0].mxu0 %v167
  %v396 = vpop.f32.mrb[0].mxu0
  %v397 = vadd.f32 %v82, %v396
  %v398 = vpop.f32.mrb[0].mxu0
  %v399 = vpop.f32.mrb[0].mxu0
  %v400 = vpop.f32.mrb[0].mxu0
  %401 = vdwg.mxu0
  %402 = vmatprep.subr.bf16.mxu0 0
  %403 = vmatpush1.bf16.msra.mxu0 %v272
  %404 = vmatprep.subr.bf16.mxu0 0
  %405 = vmatpush1.bf16.msra.mxu0 %v273
  %406 = vmatprep.subr.bf16.mxu0 0
  %407 = vmatpush1.bf16.msra.mxu0 0
  %408 = vmatprep.subr.bf16.mxu0 0
  %409 = vmatpush1.bf16.msra.mxu0 0
  %410 = vmatprep.subr.bf16.mxu0 0
  %411 = vmatpush1.bf16.msra.mxu0 0
  %412 = vmatprep.subr.bf16.mxu0 0
  %413 = vmatpush1.bf16.msra.mxu0 0
  %414 = vmatprep.subr.bf16.mxu0 0
  %415 = vmatpush1.bf16.msra.mxu0 0
  %416 = vmatprep.subr.bf16.mxu0 0
  %417 = vmatpush1.bf16.msra.mxu0 0
  %418 = vmatprep.subr.bf16.mxu0 0
  %419 = vmatpush1.bf16.msra.mxu0 0
  %420 = vmatprep.subr.bf16.mxu0 0
  %421 = vmatpush1.bf16.msra.mxu0 0
  %422 = vmatprep.subr.bf16.mxu0 0
  %423 = vmatpush1.bf16.msra.mxu0 0
  %424 = vmatprep.subr.bf16.mxu0 0
  %425 = vmatpush1.bf16.msra.mxu0 0
  %426 = vmatprep.subr.bf16.mxu0 0
  %427 = vmatpush1.bf16.msra.mxu0 0
  %428 = vmatprep.subr.bf16.mxu0 0
  %429 = vmatpush1.bf16.msra.mxu0 0
  %430 = vmatprep.subr.bf16.mxu0 0
  %431 = vmatpush1.bf16.msra.mxu0 0
  %432 = vmatprep.subr.bf16.mxu0 0
  %433 = vmatpush1.bf16.msra.mxu0 0
  %434 = vmatprep.mubr.bf16.mxu0 0
  %435 = vmatmul.mubr.bf16.gmra.mrb[0].mxu0 %v294
  %v436 = vpop.f32.mrb[0].mxu0
  %v437 = vadd.f32 %v349, %v436
  %v438 = vpop.f32.mrb[0].mxu0
  %v439 = vpop.f32.mrb[0].mxu0
  %v440 = vadd.f32 %v352, %v439
  %v441 = vpop.f32.mrb[0].mxu0
  %442 = vmatprep.mubr.bf16.mxu0 0
  %443 = vmatmul.mubr.bf16.gmra.mrb[0].mxu0 %v297
  %v444 = vpop.f32.mrb[0].mxu0
  %v445 = vadd.f32 %v357, %v444
  %v446 = vpop.f32.mrb[0].mxu0
  %v447 = vpop.f32.mrb[0].mxu0
  %v448 = vadd.f32 %v360, %v447
  %v449 = vpop.f32.mrb[0].mxu0
  %450 = vmatprep.mubr.bf16.mxu0 0
  %451 = vmatmul.mubr.bf16.gmra.mrb[0].mxu0 %v300
  %v452 = vpop.f32.mrb[0].mxu0
  %v453 = vadd.f32 %v365, %v452
  %v454 = vpop.f32.mrb[0].mxu0
  %v455 = vpop.f32.mrb[0].mxu0
  %v456 = vadd.f32 %v368, %v455
  %v457 = vpop.f32.mrb[0].mxu0
  %458 = vmatprep.mubr.bf16.mxu0 0
  %459 = vmatmul.mubr.bf16.gmra.mrb[0].mxu0 %v303
  %v460 = vpop.f32.mrb[0].mxu0
  %v461 = vadd.f32 %v373, %v460
  %v462 = vpop.f32.mrb[0].mxu0
  %v463 = vpop.f32.mrb[0].mxu0
  %v464 = vadd.f32 %v376, %v463
  %v465 = vpop.f32.mrb[0].mxu0
  %466 = vmatprep.mubr.bf16.mxu0 0
  %467 = vmatmul.mubr.bf16.gmra.mrb[0].mxu0 %v306
  %v468 = vpop.f32.mrb[0].mxu0
  %v469 = vadd.f32 %v381, %v468
  %v470 = vpop.f32.mrb[0].mxu0
  %v471 = vpop.f32.mrb[0].mxu0
  %v472 = vadd.f32 %v384, %v471
  %v473 = vpop.f32.mrb[0].mxu0
  %474 = vmatprep.mubr.bf16.mxu0 0
  %475 = vmatmul.mubr.bf16.gmra.mrb[0].mxu0 %v309
  %v476 = vpop.f32.mrb[0].mxu0
  %v477 = vadd.f32 %v389, %v476
  %v478 = vpop.f32.mrb[0].mxu0
  %v479 = vpop.f32.mrb[0].mxu0
  %v480 = vadd.f32 %v392, %v479
  %v481 = vpop.f32.mrb[0].mxu0
  %482 = vmatprep.mubr.bf16.mxu0 0
  %483 = vmatmul.mubr.bf16.gmra.mrb[0].mxu0 %v312
  %v484 = vpop.f32.mrb[0].mxu0
  %v485 = vadd.f32 %v397, %v484
  %v486 = vpop.f32.mrb[0].mxu0
  %v487 = vpop.f32.mrb[0].mxu0
  %v488 = vpop.f32.mrb[0].mxu0
  %489 = vdwg.mxu0
  %v490 = vmax.f32 %v437, 0.0
  %v491 = vmax.f32 %v440, 0.0
  %v492 = vmax.f32 %v445, 0.0
  %v493 = vmax.f32 %v448, 0.0
  %v494 = vmax.f32 %v453, 0.0
  %v495 = vmax.f32 %v456, 0.0
  %v496 = vmax.f32 %v461, 0.0
  %v497 = vmax.f32 %v464, 0.0
  %v498 = vmax.f32 %v469, 0.0
  %v499 = vmax.f32 %v472, 0.0
  %v500 = vmax.f32 %v477, 0.0
  %v501 = vmax.f32 %v480, 0.0
  %v502 = vmax.f32 %v485, 0.0
  %s503 = scalar_lea.vmem %s0, 156
  %v504 = vld [vmem:[%s503] sm:$0xff]
  %v505 = vld [vmem:[%s503 + $0x8] sm:$0xf]
  %v506 = vld [vmem:[%s503 + $0xc] sm:$0xff]
  %v507 = vld [vmem:[%s503 + $0x14] sm:$0xf]
  %v508 = vld [vmem:[%s503 + $0x18] sm:$0xff]
  %v509 = vld [vmem:[%s503 + $0x20] sm:$0xf]
  %v510 = vld [vmem:[%s503 + $0x24] sm:$0xff]
  %v511 = vld [vmem:[%s503 + $0x2c] sm:$0xf]
  %v512 = vld [vmem:[%s503 + $0x30] sm:$0xff]
  %v513 = vld [vmem:[%s503 + $0x38] sm:$0xf]
  %v514 = vld [vmem:[%s503 + $0x3c] sm:$0xff]
  %v515 = vld [vmem:[%s503 + $0x44] sm:$0xf]
  %v516 = vld [vmem:[%s503 + $0x48] sm:$0xff]
  %v517 = vld [vmem:[%s503 + $0x50] sm:$0xf]
  %v518 = vld [vmem:[%s503 + $0x54] sm:$0xff]
  %v519 = vld [vmem:[%s503 + $0x5c] sm:$0xf]
  %v520 = vld [vmem:[%s503 + $0x60] sm:$0xff]
  %v521 = vld [vmem:[%s503 + $0x68] sm:$0xf]
  %v522 = vld [vmem:[%s503 + $0x6c] sm:$0xff]
  %v523 = vld [vmem:[%s503 + $0x74] sm:$0xf]
  %v524 = vld [vmem:[%s503 + $0x78] sm:$0xff]
  %v525 = vld [vmem:[%s503 + $0x80] sm:$0xf]
  %v526 = vld [vmem:[%s503 + $0x84] sm:$0xff]
  %v527 = vld [vmem:[%s503 + $0x8c] sm:$0xf]
  %v528 = vld [vmem:[%s503 + $0x90] sm:$0x11]
  %v529 = vld [vmem:[%s503 + $0x98] sm:$0x1]
  %v556 = vunpack.c.l.b16 %v504
  %v557 = vunpack.c.h.b16 %v504
  %v558 = vunpack.c.l.b16 %v505
  %v559 = vunpack.c.l.b16 %v506
  %v560 = vunpack.c.h.b16 %v506
  %v561 = vunpack.c.l.b16 %v507
  %v562 = vunpack.c.l.b16 %v508
  %v563 = vunpack.c.h.b16 %v508
  %v564 = vunpack.c.l.b16 %v509
  %v565 = vunpack.c.l.b16 %v510
  %v566 = vunpack.c.h.b16 %v510
  %v567 = vunpack.c.l.b16 %v511
  %v568 = vunpack.c.l.b16 %v512
  %v569 = vunpack.c.h.b16 %v512
  %v570 = vunpack.c.l.b16 %v513
  %v571 = vunpack.c.l.b16 %v514
  %v572 = vunpack.c.h.b16 %v514
  %v573 = vunpack.c.l.b16 %v515
  %v574 = vunpack.c.l.b16 %v516
  %v575 = vunpack.c.h.b16 %v516
  %v576 = vunpack.c.l.b16 %v517
  %v577 = vunpack.c.l.b16 %v518
  %v578 = vunpack.c.h.b16 %v518
  %v579 = vunpack.c.l.b16 %v519
  %v580 = vunpack.c.l.b16 %v520
  %v581 = vunpack.c.h.b16 %v520
  %v582 = vunpack.c.l.b16 %v521
  %v583 = vunpack.c.l.b16 %v522
  %v584 = vunpack.c.h.b16 %v522
  %v585 = vunpack.c.l.b16 %v523
  %v586 = vunpack.c.l.b16 %v524
  %v587 = vunpack.c.h.b16 %v524
  %v588 = vunpack.c.l.b16 %v525
  %v589 = vunpack.c.l.b16 %v526
  %v590 = vunpack.c.h.b16 %v526
  %v591 = vunpack.c.l.b16 %v527
  %v592 = vunpack.c.l.b16 %v528
  %v593 = vunpack.c.h.b16 %v528
  %v594 = vunpack.c.l.b16 %v529
  %v595 = vpack.c.b16 %v559, %v556
  %v596 = vpack.c.b16 %v560, %v557
  %v597 = vpack.c.b16 %v561, %v558
  %v598 = vpack.c.b16 %v565, %v562
  %v599 = vpack.c.b16 %v566, %v563
  %v600 = vpack.c.b16 %v567, %v564
  %v601 = vpack.c.b16 %v571, %v568
  %v602 = vpack.c.b16 %v572, %v569
  %v603 = vpack.c.b16 %v573, %v570
  %v604 = vpack.c.b16 %v577, %v574
  %v605 = vpack.c.b16 %v578, %v575
  %v606 = vpack.c.b16 %v579, %v576
  %v607 = vpack.c.b16 %v583, %v580
  %v608 = vpack.c.b16 %v584, %v581
  %v609 = vpack.c.b16 %v585, %v582
  %v610 = vpack.c.b16 %v589, %v586
  %v611 = vpack.c.b16 %v590, %v587
  %v612 = vpack.c.b16 %v591, %v588
  %v613 = vpack.c.b16 %v592, %v592
  %v614 = vpack.c.b16 %v593, %v593
  %v615 = vpack.c.b16 %v594, %v594
  %v631 = vsel %vm292, %v597, 0
  %v634 = vsel %vm292, %v600, 0
  %v637 = vsel %vm292, %v603, 0
  %v640 = vsel %vm292, %v606, 0
  %v643 = vsel %vm292, %v609, 0
  %v646 = vsel %vm292, %v612, 0
  %v649 = vsel %vm292, %v615, 0
  %651 = vmatprep.subr.bf16.mxu0 0
  %652 = vmatpush1.bf16.msra.mxu0 %v256
  %653 = vmatprep.subr.bf16.mxu0 0
  %654 = vmatpush1.bf16.msra.mxu0 %v257
  %655 = vmatprep.subr.bf16.mxu0 0
  %656 = vmatpush1.bf16.msra.mxu0 %v258
  %657 = vmatprep.subr.bf16.mxu0 0
  %658 = vmatpush1.bf16.msra.mxu0 %v259
  %659 = vmatprep.subr.bf16.mxu0 0
  %660 = vmatpush1.bf16.msra.mxu0 %v260
  %661 = vmatprep.subr.bf16.mxu0 0
  %662 = vmatpush1.bf16.msra.mxu0 %v261
  %663 = vmatprep.subr.bf16.mxu0 0
  %664 = vmatpush1.bf16.msra.mxu0 %v262
  %665 = vmatprep.subr.bf16.mxu0 0
  %666 = vmatpush1.bf16.msra.mxu0 %v263
  %667 = vmatprep.subr.bf16.mxu0 0
  %668 = vmatpush1.bf16.msra.mxu0 %v264
  %669 = vmatprep.subr.bf16.mxu0 0
  %670 = vmatpush1.bf16.msra.mxu0 %v265
  %671 = vmatprep.subr.bf16.mxu0 0
  %672 = vmatpush1.bf16.msra.mxu0 %v266
  %673 = vmatprep.subr.bf16.mxu0 0
  %674 = vmatpush1.bf16.msra.mxu0 %v267
  %675 = vmatprep.subr.bf16.mxu0 0
  %676 = vmatpush1.bf16.msra.mxu0 %v268
  %677 = vmatprep.subr.bf16.mxu0 0
  %678 = vmatpush1.bf16.msra.mxu0 %v269
  %679 = vmatprep.subr.bf16.mxu0 0
  %680 = vmatpush1.bf16.msra.mxu0 %v270
  %681 = vmatprep.subr.bf16.mxu0 0
  %682 = vmatpush1.bf16.msra.mxu0 %v271
  %683 = vmatprep.mubr.bf16.mxu0 %v596
  %684 = vmatmul.mubr.bf16.gmra.mrb[0].mxu0 %v595
  %v685 = vpop.f32.mrb[0].mxu0
  %v686 = vadd.f32 %v82, %v685
  %v687 = vpop.f32.mrb[0].mxu0
  %v688 = vpop.f32.mrb[0].mxu0
  %v689 = vadd.f32 %v82, %v688
  %v690 = vpop.f32.mrb[0].mxu0
  %691 = vmatprep.mubr.bf16.mxu0 %v599
  %692 = vmatmul.mubr.bf16.gmra.mrb[0].mxu0 %v598
  %v693 = vpop.f32.mrb[0].mxu0
  %v694 = vadd.f32 %v82, %v693
  %v695 = vpop.f32.mrb[0].mxu0
  %v696 = vpop.f32.mrb[0].mxu0
  %v697 = vadd.f32 %v82, %v696
  %v698 = vpop.f32.mrb[0].mxu0
  %699 = vmatprep.mubr.bf16.mxu0 %v602
  %700 = vmatmul.mubr.bf16.gmra.mrb[0].mxu0 %v601
  %v701 = vpop.f32.mrb[0].mxu0
  %v702 = vadd.f32 %v82, %v701
  %v703 = vpop.f32.mrb[0].mxu0
  %v704 = vpop.f32.mrb[0].mxu0
  %v705 = vadd.f32 %v82, %v704
  %v706 = vpop.f32.mrb[0].mxu0
  %707 = vmatprep.mubr.bf16.mxu0 %v605
  %708 = vmatmul.mubr.bf16.gmra.mrb[0].mxu0 %v604
  %v709 = vpop.f32.mrb[0].mxu0
  %v710 = vadd.f32 %v82, %v709
  %v711 = vpop.f32.mrb[0].mxu0
  %v712 = vpop.f32.mrb[0].mxu0
  %v713 = vadd.f32 %v82, %v712
  %v714 = vpop.f32.mrb[0].mxu0
  %715 = vmatprep.mubr.bf16.mxu0 %v608
  %716 = vmatmul.mubr.bf16.gmra.mrb[0].mxu0 %v607
  %v717 = vpop.f32.mrb[0].mxu0
  %v718 = vadd.f32 %v82, %v717
  %v719 = vpop.f32.mrb[0].mxu0
  %v720 = vpop.f32.mrb[0].mxu0
  %v721 = vadd.f32 %v82, %v720
  %v722 = vpop.f32.mrb[0].mxu0
  %723 = vmatprep.mubr.bf16.mxu0 %v611
  %724 = vmatmul.mubr.bf16.gmra.mrb[0].mxu0 %v610
  %v725 = vpop.f32.mrb[0].mxu0
  %v726 = vadd.f32 %v82, %v725
  %v727 = vpop.f32.mrb[0].mxu0
  %v728 = vpop.f32.mrb[0].mxu0
  %v729 = vadd.f32 %v82, %v728
  %v730 = vpop.f32.mrb[0].mxu0
  %731 = vmatprep.mubr.bf16.mxu0 %v614
  %732 = vmatmul.mubr.bf16.gmra.mrb[0].mxu0 %v613
  %v733 = vpop.f32.mrb[0].mxu0
  %v734 = vadd.f32 %v82, %v733
  %v735 = vpop.f32.mrb[0].mxu0
  %v736 = vpop.f32.mrb[0].mxu0
  %v737 = vpop.f32.mrb[0].mxu0
  %738 = vdwg.mxu0
  %739 = vmatprep.subr.bf16.mxu0 0
  %740 = vmatpush1.bf16.msra.mxu0 %v272
  %741 = vmatprep.subr.bf16.mxu0 0
  %742 = vmatpush1.bf16.msra.mxu0 %v273
  %743 = vmatprep.subr.bf16.mxu0 0
  %744 = vmatpush1.bf16.msra.mxu0 0
  %745 = vmatprep.subr.bf16.mxu0 0
  %746 = vmatpush1.bf16.msra.mxu0 0
  %747 = vmatprep.subr.bf16.mxu0 0
  %748 = vmatpush1.bf16.msra.mxu0 0
  %749 = vmatprep.subr.bf16.mxu0 0
  %750 = vmatpush1.bf16.msra.mxu0 0
  %751 = vmatprep.subr.bf16.mxu0 0
  %752 = vmatpush1.bf16.msra.mxu0 0
  %753 = vmatprep.subr.bf16.mxu0 0
  %754 = vmatpush1.bf16.msra.mxu0 0
  %755 = vmatprep.subr.bf16.mxu0 0
  %756 = vmatpush1.bf16.msra.mxu0 0
  %757 = vmatprep.subr.bf16.mxu0 0
  %758 = vmatpush1.bf16.msra.mxu0 0
  %759 = vmatprep.subr.bf16.mxu0 0
  %760 = vmatpush1.bf16.msra.mxu0 0
  %761 = vmatprep.subr.bf16.mxu0 0
  %762 = vmatpush1.bf16.msra.mxu0 0
  %763 = vmatprep.subr.bf16.mxu0 0
  %764 = vmatpush1.bf16.msra.mxu0 0
  %765 = vmatprep.subr.bf16.mxu0 0
  %766 = vmatpush1.bf16.msra.mxu0 0
  %767 = vmatprep.subr.bf16.mxu0 0
  %768 = vmatpush1.bf16.msra.mxu0 0
  %769 = vmatprep.subr.bf16.mxu0 0
  %770 = vmatpush1.bf16.msra.mxu0 0
  %771 = vmatprep.mubr.bf16.mxu0 0
  %772 = vmatmul.mubr.bf16.gmra.mrb[0].mxu0 %v631
  %v773 = vpop.f32.mrb[0].mxu0
  %v774 = vadd.f32 %v686, %v773
  %v775 = vpop.f32.mrb[0].mxu0
  %v776 = vpop.f32.mrb[0].mxu0
  %v777 = vadd.f32 %v689, %v776
  %v778 = vpop.f32.mrb[0].mxu0
  %779 = vmatprep.mubr.bf16.mxu0 0
  %780 = vmatmul.mubr.bf16.gmra.mrb[0].mxu0 %v634
  %v781 = vpop.f32.mrb[0].mxu0
  %v782 = vadd.f32 %v694, %v781
  %v783 = vpop.f32.mrb[0].mxu0
  %v784 = vpop.f32.mrb[0].mxu0
  %v785 = vadd.f32 %v697, %v784
  %v786 = vpop.f32.mrb[0].mxu0
  %787 = vmatprep.mubr.bf16.mxu0 0
  %788 = vmatmul.mubr.bf16.gmra.mrb[0].mxu0 %v637
  %v789 = vpop.f32.mrb[0].mxu0
  %v790 = vadd.f32 %v702, %v789
  %v791 = vpop.f32.mrb[0].mxu0
  %v792 = vpop.f32.mrb[0].mxu0
  %v793 = vadd.f32 %v705, %v792
  %v794 = vpop.f32.mrb[0].mxu0
  %795 = vmatprep.mubr.bf16.mxu0 0
  %796 = vmatmul.mubr.bf16.gmra.mrb[0].mxu0 %v640
  %v797 = vpop.f32.mrb[0].mxu0
  %v798 = vadd.f32 %v710, %v797
  %v799 = vpop.f32.mrb[0].mxu0
  %v800 = vpop.f32.mrb[0].mxu0
  %v801 = vadd.f32 %v713, %v800
  %v802 = vpop.f32.mrb[0].mxu0
  %803 = vmatprep.mubr.bf16.mxu0 0
  %804 = vmatmul.mubr.bf16.gmra.mrb[0].mxu0 %v643
  %v805 = vpop.f32.mrb[0].mxu0
  %v806 = vadd.f32 %v718, %v805
  %v807 = vpop.f32.mrb[0].mxu0
  %v808 = vpop.f32.mrb[0].mxu0
  %v809 = vadd.f32 %v721, %v808
  %v810 = vpop.f32.mrb[0].mxu0
  %811 = vmatprep.mubr.bf16.mxu0 0
  %812 = vmatmul.mubr.bf16.gmra.mrb[0].mxu0 %v646
  %v813 = vpop.f32.mrb[0].mxu0
  %v814 = vadd.f32 %v726, %v813
  %v815 = vpop.f32.mrb[0].mxu0
  %v816 = vpop.f32.mrb[0].mxu0
  %v817 = vadd.f32 %v729, %v816
  %v818 = vpop.f32.mrb[0].mxu0
  %819 = vmatprep.mubr.bf16.mxu0 0
  %820 = vmatmul.mubr.bf16.gmra.mrb[0].mxu0 %v649
  %v821 = vpop.f32.mrb[0].mxu0
  %v822 = vadd.f32 %v734, %v821
  %v823 = vpop.f32.mrb[0].mxu0
  %v824 = vpop.f32.mrb[0].mxu0
  %v825 = vpop.f32.mrb[0].mxu0
  %826 = vdwg.mxu0
  %v827 = vmax.f32 %v774, 0.0
  %v828 = vmax.f32 %v777, 0.0
  %v829 = vmax.f32 %v782, 0.0
  %v830 = vmax.f32 %v785, 0.0
  %v831 = vmax.f32 %v790, 0.0
  %v832 = vmax.f32 %v793, 0.0
  %v833 = vmax.f32 %v798, 0.0
  %v834 = vmax.f32 %v801, 0.0
  %v835 = vmax.f32 %v806, 0.0
  %v836 = vmax.f32 %v809, 0.0
  %v837 = vmax.f32 %v814, 0.0
  %v838 = vmax.f32 %v817, 0.0
  %v839 = vmax.f32 %v822, 0.0
  %v840 = vmax.f32 %v490, %v827
  %v841 = vmax.f32 %v491, %v828
  %v842 = vmax.f32 %v492, %v829
  %v843 = vmax.f32 %v493, %v830
  %v844 = vmax.f32 %v494, %v831
  %v845 = vmax.f32 %v495, %v832
  %v846 = vmax.f32 %v496, %v833
  %v847 = vmax.f32 %v497, %v834
  %v848 = vmax.f32 %v498, %v835
  %v849 = vmax.f32 %v499, %v836
  %v850 = vmax.f32 %v500, %v837
  %v851 = vmax.f32 %v501, %v838
  %v852 = vmax.f32 %v502, %v839
  %s853 = scalar_lea.vmem %s0, 312
  %v854 = vld [vmem:[%s853] sm:$0xff]
  %v855 = vld [vmem:[%s853 + $0x8] sm:$0xf]
  %v856 = vld [vmem:[%s853 + $0xc] sm:$0xff]
  %v857 = vld [vmem:[%s853 + $0x14] sm:$0xf]
  %v858 = vld [vmem:[%s853 + $0x18] sm:$0xff]
  %v859 = vld [vmem:[%s853 + $0x20] sm:$0xf]
  %v860 = vld [vmem:[%s853 + $0x24] sm:$0xff]
  %v861 = vld [vmem:[%s853 + $0x2c] sm:$0xf]
  %v862 = vld [vmem:[%s853 + $0x30] sm:$0xff]
  %v863 = vld [vmem:[%s853 + $0x38] sm:$0xf]
  %v864 = vld [vmem:[%s853 + $0x3c] sm:$0xff]
  %v865 = vld [vmem:[%s853 + $0x44] sm:$0xf]
  %v866 = vld [vmem:[%s853 + $0x48] sm:$0xff]
  %v867 = vld [vmem:[%s853 + $0x50] sm:$0xf]
  %v868 = vld [vmem:[%s853 + $0x54] sm:$0xff]
  %v869 = vld [vmem:[%s853 + $0x5c] sm:$0xf]
  %v870 = vld [vmem:[%s853 + $0x60] sm:$0xff]
  %v871 = vld [vmem:[%s853 + $0x68] sm:$0xf]
  %v872 = vld [vmem:[%s853 + $0x6c] sm:$0xff]
  %v873 = vld [vmem:[%s853 + $0x74] sm:$0xf]
  %v874 = vld [vmem:[%s853 + $0x78] sm:$0xff]
  %v875 = vld [vmem:[%s853 + $0x80] sm:$0xf]
  %v876 = vld [vmem:[%s853 + $0x84] sm:$0xff]
  %v877 = vld [vmem:[%s853 + $0x8c] sm:$0xf]
  %v878 = vld [vmem:[%s853 + $0x90] sm:$0x11]
  %v879 = vld [vmem:[%s853 + $0x98] sm:$0x1]
  %v906 = vunpack.c.l.b16 %v854
  %v907 = vunpack.c.h.b16 %v854
  %v908 = vunpack.c.l.b16 %v855
  %v909 = vunpack.c.l.b16 %v856
  %v910 = vunpack.c.h.b16 %v856
  %v911 = vunpack.c.l.b16 %v857
  %v912 = vunpack.c.l.b16 %v858
  %v913 = vunpack.c.h.b16 %v858
  %v914 = vunpack.c.l.b16 %v859
  %v915 = vunpack.c.l.b16 %v860
  %v916 = vunpack.c.h.b16 %v860
  %v917 = vunpack.c.l.b16 %v861
  %v918 = vunpack.c.l.b16 %v862
  %v919 = vunpack.c.h.b16 %v862
  %v920 = vunpack.c.l.b16 %v863
  %v921 = vunpack.c.l.b16 %v864
  %v922 = vunpack.c.h.b16 %v864
  %v923 = vunpack.c.l.b16 %v865
  %v924 = vunpack.c.l.b16 %v866
  %v925 = vunpack.c.h.b16 %v866
  %v926 = vunpack.c.l.b16 %v867
  %v927 = vunpack.c.l.b16 %v868
  %v928 = vunpack.c.h.b16 %v868
  %v929 = vunpack.c.l.b16 %v869
  %v930 = vunpack.c.l.b16 %v870
  %v931 = vunpack.c.h.b16 %v870
  %v932 = vunpack.c.l.b16 %v871
  %v933 = vunpack.c.l.b16 %v872
  %v934 = vunpack.c.h.b16 %v872
  %v935 = vunpack.c.l.b16 %v873
  %v936 = vunpack.c.l.b16 %v874
  %v937 = vunpack.c.h.b16 %v874
  %v938 = vunpack.c.l.b16 %v875
  %v939 = vunpack.c.l.b16 %v876
  %v940 = vunpack.c.h.b16 %v876
  %v941 = vunpack.c.l.b16 %v877
  %v942 = vunpack.c.l.b16 %v878
  %v943 = vunpack.c.h.b16 %v878
  %v944 = vunpack.c.l.b16 %v879
  %v945 = vpack.c.b16 %v909, %v906
  %v946 = vpack.c.b16 %v910, %v907
  %v947 = vpack.c.b16 %v911, %v908
  %v948 = vpack.c.b16 %v915, %v912
  %v949 = vpack.c.b16 %v916, %v913
  %v950 = vpack.c.b16 %v917, %v914
  %v951 = vpack.c.b16 %v921, %v918
  %v952 = vpack.c.b16 %v922, %v919
  %v953 = vpack.c.b16 %v923, %v920
  %v954 = vpack.c.b16 %v927, %v924
  %v955 = vpack.c.b16 %v928, %v925
  %v956 = vpack.c.b16 %v929, %v926
  %v957 = vpack.c.b16 %v933, %v930
  %v958 = vpack.c.b16 %v934, %v931
  %v959 = vpack.c.b16 %v935, %v932
  %v960 = vpack.c.b16 %v939, %v936
  %v961 = vpack.c.b16 %v940, %v937
  %v962 = vpack.c.b16 %v941, %v938
  %v963 = vpack.c.b16 %v942, %v942
  %v964 = vpack.c.b16 %v943, %v943
  %v965 = vpack.c.b16 %v944, %v944
  %v981 = vsel %vm292, %v947, 0
  %v984 = vsel %vm292, %v950, 0
  %v987 = vsel %vm292, %v953, 0
  %v990 = vsel %vm292, %v956, 0
  %v993 = vsel %vm292, %v959, 0
  %v996 = vsel %vm292, %v962, 0
  %v999 = vsel %vm292, %v965, 0
  %1001 = vmatprep.subr.bf16.mxu0 0
  %1002 = vmatpush1.bf16.msra.mxu0 %v256
  %1003 = vmatprep.subr.bf16.mxu0 0
  %1004 = vmatpush1.bf16.msra.mxu0 %v257
  %1005 = vmatprep.subr.bf16.mxu0 0
  %1006 = vmatpush1.bf16.msra.mxu0 %v258
  %1007 = vmatprep.subr.bf16.mxu0 0
  %1008 = vmatpush1.bf16.msra.mxu0 %v259
  %1009 = vmatprep.subr.bf16.mxu0 0
  %1010 = vmatpush1.bf16.msra.mxu0 %v260
  %1011 = vmatprep.subr.bf16.mxu0 0
  %1012 = vmatpush1.bf16.msra.mxu0 %v261
  %1013 = vmatprep.subr.bf16.mxu0 0
  %1014 = vmatpush1.bf16.msra.mxu0 %v262
  %1015 = vmatprep.subr.bf16.mxu0 0
  %1016 = vmatpush1.bf16.msra.mxu0 %v263
  %1017 = vmatprep.subr.bf16.mxu0 0
  %1018 = vmatpush1.bf16.msra.mxu0 %v264
  %1019 = vmatprep.subr.bf16.mxu0 0
  %1020 = vmatpush1.bf16.msra.mxu0 %v265
  %1021 = vmatprep.subr.bf16.mxu0 0
  %1022 = vmatpush1.bf16.msra.mxu0 %v266
  %1023 = vmatprep.subr.bf16.mxu0 0
  %1024 = vmatpush1.bf16.msra.mxu0 %v267
  %1025 = vmatprep.subr.bf16.mxu0 0
  %1026 = vmatpush1.bf16.msra.mxu0 %v268
  %1027 = vmatprep.subr.bf16.mxu0 0
  %1028 = vmatpush1.bf16.msra.mxu0 %v269
  %1029 = vmatprep.subr.bf16.mxu0 0
  %1030 = vmatpush1.bf16.msra.mxu0 %v270
  %1031 = vmatprep.subr.bf16.mxu0 0
  %1032 = vmatpush1.bf16.msra.mxu0 %v271
  %1033 = vmatprep.mubr.bf16.mxu0 %v946
  %1034 = vmatmul.mubr.bf16.gmra.mrb[0].mxu0 %v945
  %v1035 = vpop.f32.mrb[0].mxu0
  %v1036 = vadd.f32 %v82, %v1035
  %v1037 = vpop.f32.mrb[0].mxu0
  %v1038 = vpop.f32.mrb[0].mxu0
  %v1039 = vadd.f32 %v82, %v1038
  %v1040 = vpop.f32.mrb[0].mxu0
  %1041 = vmatprep.mubr.bf16.mxu0 %v949
  %1042 = vmatmul.mubr.bf16.gmra.mrb[0].mxu0 %v948
  %v1043 = vpop.f32.mrb[0].mxu0
  %v1044 = vadd.f32 %v82, %v1043
  %v1045 = vpop.f32.mrb[0].mxu0
  %v1046 = vpop.f32.mrb[0].mxu0
  %v1047 = vadd.f32 %v82, %v1046
  %v1048 = vpop.f32.mrb[0].mxu0
  %1049 = vmatprep.mubr.bf16.mxu0 %v952
  %1050 = vmatmul.mubr.bf16.gmra.mrb[0].mxu0 %v951
  %v1051 = vpop.f32.mrb[0].mxu0
  %v1052 = vadd.f32 %v82, %v1051
  %v1053 = vpop.f32.mrb[0].mxu0
  %v1054 = vpop.f32.mrb[0].mxu0
  %v1055 = vadd.f32 %v82, %v1054
  %v1056 = vpop.f32.mrb[0].mxu0
  %1057 = vmatprep.mubr.bf16.mxu0 %v955
  %1058 = vmatmul.mubr.bf16.gmra.mrb[0].mxu0 %v954
  %v1059 = vpop.f32.mrb[0].mxu0
  %v1060 = vadd.f32 %v82, %v1059
  %v1061 = vpop.f32.mrb[0].mxu0
  %v1062 = vpop.f32.mrb[0].mxu0
  %v1063 = vadd.f32 %v82, %v1062
  %v1064 = vpop.f32.mrb[0].mxu0
  %1065 = vmatprep.mubr.bf16.mxu0 %v958
  %1066 = vmatmul.mubr.bf16.gmra.mrb[0].mxu0 %v957
  %v1067 = vpop.f32.mrb[0].mxu0
  %v1068 = vadd.f32 %v82, %v1067
  %v1069 = vpop.f32.mrb[0].mxu0
  %v1070 = vpop.f32.mrb[0].mxu0
  %v1071 = vadd.f32 %v82, %v1070
  %v1072 = vpop.f32.mrb[0].mxu0
  %1073 = vmatprep.mubr.bf16.mxu0 %v961
  %1074 = vmatmul.mubr.bf16.gmra.mrb[0].mxu0 %v960
  %v1075 = vpop.f32.mrb[0].mxu0
  %v1076 = vadd.f32 %v82, %v1075
  %v1077 = vpop.f32.mrb[0].mxu0
  %v1078 = vpop.f32.mrb[0].mxu0
  %v1079 = vadd.f32 %v82, %v1078
  %v1080 = vpop.f32.mrb[0].mxu0
  %1081 = vmatprep.mubr.bf16.mxu0 %v964
  %1082 = vmatmul.mubr.bf16.gmra.mrb[0].mxu0 %v963
  %v1083 = vpop.f32.mrb[0].mxu0
  %v1084 = vadd.f32 %v82, %v1083
  %v1085 = vpop.f32.mrb[0].mxu0
  %v1086 = vpop.f32.mrb[0].mxu0
  %v1087 = vpop.f32.mrb[0].mxu0
  %1088 = vdwg.mxu0
  %1089 = vmatprep.subr.bf16.mxu0 0
  %1090 = vmatpush1.bf16.msra.mxu0 %v272
  %1091 = vmatprep.subr.bf16.mxu0 0
  %1092 = vmatpush1.bf16.msra.mxu0 %v273
  %1093 = vmatprep.subr.bf16.mxu0 0
  %1094 = vmatpush1.bf16.msra.mxu0 0
  %1095 = vmatprep.subr.bf16.mxu0 0
  %1096 = vmatpush1.bf16.msra.mxu0 0
  %1097 = vmatprep.subr.bf16.mxu0 0
  %1098 = vmatpush1.bf16.msra.mxu0 0
  %1099 = vmatprep.subr.bf16.mxu0 0
  %1100 = vmatpush1.bf16.msra.mxu0 0
  %1101 = vmatprep.subr.bf16.mxu0 0
  %1102 = vmatpush1.bf16.msra.mxu0 0
  %1103 = vmatprep.subr.bf16.mxu0 0
  %1104 = vmatpush1.bf16.msra.mxu0 0
  %1105 = vmatprep.subr.bf16.mxu0 0
  %1106 = vmatpush1.bf16.msra.mxu0 0
  %1107 = vmatprep.subr.bf16.mxu0 0
  %1108 = vmatpush1.bf16.msra.mxu0 0
  %1109 = vmatprep.subr.bf16.mxu0 0
  %1110 = vmatpush1.bf16.msra.mxu0 0
  %1111 = vmatprep.subr.bf16.mxu0 0
  %1112 = vmatpush1.bf16.msra.mxu0 0
  %1113 = vmatprep.subr.bf16.mxu0 0
  %1114 = vmatpush1.bf16.msra.mxu0 0
  %1115 = vmatprep.subr.bf16.mxu0 0
  %1116 = vmatpush1.bf16.msra.mxu0 0
  %1117 = vmatprep.subr.bf16.mxu0 0
  %1118 = vmatpush1.bf16.msra.mxu0 0
  %1119 = vmatprep.subr.bf16.mxu0 0
  %1120 = vmatpush1.bf16.msra.mxu0 0
  %1121 = vmatprep.mubr.bf16.mxu0 0
  %1122 = vmatmul.mubr.bf16.gmra.mrb[0].mxu0 %v981
  %v1123 = vpop.f32.mrb[0].mxu0
  %v1124 = vadd.f32 %v1036, %v1123
  %v1125 = vpop.f32.mrb[0].mxu0
  %v1126 = vpop.f32.mrb[0].mxu0
  %v1127 = vadd.f32 %v1039, %v1126
  %v1128 = vpop.f32.mrb[0].mxu0
  %1129 = vmatprep.mubr.bf16.mxu0 0
  %1130 = vmatmul.mubr.bf16.gmra.mrb[0].mxu0 %v984
  %v1131 = vpop.f32.mrb[0].mxu0
  %v1132 = vadd.f32 %v1044, %v1131
  %v1133 = vpop.f32.mrb[0].mxu0
  %v1134 = vpop.f32.mrb[0].mxu0
  %v1135 = vadd.f32 %v1047, %v1134
  %v1136 = vpop.f32.mrb[0].mxu0
  %1137 = vmatprep.mubr.bf16.mxu0 0
  %1138 = vmatmul.mubr.bf16.gmra.mrb[0].mxu0 %v987
  %v1139 = vpop.f32.mrb[0].mxu0
  %v1140 = vadd.f32 %v1052, %v1139
  %v1141 = vpop.f32.mrb[0].mxu0
  %v1142 = vpop.f32.mrb[0].mxu0
  %v1143 = vadd.f32 %v1055, %v1142
  %v1144 = vpop.f32.mrb[0].mxu0
  %1145 = vmatprep.mubr.bf16.mxu0 0
  %1146 = vmatmul.mubr.bf16.gmra.mrb[0].mxu0 %v990
  %v1147 = vpop.f32.mrb[0].mxu0
  %v1148 = vadd.f32 %v1060, %v1147
  %v1149 = vpop.f32.mrb[0].mxu0
  %v1150 = vpop.f32.mrb[0].mxu0
  %v1151 = vadd.f32 %v1063, %v1150
  %v1152 = vpop.f32.mrb[0].mxu0
  %1153 = vmatprep.mubr.bf16.mxu0 0
  %1154 = vmatmul.mubr.bf16.gmra.mrb[0].mxu0 %v993
  %v1155 = vpop.f32.mrb[0].mxu0
  %v1156 = vadd.f32 %v1068, %v1155
  %v1157 = vpop.f32.mrb[0].mxu0
  %v1158 = vpop.f32.mrb[0].mxu0
  %v1159 = vadd.f32 %v1071, %v1158
  %v1160 = vpop.f32.mrb[0].mxu0
  %1161 = vmatprep.mubr.bf16.mxu0 0
  %1162 = vmatmul.mubr.bf16.gmra.mrb[0].mxu0 %v996
  %v1163 = vpop.f32.mrb[0].mxu0
  %v1164 = vadd.f32 %v1076, %v1163
  %v1165 = vpop.f32.mrb[0].mxu0
  %v1166 = vpop.f32.mrb[0].mxu0
  %v1167 = vadd.f32 %v1079, %v1166
  %v1168 = vpop.f32.mrb[0].mxu0
  %1169 = vmatprep.mubr.bf16.mxu0 0
  %1170 = vmatmul.mubr.bf16.gmra.mrb[0].mxu0 %v999
  %v1171 = vpop.f32.mrb[0].mxu0
  %v1172 = vadd.f32 %v1084, %v1171
  %v1173 = vpop.f32.mrb[0].mxu0
  %v1174 = vpop.f32.mrb[0].mxu0
  %v1175 = vpop.f32.mrb[0].mxu0
  %1176 = vdwg.mxu0
  %v1177 = vmax.f32 %v1124, 0.0
  %v1178 = vmax.f32 %v1127, 0.0
  %v1179 = vmax.f32 %v1132, 0.0
  %v1180 = vmax.f32 %v1135, 0.0
  %v1181 = vmax.f32 %v1140, 0.0
  %v1182 = vmax.f32 %v1143, 0.0
  %v1183 = vmax.f32 %v1148, 0.0
  %v1184 = vmax.f32 %v1151, 0.0
  %v1185 = vmax.f32 %v1156, 0.0
  %v1186 = vmax.f32 %v1159, 0.0
  %v1187 = vmax.f32 %v1164, 0.0
  %v1188 = vmax.f32 %v1167, 0.0
  %v1189 = vmax.f32 %v1172, 0.0
  %s1190 = scalar_lea.vmem %s0, 468
  %v1191 = vld [vmem:[%s1190] sm:$0xff]
  %v1192 = vld [vmem:[%s1190 + $0x8] sm:$0xf]
  %v1193 = vld [vmem:[%s1190 + $0xc] sm:$0xff]
  %v1194 = vld [vmem:[%s1190 + $0x14] sm:$0xf]
  %v1195 = vld [vmem:[%s1190 + $0x18] sm:$0xff]
  %v1196 = vld [vmem:[%s1190 + $0x20] sm:$0xf]
  %v1197 = vld [vmem:[%s1190 + $0x24] sm:$0xff]
  %v1198 = vld [vmem:[%s1190 + $0x2c] sm:$0xf]
  %v1199 = vld [vmem:[%s1190 + $0x30] sm:$0xff]
  %v1200 = vld [vmem:[%s1190 + $0x38] sm:$0xf]
  %v1201 = vld [vmem:[%s1190 + $0x3c] sm:$0xff]
  %v1202 = vld [vmem:[%s1190 + $0x44] sm:$0xf]
  %v1203 = vld [vmem:[%s1190 + $0x48] sm:$0xff]
  %v1204 = vld [vmem:[%s1190 + $0x50] sm:$0xf]
  %v1205 = vld [vmem:[%s1190 + $0x54] sm:$0xff]
  %v1206 = vld [vmem:[%s1190 + $0x5c] sm:$0xf]
  %v1207 = vld [vmem:[%s1190 + $0x60] sm:$0xff]
  %v1208 = vld [vmem:[%s1190 + $0x68] sm:$0xf]
  %v1209 = vld [vmem:[%s1190 + $0x6c] sm:$0xff]
  %v1210 = vld [vmem:[%s1190 + $0x74] sm:$0xf]
  %v1211 = vld [vmem:[%s1190 + $0x78] sm:$0xff]
  %v1212 = vld [vmem:[%s1190 + $0x80] sm:$0xf]
  %v1213 = vld [vmem:[%s1190 + $0x84] sm:$0xff]
  %v1214 = vld [vmem:[%s1190 + $0x8c] sm:$0xf]
  %v1215 = vld [vmem:[%s1190 + $0x90] sm:$0x11]
  %v1216 = vld [vmem:[%s1190 + $0x98] sm:$0x1]
  %v1243 = vunpack.c.l.b16 %v1191
  %v1244 = vunpack.c.h.b16 %v1191
  %v1245 = vunpack.c.l.b16 %v1192
  %v1246 = vunpack.c.l.b16 %v1193
  %v1247 = vunpack.c.h.b16 %v1193
  %v1248 = vunpack.c.l.b16 %v1194
  %v1249 = vunpack.c.l.b16 %v1195
  %v1250 = vunpack.c.h.b16 %v1195
  %v1251 = vunpack.c.l.b16 %v1196
  %v1252 = vunpack.c.l.b16 %v1197
  %v1253 = vunpack.c.h.b16 %v1197
  %v1254 = vunpack.c.l.b16 %v1198
  %v1255 = vunpack.c.l.b16 %v1199
  %v1256 = vunpack.c.h.b16 %v1199
  %v1257 = vunpack.c.l.b16 %v1200
  %v1258 = vunpack.c.l.b16 %v1201
  %v1259 = vunpack.c.h.b16 %v1201
  %v1260 = vunpack.c.l.b16 %v1202
  %v1261 = vunpack.c.l.b16 %v1203
  %v1262 = vunpack.c.h.b16 %v1203
  %v1263 = vunpack.c.l.b16 %v1204
  %v1264 = vunpack.c.l.b16 %v1205
  %v1265 = vunpack.c.h.b16 %v1205
  %v1266 = vunpack.c.l.b16 %v1206
  %v1267 = vunpack.c.l.b16 %v1207
  %v1268 = vunpack.c.h.b16 %v1207
  %v1269 = vunpack.c.l.b16 %v1208
  %v1270 = vunpack.c.l.b16 %v1209
  %v1271 = vunpack.c.h.b16 %v1209
  %v1272 = vunpack.c.l.b16 %v1210
  %v1273 = vunpack.c.l.b16 %v1211
  %v1274 = vunpack.c.h.b16 %v1211
  %v1275 = vunpack.c.l.b16 %v1212
  %v1276 = vunpack.c.l.b16 %v1213
  %v1277 = vunpack.c.h.b16 %v1213
  %v1278 = vunpack.c.l.b16 %v1214
  %v1279 = vunpack.c.l.b16 %v1215
  %v1280 = vunpack.c.h.b16 %v1215
  %v1281 = vunpack.c.l.b16 %v1216
  %v1282 = vpack.c.b16 %v1246, %v1243
  %v1283 = vpack.c.b16 %v1247, %v1244
  %v1284 = vpack.c.b16 %v1248, %v1245
  %v1285 = vpack.c.b16 %v1252, %v1249
  %v1286 = vpack.c.b16 %v1253, %v1250
  %v1287 = vpack.c.b16 %v1254, %v1251
  %v1288 = vpack.c.b16 %v1258, %v1255
  %v1289 = vpack.c.b16 %v1259, %v1256
  %v1290 = vpack.c.b16 %v1260, %v1257
  %v1291 = vpack.c.b16 %v1264, %v1261
  %v1292 = vpack.c.b16 %v1265, %v1262
  %v1293 = vpack.c.b16 %v1266, %v1263
  %v1294 = vpack.c.b16 %v1270, %v1267
  %v1295 = vpack.c.b16 %v1271, %v1268
  %v1296 = vpack.c.b16 %v1272, %v1269
  %v1297 = vpack.c.b16 %v1276, %v1273
  %v1298 = vpack.c.b16 %v1277, %v1274
  %v1299 = vpack.c.b16 %v1278, %v1275
  %v1300 = vpack.c.b16 %v1279, %v1279
  %v1301 = vpack.c.b16 %v1280, %v1280
  %v1302 = vpack.c.b16 %v1281, %v1281
  %v1318 = vsel %vm292, %v1284, 0
  %v1321 = vsel %vm292, %v1287, 0
  %v1324 = vsel %vm292, %v1290, 0
  %v1327 = vsel %vm292, %v1293, 0
  %v1330 = vsel %vm292, %v1296, 0
  %v1333 = vsel %vm292, %v1299, 0
  %v1336 = vsel %vm292, %v1302, 0
  %1338 = vmatprep.subr.bf16.mxu0 0
  %1339 = vmatpush1.bf16.msra.mxu0 %v256
  %1340 = vmatprep.subr.bf16.mxu0 0
  %1341 = vmatpush1.bf16.msra.mxu0 %v257
  %1342 = vmatprep.subr.bf16.mxu0 0
  %1343 = vmatpush1.bf16.msra.mxu0 %v258
  %1344 = vmatprep.subr.bf16.mxu0 0
  %1345 = vmatpush1.bf16.msra.mxu0 %v259
  %1346 = vmatprep.subr.bf16.mxu0 0
  %1347 = vmatpush1.bf16.msra.mxu0 %v260
  %1348 = vmatprep.subr.bf16.mxu0 0
  %1349 = vmatpush1.bf16.msra.mxu0 %v261
  %1350 = vmatprep.subr.bf16.mxu0 0
  %1351 = vmatpush1.bf16.msra.mxu0 %v262
  %1352 = vmatprep.subr.bf16.mxu0 0
  %1353 = vmatpush1.bf16.msra.mxu0 %v263
  %1354 = vmatprep.subr.bf16.mxu0 0
  %1355 = vmatpush1.bf16.msra.mxu0 %v264
  %1356 = vmatprep.subr.bf16.mxu0 0
  %1357 = vmatpush1.bf16.msra.mxu0 %v265
  %1358 = vmatprep.subr.bf16.mxu0 0
  %1359 = vmatpush1.bf16.msra.mxu0 %v266
  %1360 = vmatprep.subr.bf16.mxu0 0
  %1361 = vmatpush1.bf16.msra.mxu0 %v267
  %1362 = vmatprep.subr.bf16.mxu0 0
  %1363 = vmatpush1.bf16.msra.mxu0 %v268
  %1364 = vmatprep.subr.bf16.mxu0 0
  %1365 = vmatpush1.bf16.msra.mxu0 %v269
  %1366 = vmatprep.subr.bf16.mxu0 0
  %1367 = vmatpush1.bf16.msra.mxu0 %v270
  %1368 = vmatprep.subr.bf16.mxu0 0
  %1369 = vmatpush1.bf16.msra.mxu0 %v271
  %1370 = vmatprep.mubr.bf16.mxu0 %v1283
  %1371 = vmatmul.mubr.bf16.gmra.mrb[0].mxu0 %v1282
  %v1372 = vpop.f32.mrb[0].mxu0
  %v1373 = vadd.f32 %v82, %v1372
  %v1374 = vpop.f32.mrb[0].mxu0
  %v1375 = vpop.f32.mrb[0].mxu0
  %v1376 = vadd.f32 %v82, %v1375
  %v1377 = vpop.f32.mrb[0].mxu0
  %1378 = vmatprep.mubr.bf16.mxu0 %v1286
  %1379 = vmatmul.mubr.bf16.gmra.mrb[0].mxu0 %v1285
  %v1380 = vpop.f32.mrb[0].mxu0
  %v1381 = vadd.f32 %v82, %v1380
  %v1382 = vpop.f32.mrb[0].mxu0
  %v1383 = vpop.f32.mrb[0].mxu0
  %v1384 = vadd.f32 %v82, %v1383
  %v1385 = vpop.f32.mrb[0].mxu0
  %1386 = vmatprep.mubr.bf16.mxu0 %v1289
  %1387 = vmatmul.mubr.bf16.gmra.mrb[0].mxu0 %v1288
  %v1388 = vpop.f32.mrb[0].mxu0
  %v1389 = vadd.f32 %v82, %v1388
  %v1390 = vpop.f32.mrb[0].mxu0
  %v1391 = vpop.f32.mrb[0].mxu0
  %v1392 = vadd.f32 %v82, %v1391
  %v1393 = vpop.f32.mrb[0].mxu0
  %1394 = vmatprep.mubr.bf16.mxu0 %v1292
  %1395 = vmatmul.mubr.bf16.gmra.mrb[0].mxu0 %v1291
  %v1396 = vpop.f32.mrb[0].mxu0
  %v1397 = vadd.f32 %v82, %v1396
  %v1398 = vpop.f32.mrb[0].mxu0
  %v1399 = vpop.f32.mrb[0].mxu0
  %v1400 = vadd.f32 %v82, %v1399
  %v1401 = vpop.f32.mrb[0].mxu0
  %1402 = vmatprep.mubr.bf16.mxu0 %v1295
  %1403 = vmatmul.mubr.bf16.gmra.mrb[0].mxu0 %v1294
  %v1404 = vpop.f32.mrb[0].mxu0
  %v1405 = vadd.f32 %v82, %v1404
  %v1406 = vpop.f32.mrb[0].mxu0
  %v1407 = vpop.f32.mrb[0].mxu0
  %v1408 = vadd.f32 %v82, %v1407
  %v1409 = vpop.f32.mrb[0].mxu0
  %1410 = vmatprep.mubr.bf16.mxu0 %v1298
  %1411 = vmatmul.mubr.bf16.gmra.mrb[0].mxu0 %v1297
  %v1412 = vpop.f32.mrb[0].mxu0
  %v1413 = vadd.f32 %v82, %v1412
  %v1414 = vpop.f32.mrb[0].mxu0
  %v1415 = vpop.f32.mrb[0].mxu0
  %v1416 = vadd.f32 %v82, %v1415
  %v1417 = vpop.f32.mrb[0].mxu0
  %1418 = vmatprep.mubr.bf16.mxu0 %v1301
  %1419 = vmatmul.mubr.bf16.gmra.mrb[0].mxu0 %v1300
  %v1420 = vpop.f32.mrb[0].mxu0
  %v1421 = vadd.f32 %v82, %v1420
  %v1422 = vpop.f32.mrb[0].mxu0
  %v1423 = vpop.f32.mrb[0].mxu0
  %v1424 = vpop.f32.mrb[0].mxu0
  %1425 = vdwg.mxu0
  %1426 = vmatprep.subr.bf16.mxu0 0
  %1427 = vmatpush1.bf16.msra.mxu0 %v272
  %1428 = vmatprep.subr.bf16.mxu0 0
  %1429 = vmatpush1.bf16.msra.mxu0 %v273
  %1430 = vmatprep.subr.bf16.mxu0 0
  %1431 = vmatpush1.bf16.msra.mxu0 0
  %1432 = vmatprep.subr.bf16.mxu0 0
  %1433 = vmatpush1.bf16.msra.mxu0 0
  %1434 = vmatprep.subr.bf16.mxu0 0
  %1435 = vmatpush1.bf16.msra.mxu0 0
  %1436 = vmatprep.subr.bf16.mxu0 0
  %1437 = vmatpush1.bf16.msra.mxu0 0
  %1438 = vmatprep.subr.bf16.mxu0 0
  %1439 = vmatpush1.bf16.msra.mxu0 0
  %1440 = vmatprep.subr.bf16.mxu0 0
  %1441 = vmatpush1.bf16.msra.mxu0 0
  %1442 = vmatprep.subr.bf16.mxu0 0
  %1443 = vmatpush1.bf16.msra.mxu0 0
  %1444 = vmatprep.subr.bf16.mxu0 0
  %1445 = vmatpush1.bf16.msra.mxu0 0
  %1446 = vmatprep.subr.bf16.mxu0 0
  %1447 = vmatpush1.bf16.msra.mxu0 0
  %1448 = vmatprep.subr.bf16.mxu0 0
  %1449 = vmatpush1.bf16.msra.mxu0 0
  %1450 = vmatprep.subr.bf16.mxu0 0
  %1451 = vmatpush1.bf16.msra.mxu0 0
  %1452 = vmatprep.subr.bf16.mxu0 0
  %1453 = vmatpush1.bf16.msra.mxu0 0
  %1454 = vmatprep.subr.bf16.mxu0 0
  %1455 = vmatpush1.bf16.msra.mxu0 0
  %1456 = vmatprep.subr.bf16.mxu0 0
  %1457 = vmatpush1.bf16.msra.mxu0 0
  %1458 = vmatprep.mubr.bf16.mxu0 0
  %1459 = vmatmul.mubr.bf16.gmra.mrb[0].mxu0 %v1318
  %v1460 = vpop.f32.mrb[0].mxu0
  %v1461 = vadd.f32 %v1373, %v1460
  %v1462 = vpop.f32.mrb[0].mxu0
  %v1463 = vpop.f32.mrb[0].mxu0
  %v1464 = vadd.f32 %v1376, %v1463
  %v1465 = vpop.f32.mrb[0].mxu0
  %1466 = vmatprep.mubr.bf16.mxu0 0
  %1467 = vmatmul.mubr.bf16.gmra.mrb[0].mxu0 %v1321
  %v1468 = vpop.f32.mrb[0].mxu0
  %v1469 = vadd.f32 %v1381, %v1468
  %v1470 = vpop.f32.mrb[0].mxu0
  %v1471 = vpop.f32.mrb[0].mxu0
  %v1472 = vadd.f32 %v1384, %v1471
  %v1473 = vpop.f32.mrb[0].mxu0
  %1474 = vmatprep.mubr.bf16.mxu0 0
  %1475 = vmatmul.mubr.bf16.gmra.mrb[0].mxu0 %v1324
  %v1476 = vpop.f32.mrb[0].mxu0
  %v1477 = vadd.f32 %v1389, %v1476
  %v1478 = vpop.f32.mrb[0].mxu0
  %v1479 = vpop.f32.mrb[0].mxu0
  %v1480 = vadd.f32 %v1392, %v1479
  %v1481 = vpop.f32.mrb[0].mxu0
  %1482 = vmatprep.mubr.bf16.mxu0 0
  %1483 = vmatmul.mubr.bf16.gmra.mrb[0].mxu0 %v1327
  %v1484 = vpop.f32.mrb[0].mxu0
  %v1485 = vadd.f32 %v1397, %v1484
  %v1486 = vpop.f32.mrb[0].mxu0
  %v1487 = vpop.f32.mrb[0].mxu0
  %v1488 = vadd.f32 %v1400, %v1487
  %v1489 = vpop.f32.mrb[0].mxu0
  %1490 = vmatprep.mubr.bf16.mxu0 0
  %1491 = vmatmul.mubr.bf16.gmra.mrb[0].mxu0 %v1330
  %v1492 = vpop.f32.mrb[0].mxu0
  %v1493 = vadd.f32 %v1405, %v1492
  %v1494 = vpop.f32.mrb[0].mxu0
  %v1495 = vpop.f32.mrb[0].mxu0
  %v1496 = vadd.f32 %v1408, %v1495
  %v1497 = vpop.f32.mrb[0].mxu0
  %1498 = vmatprep.mubr.bf16.mxu0 0
  %1499 = vmatmul.mubr.bf16.gmra.mrb[0].mxu0 %v1333
  %v1500 = vpop.f32.mrb[0].mxu0
  %v1501 = vadd.f32 %v1413, %v1500
  %v1502 = vpop.f32.mrb[0].mxu0
  %v1503 = vpop.f32.mrb[0].mxu0
  %v1504 = vadd.f32 %v1416, %v1503
  %v1505 = vpop.f32.mrb[0].mxu0
  %1506 = vmatprep.mubr.bf16.mxu0 0
  %1507 = vmatmul.mubr.bf16.gmra.mrb[0].mxu0 %v1336
  %v1508 = vpop.f32.mrb[0].mxu0
  %v1509 = vadd.f32 %v1421, %v1508
  %v1510 = vpop.f32.mrb[0].mxu0
  %v1511 = vpop.f32.mrb[0].mxu0
  %v1512 = vpop.f32.mrb[0].mxu0
  %1513 = vdwg.mxu0
  %v1514 = vmax.f32 %v1461, 0.0
  %v1515 = vmax.f32 %v1464, 0.0
  %v1516 = vmax.f32 %v1469, 0.0
  %v1517 = vmax.f32 %v1472, 0.0
  %v1518 = vmax.f32 %v1477, 0.0
  %v1519 = vmax.f32 %v1480, 0.0
  %v1520 = vmax.f32 %v1485, 0.0
  %v1521 = vmax.f32 %v1488, 0.0
  %v1522 = vmax.f32 %v1493, 0.0
  %v1523 = vmax.f32 %v1496, 0.0
  %v1524 = vmax.f32 %v1501, 0.0
  %v1525 = vmax.f32 %v1504, 0.0
  %v1526 = vmax.f32 %v1509, 0.0
  %v1527 = vmax.f32 %v1177, %v1514
  %v1528 = vmax.f32 %v1178, %v1515
  %v1529 = vmax.f32 %v1179, %v1516
  %v1530 = vmax.f32 %v1180, %v1517
  %v1531 = vmax.f32 %v1181, %v1518
  %v1532 = vmax.f32 %v1182, %v1519
  %v1533 = vmax.f32 %v1183, %v1520
  %v1534 = vmax.f32 %v1184, %v1521
  %v1535 = vmax.f32 %v1185, %v1522
  %v1536 = vmax.f32 %v1186, %v1523
  %v1537 = vmax.f32 %v1187, %v1524
  %v1538 = vmax.f32 %v1188, %v1525
  %v1539 = vmax.f32 %v1189, %v1526
  %v1540 = vmax.f32 %v840, %v1527
  %v1541 = vmax.f32 %v841, %v1528
  %v1542 = vmax.f32 %v842, %v1529
  %v1543 = vmax.f32 %v843, %v1530
  %v1544 = vmax.f32 %v844, %v1531
  %v1545 = vmax.f32 %v845, %v1532
  %v1546 = vmax.f32 %v846, %v1533
  %v1547 = vmax.f32 %v847, %v1534
  %v1548 = vmax.f32 %v848, %v1535
  %v1549 = vmax.f32 %v849, %v1536
  %v1550 = vmax.f32 %v850, %v1537
  %v1551 = vmax.f32 %v851, %v1538
  %v1552 = vmax.f32 %v852, %v1539
  %v1553 = vpack.c.bf16 %v1541, %v1540
  %v1554 = vpack.c.bf16 %v1543, %v1542
  %v1555 = vpack.c.bf16 %v1545, %v1544
  %v1556 = vpack.c.bf16 %v1547, %v1546
  %v1557 = vpack.c.bf16 %v1549, %v1548
  %v1558 = vpack.c.bf16 %v1551, %v1550
  %v1559 = vpack.c.bf16 %v1552, %v1552
  %v1567 = vunpack.c.l.b16 %v1553
  %v1568 = vunpack.c.h.b16 %v1553
  %v1569 = vunpack.c.l.b16 %v1554
  %v1570 = vunpack.c.h.b16 %v1554
  %v1571 = vunpack.c.l.b16 %v1555
  %v1572 = vunpack.c.h.b16 %v1555
  %v1573 = vunpack.c.l.b16 %v1556
  %v1574 = vunpack.c.h.b16 %v1556
  %v1575 = vunpack.c.l.b16 %v1557
  %v1576 = vunpack.c.h.b16 %v1557
  %v1577 = vunpack.c.l.b16 %v1558
  %v1578 = vunpack.c.h.b16 %v1558
  %v1579 = vunpack.c.l.b16 %v1559
  %v1580 = vpack.c.b16 %v1567, %v1567
  %v1581 = vpack.c.b16 %v1568, %v1568
  %v1582 = vpack.c.b16 %v1569, %v1569
  %v1583 = vpack.c.b16 %v1570, %v1570
  %v1584 = vpack.c.b16 %v1571, %v1571
  %v1585 = vpack.c.b16 %v1572, %v1572
  %v1586 = vpack.c.b16 %v1573, %v1573
  %v1587 = vpack.c.b16 %v1574, %v1574
  %v1588 = vpack.c.b16 %v1575, %v1575
  %v1589 = vpack.c.b16 %v1576, %v1576
  %v1590 = vpack.c.b16 %v1577, %v1577
  %v1591 = vpack.c.b16 %v1578, %v1578
  %v1592 = vpack.c.b16 %v1579, %v1579
  %vm1606 = vcmask 519168
  %1607 = vst.msk [vmem:[%s3] sm:$0xf] %vm1606, %v1580
  %1608 = vst.msk [vmem:[%s3 + $0x4] sm:$0xf] %vm1606, %v1581
  %1609 = vst.msk [vmem:[%s3 + $0x8] sm:$0xf] %vm1606, %v1582
  %1610 = vst.msk [vmem:[%s3 + $0xc] sm:$0xf] %vm1606, %v1583
  %1611 = vst.msk [vmem:[%s3 + $0x10] sm:$0xf] %vm1606, %v1584
  %1612 = vst.msk [vmem:[%s3 + $0x14] sm:$0xf] %vm1606, %v1585
  %1613 = vst.msk [vmem:[%s3 + $0x18] sm:$0xf] %vm1606, %v1586
  %1614 = vst.msk [vmem:[%s3 + $0x1c] sm:$0xf] %vm1606, %v1587
  %1615 = vst.msk [vmem:[%s3 + $0x20] sm:$0xf] %vm1606, %v1588
  %1616 = vst.msk [vmem:[%s3 + $0x24] sm:$0xf] %vm1606, %v1589
  %1617 = vst.msk [vmem:[%s3 + $0x28] sm:$0xf] %vm1606, %v1590
  %1618 = vst.msk [vmem:[%s3 + $0x2c] sm:$0xf] %vm1606, %v1591
  %vm1619 = vcmask 516096
  %1620 = vst.msk [vmem:[%s3 + $0x30] sm:$0x1] %vm1619, %v1592
  // Predicated region
  $region14: #{cnn_forward.4} parent=0 // pred_check
    _
  $region15: #{cnn_forward.4} parent=0 // pred_check_branch
    %1622 = sbr.rel (0) target = $region17
  $region16: #{cnn_forward.4} parent=0 // pred_region
    _
  $region17: #{cnn_forward.4} parent=0 // pred_fallthru
    _
  // Predicated region
  $region18: #{cnn_forward.4} parent=0 // pred_check
    _
  $region19: #{cnn_forward.4} parent=0 // pred_check_branch
    %1624 = sbr.rel (0) target = $region21
  $region20: #{cnn_forward.4} parent=0 // pred_region
    _
  $region21: #{cnn_forward.4} parent=0 // pred_fallthru
    _

// kernel: cnn_forward.5
$region0: #{cnn_forward.5}
  #allocation0 [shape = 'u32[]', space=smem, size = 0x4, offset = 0x4, fixed_abs, tag = 'smem constant byte address 0x4 - core index']
  #allocation1 [shape = 'u32[144,128]{1,0:T(1,128)}', space=vmem, size = 0x12000, scoped, tag = 'internal scratch']
  %s0 = inlined_call_operand.vmem [shape: bf16[2,3136], index: 0, kind: input, shape index: {}]
  %s1 = inlined_call_operand.vmem [shape: bf16[3136,128], index: 1, kind: input, shape index: {}]
  %s2 = inlined_call_operand.vmem [shape: f32[1,128], index: 2, kind: input, shape index: {}]
  %s3 = inlined_call_operand.vmem [shape: bf16[128,10], index: 3, kind: input, shape index: {}]
  %s4 = inlined_call_operand.vmem [shape: f32[1,10], index: 4, kind: input, shape index: {}]
  %s5 = inlined_call_operand.hbm [shape: f32[2,10], index: 5, kind: output, shape index: {}]
  %s6 = sld [smem:[#allocation0]]
  $region30: #{cnn_forward.5} parent=0
    _
  %s8 = ssub.s32 1, %s6
  %s9 = scalar_select 0, %s8, %s6
  $region1: #{cnn_forward.5} parent=0
    #allocation2 [shape = 'u8[1024]{0}', space=vmem, size = 0x400, scoped, tag = 'output window, operand 0, single buffered']
    #allocation3 [shape = 's32[1]{0}', space=sflag, size = 0x4, scoped, tag = 'scoped memory for cnn_forward.5']
    %10 = vsyncpa [#allocation3], 0
    // Predicated region
    $region2: #{cnn_forward.5} parent=1 // pred_check
      _
    $region3: #{cnn_forward.5} parent=1 // pred_check_branch
      %12 = sbr.rel (0) target = $region5
    $region4: #{cnn_forward.5} parent=1 // pred_region
      _
    $region5: #{cnn_forward.5} parent=1 // pred_fallthru
      _
    // Predicated region
    $region6: #{cnn_forward.5} parent=1 // pred_check
      _
    $region7: #{cnn_forward.5} parent=1 // pred_check_branch
      %14 = sbr.rel (0) target = $region9
    $region8: #{cnn_forward.5} parent=1 // pred_region
      _
    $region9: #{cnn_forward.5} parent=1 // pred_fallthru
      _
    // Predicated region
    $region10: #{cnn_forward.5} parent=1 // pred_check
      _
    $region11: #{cnn_forward.5} parent=1 // pred_check_branch
      %16 = sbr.rel (0) target = $region13
    $region12: #{cnn_forward.5} parent=1 // pred_region
      _
    $region13: #{cnn_forward.5} parent=1 // pred_fallthru
      _
    // Predicated region
    $region14: #{cnn_forward.5} parent=1 // pred_check
      _
    $region15: #{cnn_forward.5} parent=1 // pred_check_branch
      %18 = sbr.rel (0) target = $region17
    $region16: #{cnn_forward.5} parent=1 // pred_region
      _
    $region17: #{cnn_forward.5} parent=1 // pred_fallthru
      _
    // Predicated region
    $region18: #{cnn_forward.5} parent=1 // pred_check
      _
    $region19: #{cnn_forward.5} parent=1 // pred_check_branch
      %20 = sbr.rel (0) target = $region21
    $region20: #{cnn_forward.5} parent=1 // pred_region
      _
    $region21: #{cnn_forward.5} parent=1 // pred_fallthru
      _
    %v22 = vld [vmem:[%s0] sm:$0xff]
    %v23 = vld [vmem:[%s0 + $0x8] sm:$0xff]
    %v24 = vld [vmem:[%s0 + $0x10] sm:$0xff]
    %v25 = vld [vmem:[%s0 + $0x18] sm:$0x1]
    %v26 = vld [vmem:[%s1] sm:$0xf]
    %v27 = vld [vmem:[%s1 + $0x4] sm:$0xf]
    %v28 = vld [vmem:[%s1 + $0x8] sm:$0xf]
    %v29 = vld [vmem:[%s1 + $0xc] sm:$0xf]
    %v30 = vld [vmem:[%s1 + $0x10] sm:$0xf]
    %v31 = vld [vmem:[%s1 + $0x14] sm:$0xf]
    %v32 = vld [vmem:[%s1 + $0x18] sm:$0xf]
    %v33 = vld [vmem:[%s1 + $0x1c] sm:$0xf]
    %v34 = vld [vmem:[%s1 + $0x20] sm:$0xf]
    %v35 = vld [vmem:[%s1 + $0x24] sm:$0xf]
    %v36 = vld [vmem:[%s1 + $0x28] sm:$0xf]
    %v37 = vld [vmem:[%s1 + $0x2c] sm:$0xf]
    %v38 = vld [vmem:[%s1 + $0x30] sm:$0xf]
    %v39 = vld [vmem:[%s1 + $0x34] sm:$0xf]
    %v40 = vld [vmem:[%s1 + $0x38] sm:$0xf]
    %v41 = vld [vmem:[%s1 + $0x3c] sm:$0xf]
    %v42 = vld [vmem:[%s1 + $0x40] sm:$0xf]
    %v43 = vld [vmem:[%s1 + $0x44] sm:$0xf]
    %v44 = vld [vmem:[%s1 + $0x48] sm:$0xf]
    %v45 = vld [vmem:[%s1 + $0x4c] sm:$0xf]
    %v46 = vld [vmem:[%s1 + $0x50] sm:$0xf]
    %v47 = vld [vmem:[%s1 + $0x54] sm:$0xf]
    %v48 = vld [vmem:[%s1 + $0x58] sm:$0xf]
    %v49 = vld [vmem:[%s1 + $0x5c] sm:$0xf]
    %v50 = vld [vmem:[%s1 + $0x60] sm:$0xf]
    %v51 = vld [vmem:[%s1 + $0x64] sm:$0xf]
    %v52 = vld [vmem:[%s1 + $0x68] sm:$0xf]
    %v53 = vld [vmem:[%s1 + $0x6c] sm:$0xf]
    %v54 = vld [vmem:[%s1 + $0x70] sm:$0xf]
    %v55 = vld [vmem:[%s1 + $0x74] sm:$0xf]
    %v56 = vld [vmem:[%s1 + $0x78] sm:$0xf]
    %v57 = vld [vmem:[%s1 + $0x7c] sm:$0xf]
    %v58 = vld [vmem:[%s1 + $0x80] sm:$0xf]
    %v59 = vld [vmem:[%s1 + $0x84] sm:$0xf]
    %v60 = vld [vmem:[%s1 + $0x88] sm:$0xf]
    %v61 = vld [vmem:[%s1 + $0x8c] sm:$0xf]
    %v62 = vld [vmem:[%s1 + $0x90] sm:$0xf]
    %v63 = vld [vmem:[%s1 + $0x94] sm:$0xf]
    %v64 = vld [vmem:[%s1 + $0x98] sm:$0xf]
    %v65 = vld [vmem:[%s1 + $0x9c] sm:$0xf]
    %v66 = vld [vmem:[%s1 + $0xa0] sm:$0xf]
    %v67 = vld [vmem:[%s1 + $0xa4] sm:$0xf]
    %v68 = vld [vmem:[%s1 + $0xa8] sm:$0xf]
    %v69 = vld [vmem:[%s1 + $0xac] sm:$0xf]
    %v70 = vld [vmem:[%s1 + $0xb0] sm:$0xf]
    %v71 = vld [vmem:[%s1 + $0xb4] sm:$0xf]
    %v72 = vld [vmem:[%s1 + $0xb8] sm:$0xf]
    %v73 = vld [vmem:[%s1 + $0xbc] sm:$0xf]
    %v74 = vld [vmem:[%s1 + $0xc0] sm:$0xf]
    %v75 = vld [vmem:[%s1 + $0xc4] sm:$0xf]
    %v76 = vld [vmem:[%s1 + $0xc8] sm:$0xf]
    %v77 = vld [vmem:[%s1 + $0xcc] sm:$0xf]
    %v78 = vld [vmem:[%s1 + $0xd0] sm:$0xf]
    %v79 = vld [vmem:[%s1 + $0xd4] sm:$0xf]
    %v80 = vld [vmem:[%s1 + $0xd8] sm:$0xf]
    %v81 = vld [vmem:[%s1 + $0xdc] sm:$0xf]
    %v82 = vld [vmem:[%s1 + $0xe0] sm:$0xf]
    %v83 = vld [vmem:[%s1 + $0xe4] sm:$0xf]
    %v84 = vld [vmem:[%s1 + $0xe8] sm:$0xf]
    %v85 = vld [vmem:[%s1 + $0xec] sm:$0xf]
    %v86 = vld [vmem:[%s1 + $0xf0] sm:$0xf]
    %v87 = vld [vmem:[%s1 + $0xf4] sm:$0xf]
    %v88 = vld [vmem:[%s1 + $0xf8] sm:$0xf]
    %v89 = vld [vmem:[%s1 + $0xfc] sm:$0xf]
    %v90 = vld [vmem:[%s1 + $0x100] sm:$0xf]
    %v91 = vld [vmem:[%s1 + $0x104] sm:$0xf]
    %v92 = vld [vmem:[%s1 + $0x108] sm:$0xf]
    %v93 = vld [vmem:[%s1 + $0x10c] sm:$0xf]
    %v94 = vld [vmem:[%s1 + $0x110] sm:$0xf]
    %v95 = vld [vmem:[%s1 + $0x114] sm:$0xf]
    %v96 = vld [vmem:[%s1 + $0x118] sm:$0xf]
    %v97 = vld [vmem:[%s1 + $0x11c] sm:$0xf]
    %v98 = vld [vmem:[%s1 + $0x120] sm:$0xf]
    %v99 = vld [vmem:[%s1 + $0x124] sm:$0xf]
    %v100 = vld [vmem:[%s1 + $0x128] sm:$0xf]
    %v101 = vld [vmem:[%s1 + $0x12c] sm:$0xf]
    %v102 = vld [vmem:[%s1 + $0x130] sm:$0xf]
    %v103 = vld [vmem:[%s1 + $0x134] sm:$0xf]
    %v104 = vld [vmem:[%s1 + $0x138] sm:$0xf]
    %v105 = vld [vmem:[%s1 + $0x13c] sm:$0xf]
    %v106 = vld [vmem:[%s1 + $0x140] sm:$0xf]
    %v107 = vld [vmem:[%s1 + $0x144] sm:$0xf]
    %v108 = vld [vmem:[%s1 + $0x148] sm:$0xf]
    %v109 = vld [vmem:[%s1 + $0x14c] sm:$0xf]
    %v110 = vld [vmem:[%s1 + $0x150] sm:$0xf]
    %v111 = vld [vmem:[%s1 + $0x154] sm:$0xf]
    %v112 = vld [vmem:[%s1 + $0x158] sm:$0xf]
    %v113 = vld [vmem:[%s1 + $0x15c] sm:$0xf]
    %v114 = vld [vmem:[%s1 + $0x160] sm:$0xf]
    %v115 = vld [vmem:[%s1 + $0x164] sm:$0xf]
    %v116 = vld [vmem:[%s1 + $0x168] sm:$0xf]
    %v117 = vld [vmem:[%s1 + $0x16c] sm:$0xf]
    %v118 = vld [vmem:[%s1 + $0x170] sm:$0xf]
    %v119 = vld [vmem:[%s1 + $0x174] sm:$0xf]
    %v120 = vld [vmem:[%s1 + $0x178] sm:$0xf]
    %v121 = vld [vmem:[%s1 + $0x17c] sm:$0xf]
    %v122 = vld [vmem:[%s1 + $0x180] sm:$0xf]
    %v123 = vld [vmem:[%s1 + $0x184] sm:$0xf]
    %v124 = vld [vmem:[%s1 + $0x188] sm:$0xf]
    %v125 = vld [vmem:[%s1 + $0x18c] sm:$0xf]
    %v126 = vld [vmem:[%s1 + $0x190] sm:$0xf]
    %v127 = vld [vmem:[%s1 + $0x194] sm:$0xf]
    %v128 = vld [vmem:[%s1 + $0x198] sm:$0xf]
    %v129 = vld [vmem:[%s1 + $0x19c] sm:$0xf]
    %v130 = vld [vmem:[%s1 + $0x1a0] sm:$0xf]
    %v131 = vld [vmem:[%s1 + $0x1a4] sm:$0xf]
    %v132 = vld [vmem:[%s1 + $0x1a8] sm:$0xf]
    %v133 = vld [vmem:[%s1 + $0x1ac] sm:$0xf]
    %v134 = vld [vmem:[%s1 + $0x1b0] sm:$0xf]
    %v135 = vld [vmem:[%s1 + $0x1b4] sm:$0xf]
    %v136 = vld [vmem:[%s1 + $0x1b8] sm:$0xf]
    %v137 = vld [vmem:[%s1 + $0x1bc] sm:$0xf]
    %v138 = vld [vmem:[%s1 + $0x1c0] sm:$0xf]
    %v139 = vld [vmem:[%s1 + $0x1c4] sm:$0xf]
    %v140 = vld [vmem:[%s1 + $0x1c8] sm:$0xf]
    %v141 = vld [vmem:[%s1 + $0x1cc] sm:$0xf]
    %v142 = vld [vmem:[%s1 + $0x1d0] sm:$0xf]
    %v143 = vld [vmem:[%s1 + $0x1d4] sm:$0xf]
    %v144 = vld [vmem:[%s1 + $0x1d8] sm:$0xf]
    %v145 = vld [vmem:[%s1 + $0x1dc] sm:$0xf]
    %v146 = vld [vmem:[%s1 + $0x1e0] sm:$0xf]
    %v147 = vld [vmem:[%s1 + $0x1e4] sm:$0xf]
    %v148 = vld [vmem:[%s1 + $0x1e8] sm:$0xf]
    %v149 = vld [vmem:[%s1 + $0x1ec] sm:$0xf]
    %v150 = vld [vmem:[%s1 + $0x1f0] sm:$0xf]
    %v151 = vld [vmem:[%s1 + $0x1f4] sm:$0xf]
    %v152 = vld [vmem:[%s1 + $0x1f8] sm:$0xf]
    %v153 = vld [vmem:[%s1 + $0x1fc] sm:$0xf]
    %v154 = vld [vmem:[%s1 + $0x200] sm:$0xf]
    %v155 = vld [vmem:[%s1 + $0x204] sm:$0xf]
    %v156 = vld [vmem:[%s1 + $0x208] sm:$0xf]
    %v157 = vld [vmem:[%s1 + $0x20c] sm:$0xf]
    %v158 = vld [vmem:[%s1 + $0x210] sm:$0xf]
    %v159 = vld [vmem:[%s1 + $0x214] sm:$0xf]
    %v160 = vld [vmem:[%s1 + $0x218] sm:$0xf]
    %v161 = vld [vmem:[%s1 + $0x21c] sm:$0xf]
    %v162 = vld [vmem:[%s1 + $0x220] sm:$0xf]
    %v163 = vld [vmem:[%s1 + $0x224] sm:$0xf]
    %v164 = vld [vmem:[%s1 + $0x228] sm:$0xf]
    %v165 = vld [vmem:[%s1 + $0x22c] sm:$0xf]
    %v166 = vld [vmem:[%s1 + $0x230] sm:$0xf]
    %v167 = vld [vmem:[%s1 + $0x234] sm:$0xf]
    %v168 = vld [vmem:[%s1 + $0x238] sm:$0xf]
    %v169 = vld [vmem:[%s1 + $0x23c] sm:$0xf]
    %v170 = vld [vmem:[%s1 + $0x240] sm:$0xf]
    %v171 = vld [vmem:[%s1 + $0x244] sm:$0xf]
    %v172 = vld [vmem:[%s1 + $0x248] sm:$0xf]
    %v173 = vld [vmem:[%s1 + $0x24c] sm:$0xf]
    %v174 = vld [vmem:[%s1 + $0x250] sm:$0xf]
    %v175 = vld [vmem:[%s1 + $0x254] sm:$0xf]
    %v176 = vld [vmem:[%s1 + $0x258] sm:$0xf]
    %v177 = vld [vmem:[%s1 + $0x25c] sm:$0xf]
    %v178 = vld [vmem:[%s1 + $0x260] sm:$0xf]
    %v179 = vld [vmem:[%s1 + $0x264] sm:$0xf]
    %v180 = vld [vmem:[%s1 + $0x268] sm:$0xf]
    %v181 = vld [vmem:[%s1 + $0x26c] sm:$0xf]
    %v182 = vld [vmem:[%s1 + $0x270] sm:$0xf]
    %v183 = vld [vmem:[%s1 + $0x274] sm:$0xf]
    %v184 = vld [vmem:[%s1 + $0x278] sm:$0xf]
    %v185 = vld [vmem:[%s1 + $0x27c] sm:$0xf]
    %v186 = vld [vmem:[%s1 + $0x280] sm:$0xf]
    %v187 = vld [vmem:[%s1 + $0x284] sm:$0xf]
    %v188 = vld [vmem:[%s1 + $0x288] sm:$0xf]
    %v189 = vld [vmem:[%s1 + $0x28c] sm:$0xf]
    %v190 = vld [vmem:[%s1 + $0x290] sm:$0xf]
    %v191 = vld [vmem:[%s1 + $0x294] sm:$0xf]
    %v192 = vld [vmem:[%s1 + $0x298] sm:$0xf]
    %v193 = vld [vmem:[%s1 + $0x29c] sm:$0xf]
    %v194 = vld [vmem:[%s1 + $0x2a0] sm:$0xf]
    %v195 = vld [vmem:[%s1 + $0x2a4] sm:$0xf]
    %v196 = vld [vmem:[%s1 + $0x2a8] sm:$0xf]
    %v197 = vld [vmem:[%s1 + $0x2ac] sm:$0xf]
    %v198 = vld [vmem:[%s1 + $0x2b0] sm:$0xf]
    %v199 = vld [vmem:[%s1 + $0x2b4] sm:$0xf]
    %v200 = vld [vmem:[%s1 + $0x2b8] sm:$0xf]
    %v201 = vld [vmem:[%s1 + $0x2bc] sm:$0xf]
    %v202 = vld [vmem:[%s1 + $0x2c0] sm:$0xf]
    %v203 = vld [vmem:[%s1 + $0x2c4] sm:$0xf]
    %v204 = vld [vmem:[%s1 + $0x2c8] sm:$0xf]
    %v205 = vld [vmem:[%s1 + $0x2cc] sm:$0xf]
    %v206 = vld [vmem:[%s1 + $0x2d0] sm:$0xf]
    %v207 = vld [vmem:[%s1 + $0x2d4] sm:$0xf]
    %v208 = vld [vmem:[%s1 + $0x2d8] sm:$0xf]
    %v209 = vld [vmem:[%s1 + $0x2dc] sm:$0xf]
    %v210 = vld [vmem:[%s1 + $0x2e0] sm:$0xf]
    %v211 = vld [vmem:[%s1 + $0x2e4] sm:$0xf]
    %v212 = vld [vmem:[%s1 + $0x2e8] sm:$0xf]
    %v213 = vld [vmem:[%s1 + $0x2ec] sm:$0xf]
    %v214 = vld [vmem:[%s1 + $0x2f0] sm:$0xf]
    %v215 = vld [vmem:[%s1 + $0x2f4] sm:$0xf]
    %v216 = vld [vmem:[%s1 + $0x2f8] sm:$0xf]
    %v217 = vld [vmem:[%s1 + $0x2fc] sm:$0xf]
    %v218 = vld [vmem:[%s1 + $0x300] sm:$0xf]
    %v219 = vld [vmem:[%s1 + $0x304] sm:$0xf]
    %v220 = vld [vmem:[%s1 + $0x308] sm:$0xf]
    %v221 = vld [vmem:[%s1 + $0x30c] sm:$0xf]
    %v222 = vld [vmem:[%s1 + $0x310] sm:$0xf]
    %v223 = vld [vmem:[%s1 + $0x314] sm:$0xf]
    %v224 = vld [vmem:[%s1 + $0x318] sm:$0xf]
    %v225 = vld [vmem:[%s1 + $0x31c] sm:$0xf]
    %v226 = vld [vmem:[%s1 + $0x320] sm:$0xf]
    %v227 = vld [vmem:[%s1 + $0x324] sm:$0xf]
    %v228 = vld [vmem:[%s1 + $0x328] sm:$0xf]
    %v229 = vld [vmem:[%s1 + $0x32c] sm:$0xf]
    %v230 = vld [vmem:[%s1 + $0x330] sm:$0xf]
    %v231 = vld [vmem:[%s1 + $0x334] sm:$0xf]
    %v232 = vld [vmem:[%s1 + $0x338] sm:$0xf]
    %v233 = vld [vmem:[%s1 + $0x33c] sm:$0xf]
    %v234 = vld [vmem:[%s1 + $0x340] sm:$0xf]
    %v235 = vld [vmem:[%s1 + $0x344] sm:$0xf]
    %v236 = vld [vmem:[%s1 + $0x348] sm:$0xf]
    %v237 = vld [vmem:[%s1 + $0x34c] sm:$0xf]
    %v238 = vld [vmem:[%s1 + $0x350] sm:$0xf]
    %v239 = vld [vmem:[%s1 + $0x354] sm:$0xf]
    %v240 = vld [vmem:[%s1 + $0x358] sm:$0xf]
    %v241 = vld [vmem:[%s1 + $0x35c] sm:$0xf]
    %v242 = vld [vmem:[%s1 + $0x360] sm:$0xf]
    %v243 = vld [vmem:[%s1 + $0x364] sm:$0xf]
    %v244 = vld [vmem:[%s1 + $0x368] sm:$0xf]
    %v245 = vld [vmem:[%s1 + $0x36c] sm:$0xf]
    %v246 = vld [vmem:[%s1 + $0x370] sm:$0xf]
    %v247 = vld [vmem:[%s1 + $0x374] sm:$0xf]
    %v248 = vld [vmem:[%s1 + $0x378] sm:$0xf]
    %v249 = vld [vmem:[%s1 + $0x37c] sm:$0xf]
    %v250 = vld [vmem:[%s1 + $0x380] sm:$0xf]
    %v251 = vld [vmem:[%s1 + $0x384] sm:$0xf]
    %v252 = vld [vmem:[%s1 + $0x388] sm:$0xf]
    %v253 = vld [vmem:[%s1 + $0x38c] sm:$0xf]
    %v254 = vld [vmem:[%s1 + $0x390] sm:$0xf]
    %v255 = vld [vmem:[%s1 + $0x394] sm:$0xf]
    %v256 = vld [vmem:[%s1 + $0x398] sm:$0xf]
    %v257 = vld [vmem:[%s1 + $0x39c] sm:$0xf]
    %v258 = vld [vmem:[%s1 + $0x3a0] sm:$0xf]
    %v259 = vld [vmem:[%s1 + $0x3a4] sm:$0xf]
    %v260 = vld [vmem:[%s1 + $0x3a8] sm:$0xf]
    %v261 = vld [vmem:[%s1 + $0x3ac] sm:$0xf]
    %v262 = vld [vmem:[%s1 + $0x3b0] sm:$0xf]
    %v263 = vld [vmem:[%s1 + $0x3b4] sm:$0xf]
    %v264 = vld [vmem:[%s1 + $0x3b8] sm:$0xf]
    %v265 = vld [vmem:[%s1 + $0x3bc] sm:$0xf]
    %v266 = vld [vmem:[%s1 + $0x3c0] sm:$0xf]
    %v267 = vld [vmem:[%s1 + $0x3c4] sm:$0xf]
    %v268 = vld [vmem:[%s1 + $0x3c8] sm:$0xf]
    %v269 = vld [vmem:[%s1 + $0x3cc] sm:$0xf]
    %v270 = vld [vmem:[%s1 + $0x3d0] sm:$0xf]
    %v271 = vld [vmem:[%s1 + $0x3d4] sm:$0xf]
    %v272 = vld [vmem:[%s1 + $0x3d8] sm:$0xf]
    %v273 = vld [vmem:[%s1 + $0x3dc] sm:$0xf]
    %v274 = vld [vmem:[%s1 + $0x3e0] sm:$0xf]
    %v275 = vld [vmem:[%s1 + $0x3e4] sm:$0xf]
    %v276 = vld [vmem:[%s1 + $0x3e8] sm:$0xf]
    %v277 = vld [vmem:[%s1 + $0x3ec] sm:$0xf]
    %v278 = vld [vmem:[%s1 + $0x3f0] sm:$0xf]
    %v279 = vld [vmem:[%s1 + $0x3f4] sm:$0xf]
    %v280 = vld [vmem:[%s1 + $0x3f8] sm:$0xf]
    %v281 = vld [vmem:[%s1 + $0x3fc] sm:$0xf]
    %v282 = vld [vmem:[%s1 + $0x400] sm:$0xf]
    %v283 = vld [vmem:[%s1 + $0x404] sm:$0xf]
    %v284 = vld [vmem:[%s1 + $0x408] sm:$0xf]
    %v285 = vld [vmem:[%s1 + $0x40c] sm:$0xf]
    %v286 = vld [vmem:[%s1 + $0x410] sm:$0xf]
    %v287 = vld [vmem:[%s1 + $0x414] sm:$0xf]
    %v288 = vld [vmem:[%s1 + $0x418] sm:$0xf]
    %v289 = vld [vmem:[%s1 + $0x41c] sm:$0xf]
    %v290 = vld [vmem:[%s1 + $0x420] sm:$0xf]
    %v291 = vld [vmem:[%s1 + $0x424] sm:$0xf]
    %v292 = vld [vmem:[%s1 + $0x428] sm:$0xf]
    %v293 = vld [vmem:[%s1 + $0x42c] sm:$0xf]
    %v294 = vld [vmem:[%s1 + $0x430] sm:$0xf]
    %v295 = vld [vmem:[%s1 + $0x434] sm:$0xf]
    %v296 = vld [vmem:[%s1 + $0x438] sm:$0xf]
    %v297 = vld [vmem:[%s1 + $0x43c] sm:$0xf]
    %v298 = vld [vmem:[%s1 + $0x440] sm:$0xf]
    %v299 = vld [vmem:[%s1 + $0x444] sm:$0xf]
    %v300 = vld [vmem:[%s1 + $0x448] sm:$0xf]
    %v301 = vld [vmem:[%s1 + $0x44c] sm:$0xf]
    %v302 = vld [vmem:[%s1 + $0x450] sm:$0xf]
    %v303 = vld [vmem:[%s1 + $0x454] sm:$0xf]
    %v304 = vld [vmem:[%s1 + $0x458] sm:$0xf]
    %v305 = vld [vmem:[%s1 + $0x45c] sm:$0xf]
    %v306 = vld [vmem:[%s1 + $0x460] sm:$0xf]
    %v307 = vld [vmem:[%s1 + $0x464] sm:$0xf]
    %v308 = vld [vmem:[%s1 + $0x468] sm:$0xf]
    %v309 = vld [vmem:[%s1 + $0x46c] sm:$0xf]
    %v310 = vld [vmem:[%s1 + $0x470] sm:$0xf]
    %v311 = vld [vmem:[%s1 + $0x474] sm:$0xf]
    %v312 = vld [vmem:[%s1 + $0x478] sm:$0xf]
    %v313 = vld [vmem:[%s1 + $0x47c] sm:$0xf]
    %v314 = vld [vmem:[%s1 + $0x480] sm:$0xf]
    %v315 = vld [vmem:[%s1 + $0x484] sm:$0xf]
    %v316 = vld [vmem:[%s1 + $0x488] sm:$0xf]
    %v317 = vld [vmem:[%s1 + $0x48c] sm:$0xf]
    %v318 = vld [vmem:[%s1 + $0x490] sm:$0xf]
    %v319 = vld [vmem:[%s1 + $0x494] sm:$0xf]
    %v320 = vld [vmem:[%s1 + $0x498] sm:$0xf]
    %v321 = vld [vmem:[%s1 + $0x49c] sm:$0xf]
    %v322 = vld [vmem:[%s1 + $0x4a0] sm:$0xf]
    %v323 = vld [vmem:[%s1 + $0x4a4] sm:$0xf]
    %v324 = vld [vmem:[%s1 + $0x4a8] sm:$0xf]
    %v325 = vld [vmem:[%s1 + $0x4ac] sm:$0xf]
    %v326 = vld [vmem:[%s1 + $0x4b0] sm:$0xf]
    %v327 = vld [vmem:[%s1 + $0x4b4] sm:$0xf]
    %v328 = vld [vmem:[%s1 + $0x4b8] sm:$0xf]
    %v329 = vld [vmem:[%s1 + $0x4bc] sm:$0xf]
    %v330 = vld [vmem:[%s1 + $0x4c0] sm:$0xf]
    %v331 = vld [vmem:[%s1 + $0x4c4] sm:$0xf]
    %v332 = vld [vmem:[%s1 + $0x4c8] sm:$0xf]
    %v333 = vld [vmem:[%s1 + $0x4cc] sm:$0xf]
    %v334 = vld [vmem:[%s1 + $0x4d0] sm:$0xf]
    %v335 = vld [vmem:[%s1 + $0x4d4] sm:$0xf]
    %v336 = vld [vmem:[%s1 + $0x4d8] sm:$0xf]
    %v337 = vld [vmem:[%s1 + $0x4dc] sm:$0xf]
    %v338 = vld [vmem:[%s1 + $0x4e0] sm:$0xf]
    %v339 = vld [vmem:[%s1 + $0x4e4] sm:$0xf]
    %v340 = vld [vmem:[%s1 + $0x4e8] sm:$0xf]
    %v341 = vld [vmem:[%s1 + $0x4ec] sm:$0xf]
    %v342 = vld [vmem:[%s1 + $0x4f0] sm:$0xf]
    %v343 = vld [vmem:[%s1 + $0x4f4] sm:$0xf]
    %v344 = vld [vmem:[%s1 + $0x4f8] sm:$0xf]
    %v345 = vld [vmem:[%s1 + $0x4fc] sm:$0xf]
    %v346 = vld [vmem:[%s1 + $0x500] sm:$0xf]
    %v347 = vld [vmem:[%s1 + $0x504] sm:$0xf]
    %v348 = vld [vmem:[%s1 + $0x508] sm:$0xf]
    %v349 = vld [vmem:[%s1 + $0x50c] sm:$0xf]
    %v350 = vld [vmem:[%s1 + $0x510] sm:$0xf]
    %v351 = vld [vmem:[%s1 + $0x514] sm:$0xf]
    %v352 = vld [vmem:[%s1 + $0x518] sm:$0xf]
    %v353 = vld [vmem:[%s1 + $0x51c] sm:$0xf]
    %v354 = vld [vmem:[%s1 + $0x520] sm:$0xf]
    %v355 = vld [vmem:[%s1 + $0x524] sm:$0xf]
    %v356 = vld [vmem:[%s1 + $0x528] sm:$0xf]
    %v357 = vld [vmem:[%s1 + $0x52c] sm:$0xf]
    %v358 = vld [vmem:[%s1 + $0x530] sm:$0xf]
    %v359 = vld [vmem:[%s1 + $0x534] sm:$0xf]
    %v360 = vld [vmem:[%s1 + $0x538] sm:$0xf]
    %v361 = vld [vmem:[%s1 + $0x53c] sm:$0xf]
    %v362 = vld [vmem:[%s1 + $0x540] sm:$0xf]
    %v363 = vld [vmem:[%s1 + $0x544] sm:$0xf]
    %v364 = vld [vmem:[%s1 + $0x548] sm:$0xf]
    %v365 = vld [vmem:[%s1 + $0x54c] sm:$0xf]
    %v366 = vld [vmem:[%s1 + $0x550] sm:$0xf]
    %v367 = vld [vmem:[%s1 + $0x554] sm:$0xf]
    %v368 = vld [vmem:[%s1 + $0x558] sm:$0xf]
    %v369 = vld [vmem:[%s1 + $0x55c] sm:$0xf]
    %v370 = vld [vmem:[%s1 + $0x560] sm:$0xf]
    %v371 = vld [vmem:[%s1 + $0x564] sm:$0xf]
    %v372 = vld [vmem:[%s1 + $0x568] sm:$0xf]
    %v373 = vld [vmem:[%s1 + $0x56c] sm:$0xf]
    %v374 = vld [vmem:[%s1 + $0x570] sm:$0xf]
    %v375 = vld [vmem:[%s1 + $0x574] sm:$0xf]
    %v376 = vld [vmem:[%s1 + $0x578] sm:$0xf]
    %v377 = vld [vmem:[%s1 + $0x57c] sm:$0xf]
    %v378 = vld [vmem:[%s1 + $0x580] sm:$0xf]
    %v379 = vld [vmem:[%s1 + $0x584] sm:$0xf]
    %v380 = vld [vmem:[%s1 + $0x588] sm:$0xf]
    %v381 = vld [vmem:[%s1 + $0x58c] sm:$0xf]
    %v382 = vld [vmem:[%s1 + $0x590] sm:$0xf]
    %v383 = vld [vmem:[%s1 + $0x594] sm:$0xf]
    %v384 = vld [vmem:[%s1 + $0x598] sm:$0xf]
    %v385 = vld [vmem:[%s1 + $0x59c] sm:$0xf]
    %v386 = vld [vmem:[%s1 + $0x5a0] sm:$0xf]
    %v387 = vld [vmem:[%s1 + $0x5a4] sm:$0xf]
    %v388 = vld [vmem:[%s1 + $0x5a8] sm:$0xf]
    %v389 = vld [vmem:[%s1 + $0x5ac] sm:$0xf]
    %v390 = vld [vmem:[%s1 + $0x5b0] sm:$0xf]
    %v391 = vld [vmem:[%s1 + $0x5b4] sm:$0xf]
    %v392 = vld [vmem:[%s1 + $0x5b8] sm:$0xf]
    %v393 = vld [vmem:[%s1 + $0x5bc] sm:$0xf]
    %v394 = vld [vmem:[%s1 + $0x5c0] sm:$0xf]
    %v395 = vld [vmem:[%s1 + $0x5c4] sm:$0xf]
    %v396 = vld [vmem:[%s1 + $0x5c8] sm:$0xf]
    %v397 = vld [vmem:[%s1 + $0x5cc] sm:$0xf]
    %v398 = vld [vmem:[%s1 + $0x5d0] sm:$0xf]
    %v399 = vld [vmem:[%s1 + $0x5d4] sm:$0xf]
    %v400 = vld [vmem:[%s1 + $0x5d8] sm:$0xf]
    %v401 = vld [vmem:[%s1 + $0x5dc] sm:$0xf]
    %v402 = vld [vmem:[%s1 + $0x5e0] sm:$0xf]
    %v403 = vld [vmem:[%s1 + $0x5e4] sm:$0xf]
    %v404 = vld [vmem:[%s1 + $0x5e8] sm:$0xf]
    %v405 = vld [vmem:[%s1 + $0x5ec] sm:$0xf]
    %v406 = vld [vmem:[%s1 + $0x5f0] sm:$0xf]
    %v407 = vld [vmem:[%s1 + $0x5f4] sm:$0xf]
    %v408 = vld [vmem:[%s1 + $0x5f8] sm:$0xf]
    %v409 = vld [vmem:[%s1 + $0x5fc] sm:$0xf]
    %v410 = vld [vmem:[%s1 + $0x600] sm:$0xf]
    %v411 = vld [vmem:[%s1 + $0x604] sm:$0xf]
    %v412 = vld [vmem:[%s1 + $0x608] sm:$0xf]
    %v413 = vld [vmem:[%s1 + $0x60c] sm:$0xf]
    %v414 = vld [vmem:[%s1 + $0x610] sm:$0xf]
    %v415 = vld [vmem:[%s1 + $0x614] sm:$0xf]
    %v416 = vld [vmem:[%s1 + $0x618] sm:$0xf]
    %v417 = vld [vmem:[%s1 + $0x61c] sm:$0xf]
    %v418 = vld [vmem:[%s2] sm:$0x1]
    %v420 = vlaneseq
    %v421 = vshrl.u32 %v420, 7
    %v422 = vsub.s32 0, %v421
    %v423 = vrot.slane %v418, %v422
    %v429 = vcombine.high %v22, %v22
    %v431 = vunpack.c.l.s4 1966171168
    %v432 = vunpack.c.0.s8 %v431
    %v433 = vlaneseq
    %v434 = vshrl.u32 %v433, 7
    %v435 = vsub.s32 %v432, %v434
    %v436 = vrot.slane %v22, %v435
    %v438 = vunpack.c.l.s4 1966171168
    %v439 = vunpack.c.0.s8 %v438
    %v440 = vlaneseq
    %v441 = vshrl.u32 %v440, 7
    %v442 = vsub.s32 %v439, %v441
    %v443 = vrot.slane %v429, %v442
    %v444 = vcombine.high %v436, %v436
    %v445 = vcombine.high %v443, %v443
    %v447 = vunpack.c.l.s4 1966171168
    %v448 = vunpack.c.0.s8 %v447
    %v449 = vlaneseq
    %v450 = vshrl.u32 %v449, 7
    %v451 = vsub.s32 %v448, %v450
    %v452 = vrot.slane %v436, %v451
    %v454 = vunpack.c.l.s4 1966171168
    %v455 = vunpack.c.0.s8 %v454
    %v456 = vlaneseq
    %v457 = vshrl.u32 %v456, 7
    %v458 = vsub.s32 %v455, %v457
    %v459 = vrot.slane %v443, %v458
    %v461 = vunpack.c.l.s4 1966171168
    %v462 = vunpack.c.0.s8 %v461
    %v463 = vlaneseq
    %v464 = vshrl.u32 %v463, 7
    %v465 = vsub.s32 %v462, %v464
    %v466 = vrot.slane %v444, %v465
    %v468 = vunpack.c.l.s4 1966171168
    %v469 = vunpack.c.0.s8 %v468
    %v470 = vlaneseq
    %v471 = vshrl.u32 %v470, 7
    %v472 = vsub.s32 %v469, %v471
    %v473 = vrot.slane %v445, %v472
    %v474 = vcombine.high %v452, %v452
    %v475 = vcombine.high %v459, %v459
    %v476 = vcombine.high %v466, %v466
    %v477 = vcombine.high %v473, %v473
    %v478 = vcombine.high %v23, %v23
    %v480 = vunpack.c.l.s4 1966171168
    %v481 = vunpack.c.0.s8 %v480
    %v482 = vlaneseq
    %v483 = vshrl.u32 %v482, 7
    %v484 = vsub.s32 %v481, %v483
    %v485 = vrot.slane %v23, %v484
    %v487 = vunpack.c.l.s4 1966171168
    %v488 = vunpack.c.0.s8 %v487
    %v489 = vlaneseq
    %v490 = vshrl.u32 %v489, 7
    %v491 = vsub.s32 %v488, %v490
    %v492 = vrot.slane %v478, %v491
    %v493 = vcombine.high %v485, %v485
    %v494 = vcombine.high %v492, %v492
    %v496 = vunpack.c.l.s4 1966171168
    %v497 = vunpack.c.0.s8 %v496
    %v498 = vlaneseq
    %v499 = vshrl.u32 %v498, 7
    %v500 = vsub.s32 %v497, %v499
    %v501 = vrot.slane %v485, %v500
    %v503 = vunpack.c.l.s4 1966171168
    %v504 = vunpack.c.0.s8 %v503
    %v505 = vlaneseq
    %v506 = vshrl.u32 %v505, 7
    %v507 = vsub.s32 %v504, %v506
    %v508 = vrot.slane %v492, %v507
    %v510 = vunpack.c.l.s4 1966171168
    %v511 = vunpack.c.0.s8 %v510
    %v512 = vlaneseq
    %v513 = vshrl.u32 %v512, 7
    %v514 = vsub.s32 %v511, %v513
    %v515 = vrot.slane %v493, %v514
    %v517 = vunpack.c.l.s4 1966171168
    %v518 = vunpack.c.0.s8 %v517
    %v519 = vlaneseq
    %v520 = vshrl.u32 %v519, 7
    %v521 = vsub.s32 %v518, %v520
    %v522 = vrot.slane %v494, %v521
    %v523 = vcombine.high %v501, %v501
    %v524 = vcombine.high %v508, %v508
    %v525 = vcombine.high %v515, %v515
    %v526 = vcombine.high %v522, %v522
    %v527 = vcombine.high %v24, %v24
    %v529 = vunpack.c.l.s4 1966171168
    %v530 = vunpack.c.0.s8 %v529
    %v531 = vlaneseq
    %v532 = vshrl.u32 %v531, 7
    %v533 = vsub.s32 %v530, %v532
    %v534 = vrot.slane %v24, %v533
    %v536 = vunpack.c.l.s4 1966171168
    %v537 = vunpack.c.0.s8 %v536
    %v538 = vlaneseq
    %v539 = vshrl.u32 %v538, 7
    %v540 = vsub.s32 %v537, %v539
    %v541 = vrot.slane %v527, %v540
    %v542 = vcombine.high %v534, %v534
    %v543 = vcombine.high %v541, %v541
    %v545 = vunpack.c.l.s4 1966171168
    %v546 = vunpack.c.0.s8 %v545
    %v547 = vlaneseq
    %v548 = vshrl.u32 %v547, 7
    %v549 = vsub.s32 %v546, %v548
    %v550 = vrot.slane %v534, %v549
    %v552 = vunpack.c.l.s4 1966171168
    %v553 = vunpack.c.0.s8 %v552
    %v554 = vlaneseq
    %v555 = vshrl.u32 %v554, 7
    %v556 = vsub.s32 %v553, %v555
    %v557 = vrot.slane %v541, %v556
    %v559 = vunpack.c.l.s4 1966171168
    %v560 = vunpack.c.0.s8 %v559
    %v561 = vlaneseq
    %v562 = vshrl.u32 %v561, 7
    %v563 = vsub.s32 %v560, %v562
    %v564 = vrot.slane %v542, %v563
    %v566 = vunpack.c.l.s4 1966171168
    %v567 = vunpack.c.0.s8 %v566
    %v568 = vlaneseq
    %v569 = vshrl.u32 %v568, 7
    %v570 = vsub.s32 %v567, %v569
    %v571 = vrot.slane %v543, %v570
    %v572 = vcombine.high %v550, %v550
    %v573 = vcombine.high %v557, %v557
    %v574 = vcombine.high %v564, %v564
    %v575 = vcombine.high %v571, %v571
    %v577 = vunpack.c.l.s4 1966171168
    %v578 = vunpack.c.0.s8 %v577
    %v579 = vlaneseq
    %v580 = vshrl.u32 %v579, 7
    %v581 = vsub.s32 %v578, %v580
    %v582 = vrot.slane %v25, %v581
    %v584 = vunpack.c.l.s4 1966171168
    %v585 = vunpack.c.0.s8 %v584
    %v586 = vlaneseq
    %v587 = vshrl.u32 %v586, 7
    %v588 = vsub.s32 %v585, %v587
    %v589 = vrot.slane %v582, %v588
    %v1006 = vunpack.c.l.b16 %v26
    %v1007 = vunpack.c.l.b16 %v27
    %v1008 = vunpack.c.l.b16 %v28
    %v1009 = vunpack.c.l.b16 %v29
    %v1010 = vunpack.c.l.b16 %v30
    %v1011 = vunpack.c.l.b16 %v31
    %v1012 = vunpack.c.l.b16 %v32
    %v1013 = vunpack.c.l.b16 %v33
    %v1014 = vunpack.c.l.b16 %v34
    %v1015 = vunpack.c.l.b16 %v35
    %v1016 = vunpack.c.l.b16 %v36
    %v1017 = vunpack.c.l.b16 %v37
    %v1018 = vunpack.c.l.b16 %v38
    %v1019 = vunpack.c.l.b16 %v39
    %v1020 = vunpack.c.l.b16 %v40
    %v1021 = vunpack.c.l.b16 %v41
    %v1022 = vunpack.c.l.b16 %v42
    %v1023 = vunpack.c.l.b16 %v43
    %v1024 = vunpack.c.l.b16 %v44
    %v1025 = vunpack.c.l.b16 %v45
    %v1026 = vunpack.c.l.b16 %v46
    %v1027 = vunpack.c.l.b16 %v47
    %v1028 = vunpack.c.l.b16 %v48
    %v1029 = vunpack.c.l.b16 %v49
    %v1030 = vunpack.c.l.b16 %v50
    %v1031 = vunpack.c.l.b16 %v51
    %v1032 = vunpack.c.l.b16 %v52
    %v1033 = vunpack.c.l.b16 %v53
    %v1034 = vunpack.c.l.b16 %v54
    %v1035 = vunpack.c.l.b16 %v55
    %v1036 = vunpack.c.l.b16 %v56
    %v1037 = vunpack.c.l.b16 %v57
    %v1038 = vunpack.c.l.b16 %v58
    %v1039 = vunpack.c.l.b16 %v59
    %v1040 = vunpack.c.l.b16 %v60
    %v1041 = vunpack.c.l.b16 %v61
    %v1042 = vunpack.c.l.b16 %v62
    %v1043 = vunpack.c.l.b16 %v63
    %v1044 = vunpack.c.l.b16 %v64
    %v1045 = vunpack.c.l.b16 %v65
    %v1046 = vunpack.c.l.b16 %v66
    %v1047 = vunpack.c.l.b16 %v67
    %v1048 = vunpack.c.l.b16 %v68
    %v1049 = vunpack.c.l.b16 %v69
    %v1050 = vunpack.c.l.b16 %v70
    %v1051 = vunpack.c.l.b16 %v71
    %v1052 = vunpack.c.l.b16 %v72
    %v1053 = vunpack.c.l.b16 %v73
    %v1054 = vunpack.c.l.b16 %v74
    %v1055 = vunpack.c.l.b16 %v75
    %v1056 = vunpack.c.l.b16 %v76
    %v1057 = vunpack.c.l.b16 %v77
    %v1058 = vunpack.c.l.b16 %v78
    %v1059 = vunpack.c.l.b16 %v79
    %v1060 = vunpack.c.l.b16 %v80
    %v1061 = vunpack.c.l.b16 %v81
    %v1062 = vunpack.c.l.b16 %v82
    %v1063 = vunpack.c.l.b16 %v83
    %v1064 = vunpack.c.l.b16 %v84
    %v1065 = vunpack.c.l.b16 %v85
    %v1066 = vunpack.c.l.b16 %v86
    %v1067 = vunpack.c.l.b16 %v87
    %v1068 = vunpack.c.l.b16 %v88
    %v1069 = vunpack.c.l.b16 %v89
    %v1070 = vunpack.c.l.b16 %v90
    %v1071 = vunpack.c.l.b16 %v91
    %v1072 = vunpack.c.l.b16 %v92
    %v1073 = vunpack.c.l.b16 %v93
    %v1074 = vunpack.c.l.b16 %v94
    %v1075 = vunpack.c.l.b16 %v95
    %v1076 = vunpack.c.l.b16 %v96
    %v1077 = vunpack.c.l.b16 %v97
    %v1078 = vunpack.c.l.b16 %v98
    %v1079 = vunpack.c.l.b16 %v99
    %v1080 = vunpack.c.l.b16 %v100
    %v1081 = vunpack.c.l.b16 %v101
    %v1082 = vunpack.c.l.b16 %v102
    %v1083 = vunpack.c.l.b16 %v103
    %v1084 = vunpack.c.l.b16 %v104
    %v1085 = vunpack.c.l.b16 %v105
    %v1086 = vunpack.c.l.b16 %v106
    %v1087 = vunpack.c.l.b16 %v107
    %v1088 = vunpack.c.l.b16 %v108
    %v1089 = vunpack.c.l.b16 %v109
    %v1090 = vunpack.c.l.b16 %v110
    %v1091 = vunpack.c.l.b16 %v111
    %v1092 = vunpack.c.l.b16 %v112
    %v1093 = vunpack.c.l.b16 %v113
    %v1094 = vunpack.c.l.b16 %v114
    %v1095 = vunpack.c.l.b16 %v115
    %v1096 = vunpack.c.l.b16 %v116
    %v1097 = vunpack.c.l.b16 %v117
    %v1098 = vunpack.c.l.b16 %v118
    %v1099 = vunpack.c.l.b16 %v119
    %v1100 = vunpack.c.l.b16 %v120
    %v1101 = vunpack.c.l.b16 %v121
    %v1102 = vunpack.c.l.b16 %v122
    %v1103 = vunpack.c.l.b16 %v123
    %v1104 = vunpack.c.l.b16 %v124
    %v1105 = vunpack.c.l.b16 %v125
    %v1106 = vunpack.c.l.b16 %v126
    %v1107 = vunpack.c.l.b16 %v127
    %v1108 = vunpack.c.l.b16 %v128
    %v1109 = vunpack.c.l.b16 %v129
    %v1110 = vunpack.c.l.b16 %v130
    %v1111 = vunpack.c.l.b16 %v131
    %v1112 = vunpack.c.l.b16 %v132
    %v1113 = vunpack.c.l.b16 %v133
    %v1114 = vunpack.c.l.b16 %v134
    %v1115 = vunpack.c.l.b16 %v135
    %v1116 = vunpack.c.l.b16 %v136
    %v1117 = vunpack.c.l.b16 %v137
    %v1118 = vunpack.c.l.b16 %v138
    %v1119 = vunpack.c.l.b16 %v139
    %v1120 = vunpack.c.l.b16 %v140
    %v1121 = vunpack.c.l.b16 %v141
    %v1122 = vunpack.c.l.b16 %v142
    %v1123 = vunpack.c.l.b16 %v143
    %v1124 = vunpack.c.l.b16 %v144
    %v1125 = vunpack.c.l.b16 %v145
    %v1126 = vunpack.c.l.b16 %v146
    %v1127 = vunpack.c.l.b16 %v147
    %v1128 = vunpack.c.l.b16 %v148
    %v1129 = vunpack.c.l.b16 %v149
    %v1130 = vunpack.c.l.b16 %v150
    %v1131 = vunpack.c.l.b16 %v151
    %v1132 = vunpack.c.l.b16 %v152
    %v1133 = vunpack.c.l.b16 %v153
    %v1134 = vunpack.c.l.b16 %v154
    %v1135 = vunpack.c.l.b16 %v155
    %v1136 = vunpack.c.l.b16 %v156
    %v1137 = vunpack.c.l.b16 %v157
    %v1138 = vunpack.c.l.b16 %v158
    %v1139 = vunpack.c.l.b16 %v159
    %v1140 = vunpack.c.l.b16 %v160
    %v1141 = vunpack.c.l.b16 %v161
    %v1142 = vunpack.c.l.b16 %v162
    %v1143 = vunpack.c.l.b16 %v163
    %v1144 = vunpack.c.l.b16 %v164
    %v1145 = vunpack.c.l.b16 %v165
    %v1146 = vunpack.c.l.b16 %v166
    %v1147 = vunpack.c.l.b16 %v167
    %v1148 = vunpack.c.l.b16 %v168
    %v1149 = vunpack.c.l.b16 %v169
    %v1150 = vunpack.c.l.b16 %v170
    %v1151 = vunpack.c.l.b16 %v171
    %v1152 = vunpack.c.l.b16 %v172
    %v1153 = vunpack.c.l.b16 %v173
    %v1154 = vunpack.c.l.b16 %v174
    %v1155 = vunpack.c.l.b16 %v175
    %v1156 = vunpack.c.l.b16 %v176
    %v1157 = vunpack.c.l.b16 %v177
    %v1158 = vunpack.c.l.b16 %v178
    %v1159 = vunpack.c.l.b16 %v179
    %v1160 = vunpack.c.l.b16 %v180
    %v1161 = vunpack.c.l.b16 %v181
    %v1162 = vunpack.c.l.b16 %v182
    %v1163 = vunpack.c.l.b16 %v183
    %v1164 = vunpack.c.l.b16 %v184
    %v1165 = vunpack.c.l.b16 %v185
    %v1166 = vunpack.c.l.b16 %v186
    %v1167 = vunpack.c.l.b16 %v187
    %v1168 = vunpack.c.l.b16 %v188
    %v1169 = vunpack.c.l.b16 %v189
    %v1170 = vunpack.c.l.b16 %v190
    %v1171 = vunpack.c.l.b16 %v191
    %v1172 = vunpack.c.l.b16 %v192
    %v1173 = vunpack.c.l.b16 %v193
    %v1174 = vunpack.c.l.b16 %v194
    %v1175 = vunpack.c.l.b16 %v195
    %v1176 = vunpack.c.l.b16 %v196
    %v1177 = vunpack.c.l.b16 %v197
    %v1178 = vunpack.c.l.b16 %v198
    %v1179 = vunpack.c.l.b16 %v199
    %v1180 = vunpack.c.l.b16 %v200
    %v1181 = vunpack.c.l.b16 %v201
    %v1182 = vunpack.c.l.b16 %v202
    %v1183 = vunpack.c.l.b16 %v203
    %v1184 = vunpack.c.l.b16 %v204
    %v1185 = vunpack.c.l.b16 %v205
    %v1186 = vunpack.c.l.b16 %v206
    %v1187 = vunpack.c.l.b16 %v207
    %v1188 = vunpack.c.l.b16 %v208
    %v1189 = vunpack.c.l.b16 %v209
    %v1190 = vunpack.c.l.b16 %v210
    %v1191 = vunpack.c.l.b16 %v211
    %v1192 = vunpack.c.l.b16 %v212
    %v1193 = vunpack.c.l.b16 %v213
    %v1194 = vunpack.c.l.b16 %v214
    %v1195 = vunpack.c.l.b16 %v215
    %v1196 = vunpack.c.l.b16 %v216
    %v1197 = vunpack.c.l.b16 %v217
    %v1198 = vunpack.c.l.b16 %v218
    %v1199 = vunpack.c.l.b16 %v219
    %v1200 = vunpack.c.l.b16 %v220
    %v1201 = vunpack.c.l.b16 %v221
    %v1202 = vunpack.c.l.b16 %v222
    %v1203 = vunpack.c.l.b16 %v223
    %v1204 = vunpack.c.l.b16 %v224
    %v1205 = vunpack.c.l.b16 %v225
    %v1206 = vunpack.c.l.b16 %v226
    %v1207 = vunpack.c.l.b16 %v227
    %v1208 = vunpack.c.l.b16 %v228
    %v1209 = vunpack.c.l.b16 %v229
    %v1210 = vunpack.c.l.b16 %v230
    %v1211 = vunpack.c.l.b16 %v231
    %v1212 = vunpack.c.l.b16 %v232
    %v1213 = vunpack.c.l.b16 %v233
    %v1214 = vunpack.c.l.b16 %v234
    %v1215 = vunpack.c.l.b16 %v235
    %v1216 = vunpack.c.l.b16 %v236
    %v1217 = vunpack.c.l.b16 %v237
    %v1218 = vunpack.c.l.b16 %v238
    %v1219 = vunpack.c.l.b16 %v239
    %v1220 = vunpack.c.l.b16 %v240
    %v1221 = vunpack.c.l.b16 %v241
    %v1222 = vunpack.c.l.b16 %v242
    %v1223 = vunpack.c.l.b16 %v243
    %v1224 = vunpack.c.l.b16 %v244
    %v1225 = vunpack.c.l.b16 %v245
    %v1226 = vunpack.c.l.b16 %v246
    %v1227 = vunpack.c.l.b16 %v247
    %v1228 = vunpack.c.l.b16 %v248
    %v1229 = vunpack.c.l.b16 %v249
    %v1230 = vunpack.c.l.b16 %v250
    %v1231 = vunpack.c.l.b16 %v251
    %v1232 = vunpack.c.l.b16 %v252
    %v1233 = vunpack.c.l.b16 %v253
    %v1234 = vunpack.c.l.b16 %v254
    %v1235 = vunpack.c.l.b16 %v255
    %v1236 = vunpack.c.l.b16 %v256
    %v1237 = vunpack.c.l.b16 %v257
    %v1238 = vunpack.c.l.b16 %v258
    %v1239 = vunpack.c.l.b16 %v259
    %v1240 = vunpack.c.l.b16 %v260
    %v1241 = vunpack.c.l.b16 %v261
    %v1242 = vunpack.c.l.b16 %v262
    %v1243 = vunpack.c.l.b16 %v263
    %v1244 = vunpack.c.l.b16 %v264
    %v1245 = vunpack.c.l.b16 %v265
    %v1246 = vunpack.c.l.b16 %v266
    %v1247 = vunpack.c.l.b16 %v267
    %v1248 = vunpack.c.l.b16 %v268
    %v1249 = vunpack.c.l.b16 %v269
    %v1250 = vunpack.c.l.b16 %v270
    %v1251 = vunpack.c.l.b16 %v271
    %v1252 = vunpack.c.l.b16 %v272
    %v1253 = vunpack.c.l.b16 %v273
    %v1254 = vunpack.c.l.b16 %v274
    %v1255 = vunpack.c.l.b16 %v275
    %v1256 = vunpack.c.l.b16 %v276
    %v1257 = vunpack.c.l.b16 %v277
    %v1258 = vunpack.c.l.b16 %v278
    %v1259 = vunpack.c.l.b16 %v279
    %v1260 = vunpack.c.l.b16 %v280
    %v1261 = vunpack.c.l.b16 %v281
    %v1262 = vunpack.c.l.b16 %v282
    %v1263 = vunpack.c.l.b16 %v283
    %v1264 = vunpack.c.l.b16 %v284
    %v1265 = vunpack.c.l.b16 %v285
    %v1266 = vunpack.c.l.b16 %v286
    %v1267 = vunpack.c.l.b16 %v287
    %v1268 = vunpack.c.l.b16 %v288
    %v1269 = vunpack.c.l.b16 %v289
    %v1270 = vunpack.c.l.b16 %v290
    %v1271 = vunpack.c.l.b16 %v291
    %v1272 = vunpack.c.l.b16 %v292
    %v1273 = vunpack.c.l.b16 %v293
    %v1274 = vunpack.c.l.b16 %v294
    %v1275 = vunpack.c.l.b16 %v295
    %v1276 = vunpack.c.l.b16 %v296
    %v1277 = vunpack.c.l.b16 %v297
    %v1278 = vunpack.c.l.b16 %v298
    %v1279 = vunpack.c.l.b16 %v299
    %v1280 = vunpack.c.l.b16 %v300
    %v1281 = vunpack.c.l.b16 %v301
    %v1282 = vunpack.c.l.b16 %v302
    %v1283 = vunpack.c.l.b16 %v303
    %v1284 = vunpack.c.l.b16 %v304
    %v1285 = vunpack.c.l.b16 %v305
    %v1286 = vunpack.c.l.b16 %v306
    %v1287 = vunpack.c.l.b16 %v307
    %v1288 = vunpack.c.l.b16 %v308
    %v1289 = vunpack.c.l.b16 %v309
    %v1290 = vunpack.c.l.b16 %v310
    %v1291 = vunpack.c.l.b16 %v311
    %v1292 = vunpack.c.l.b16 %v312
    %v1293 = vunpack.c.l.b16 %v313
    %v1294 = vunpack.c.l.b16 %v314
    %v1295 = vunpack.c.l.b16 %v315
    %v1296 = vunpack.c.l.b16 %v316
    %v1297 = vunpack.c.l.b16 %v317
    %v1298 = vunpack.c.l.b16 %v318
    %v1299 = vunpack.c.l.b16 %v319
    %v1300 = vunpack.c.l.b16 %v320
    %v1301 = vunpack.c.l.b16 %v321
    %v1302 = vunpack.c.l.b16 %v322
    %v1303 = vunpack.c.l.b16 %v323
    %v1304 = vunpack.c.l.b16 %v324
    %v1305 = vunpack.c.l.b16 %v325
    %v1306 = vunpack.c.l.b16 %v326
    %v1307 = vunpack.c.l.b16 %v327
    %v1308 = vunpack.c.l.b16 %v328
    %v1309 = vunpack.c.l.b16 %v329
    %v1310 = vunpack.c.l.b16 %v330
    %v1311 = vunpack.c.l.b16 %v331
    %v1312 = vunpack.c.l.b16 %v332
    %v1313 = vunpack.c.l.b16 %v333
    %v1314 = vunpack.c.l.b16 %v334
    %v1315 = vunpack.c.l.b16 %v335
    %v1316 = vunpack.c.l.b16 %v336
    %v1317 = vunpack.c.l.b16 %v337
    %v1318 = vunpack.c.l.b16 %v338
    %v1319 = vunpack.c.l.b16 %v339
    %v1320 = vunpack.c.l.b16 %v340
    %v1321 = vunpack.c.l.b16 %v341
    %v1322 = vunpack.c.l.b16 %v342
    %v1323 = vunpack.c.l.b16 %v343
    %v1324 = vunpack.c.l.b16 %v344
    %v1325 = vunpack.c.l.b16 %v345
    %v1326 = vunpack.c.l.b16 %v346
    %v1327 = vunpack.c.l.b16 %v347
    %v1328 = vunpack.c.l.b16 %v348
    %v1329 = vunpack.c.l.b16 %v349
    %v1330 = vunpack.c.l.b16 %v350
    %v1331 = vunpack.c.l.b16 %v351
    %v1332 = vunpack.c.l.b16 %v352
    %v1333 = vunpack.c.l.b16 %v353
    %v1334 = vunpack.c.l.b16 %v354
    %v1335 = vunpack.c.l.b16 %v355
    %v1336 = vunpack.c.l.b16 %v356
    %v1337 = vunpack.c.l.b16 %v357
    %v1338 = vunpack.c.l.b16 %v358
    %v1339 = vunpack.c.l.b16 %v359
    %v1340 = vunpack.c.l.b16 %v360
    %v1341 = vunpack.c.l.b16 %v361
    %v1342 = vunpack.c.l.b16 %v362
    %v1343 = vunpack.c.l.b16 %v363
    %v1344 = vunpack.c.l.b16 %v364
    %v1345 = vunpack.c.l.b16 %v365
    %v1346 = vunpack.c.l.b16 %v366
    %v1347 = vunpack.c.l.b16 %v367
    %v1348 = vunpack.c.l.b16 %v368
    %v1349 = vunpack.c.l.b16 %v369
    %v1350 = vunpack.c.l.b16 %v370
    %v1351 = vunpack.c.l.b16 %v371
    %v1352 = vunpack.c.l.b16 %v372
    %v1353 = vunpack.c.l.b16 %v373
    %v1354 = vunpack.c.l.b16 %v374
    %v1355 = vunpack.c.l.b16 %v375
    %v1356 = vunpack.c.l.b16 %v376
    %v1357 = vunpack.c.l.b16 %v377
    %v1358 = vunpack.c.l.b16 %v378
    %v1359 = vunpack.c.l.b16 %v379
    %v1360 = vunpack.c.l.b16 %v380
    %v1361 = vunpack.c.l.b16 %v381
    %v1362 = vunpack.c.l.b16 %v382
    %v1363 = vunpack.c.l.b16 %v383
    %v1364 = vunpack.c.l.b16 %v384
    %v1365 = vunpack.c.l.b16 %v385
    %v1366 = vunpack.c.l.b16 %v386
    %v1367 = vunpack.c.l.b16 %v387
    %v1368 = vunpack.c.l.b16 %v388
    %v1369 = vunpack.c.l.b16 %v389
    %v1370 = vunpack.c.l.b16 %v390
    %v1371 = vunpack.c.l.b16 %v391
    %v1372 = vunpack.c.l.b16 %v392
    %v1373 = vunpack.c.l.b16 %v393
    %v1374 = vunpack.c.l.b16 %v394
    %v1375 = vunpack.c.l.b16 %v395
    %v1376 = vunpack.c.l.b16 %v396
    %v1377 = vunpack.c.l.b16 %v397
    %v1378 = vunpack.c.l.b16 %v398
    %v1379 = vunpack.c.l.b16 %v399
    %v1380 = vunpack.c.l.b16 %v400
    %v1381 = vunpack.c.l.b16 %v401
    %v1382 = vunpack.c.l.b16 %v402
    %v1383 = vunpack.c.l.b16 %v403
    %v1384 = vunpack.c.l.b16 %v404
    %v1385 = vunpack.c.l.b16 %v405
    %v1386 = vunpack.c.l.b16 %v406
    %v1387 = vunpack.c.l.b16 %v407
    %v1388 = vunpack.c.l.b16 %v408
    %v1389 = vunpack.c.l.b16 %v409
    %v1390 = vunpack.c.l.b16 %v410
    %v1391 = vunpack.c.l.b16 %v411
    %v1392 = vunpack.c.l.b16 %v412
    %v1393 = vunpack.c.l.b16 %v413
    %v1394 = vunpack.c.l.b16 %v414
    %v1395 = vunpack.c.l.b16 %v415
    %v1396 = vunpack.c.l.b16 %v416
    %v1397 = vunpack.c.l.b16 %v417
    %v1398 = vpack.c.b16 %v1007, %v1006
    %v1399 = vpack.c.b16 %v1009, %v1008
    %v1400 = vpack.c.b16 %v1011, %v1010
    %v1401 = vpack.c.b16 %v1013, %v1012
    %v1402 = vpack.c.b16 %v1015, %v1014
    %v1403 = vpack.c.b16 %v1017, %v1016
    %v1404 = vpack.c.b16 %v1019, %v1018
    %v1405 = vpack.c.b16 %v1021, %v1020
    %v1406 = vpack.c.b16 %v1023, %v1022
    %v1407 = vpack.c.b16 %v1025, %v1024
    %v1408 = vpack.c.b16 %v1027, %v1026
    %v1409 = vpack.c.b16 %v1029, %v1028
    %v1410 = vpack.c.b16 %v1031, %v1030
    %v1411 = vpack.c.b16 %v1033, %v1032
    %v1412 = vpack.c.b16 %v1035, %v1034
    %v1413 = vpack.c.b16 %v1037, %v1036
    %v1414 = vpack.c.b16 %v1039, %v1038
    %v1415 = vpack.c.b16 %v1041, %v1040
    %v1416 = vpack.c.b16 %v1043, %v1042
    %v1417 = vpack.c.b16 %v1045, %v1044
    %v1418 = vpack.c.b16 %v1047, %v1046
    %v1419 = vpack.c.b16 %v1049, %v1048
    %v1420 = vpack.c.b16 %v1051, %v1050
    %v1421 = vpack.c.b16 %v1053, %v1052
    %v1422 = vpack.c.b16 %v1055, %v1054
    %v1423 = vpack.c.b16 %v1057, %v1056
    %v1424 = vpack.c.b16 %v1059, %v1058
    %v1425 = vpack.c.b16 %v1061, %v1060
    %v1426 = vpack.c.b16 %v1063, %v1062
    %v1427 = vpack.c.b16 %v1065, %v1064
    %v1428 = vpack.c.b16 %v1067, %v1066
    %v1429 = vpack.c.b16 %v1069, %v1068
    %v1430 = vpack.c.b16 %v1071, %v1070
    %v1431 = vpack.c.b16 %v1073, %v1072
    %v1432 = vpack.c.b16 %v1075, %v1074
    %v1433 = vpack.c.b16 %v1077, %v1076
    %v1434 = vpack.c.b16 %v1079, %v1078
    %v1435 = vpack.c.b16 %v1081, %v1080
    %v1436 = vpack.c.b16 %v1083, %v1082
    %v1437 = vpack.c.b16 %v1085, %v1084
    %v1438 = vpack.c.b16 %v1087, %v1086
    %v1439 = vpack.c.b16 %v1089, %v1088
    %v1440 = vpack.c.b16 %v1091, %v1090
    %v1441 = vpack.c.b16 %v1093, %v1092
    %v1442 = vpack.c.b16 %v1095, %v1094
    %v1443 = vpack.c.b16 %v1097, %v1096
    %v1444 = vpack.c.b16 %v1099, %v1098
    %v1445 = vpack.c.b16 %v1101, %v1100
    %v1446 = vpack.c.b16 %v1103, %v1102
    %v1447 = vpack.c.b16 %v1105, %v1104
    %v1448 = vpack.c.b16 %v1107, %v1106
    %v1449 = vpack.c.b16 %v1109, %v1108
    %v1450 = vpack.c.b16 %v1111, %v1110
    %v1451 = vpack.c.b16 %v1113, %v1112
    %v1452 = vpack.c.b16 %v1115, %v1114
    %v1453 = vpack.c.b16 %v1117, %v1116
    %v1454 = vpack.c.b16 %v1119, %v1118
    %v1455 = vpack.c.b16 %v1121, %v1120
    %v1456 = vpack.c.b16 %v1123, %v1122
    %v1457 = vpack.c.b16 %v1125, %v1124
    %v1458 = vpack.c.b16 %v1127, %v1126
    %v1459 = vpack.c.b16 %v1129, %v1128
    %v1460 = vpack.c.b16 %v1131, %v1130
    %v1461 = vpack.c.b16 %v1133, %v1132
    %v1462 = vpack.c.b16 %v1135, %v1134
    %v1463 = vpack.c.b16 %v1137, %v1136
    %v1464 = vpack.c.b16 %v1139, %v1138
    %v1465 = vpack.c.b16 %v1141, %v1140
    %v1466 = vpack.c.b16 %v1143, %v1142
    %v1467 = vpack.c.b16 %v1145, %v1144
    %v1468 = vpack.c.b16 %v1147, %v1146
    %v1469 = vpack.c.b16 %v1149, %v1148
    %v1470 = vpack.c.b16 %v1151, %v1150
    %v1471 = vpack.c.b16 %v1153, %v1152
    %v1472 = vpack.c.b16 %v1155, %v1154
    %v1473 = vpack.c.b16 %v1157, %v1156
    %v1474 = vpack.c.b16 %v1159, %v1158
    %v1475 = vpack.c.b16 %v1161, %v1160
    %v1476 = vpack.c.b16 %v1163, %v1162
    %v1477 = vpack.c.b16 %v1165, %v1164
    %v1478 = vpack.c.b16 %v1167, %v1166
    %v1479 = vpack.c.b16 %v1169, %v1168
    %v1480 = vpack.c.b16 %v1171, %v1170
    %v1481 = vpack.c.b16 %v1173, %v1172
    %v1482 = vpack.c.b16 %v1175, %v1174
    %v1483 = vpack.c.b16 %v1177, %v1176
    %v1484 = vpack.c.b16 %v1179, %v1178
    %v1485 = vpack.c.b16 %v1181, %v1180
    %v1486 = vpack.c.b16 %v1183, %v1182
    %v1487 = vpack.c.b16 %v1185, %v1184
    %v1488 = vpack.c.b16 %v1187, %v1186
    %v1489 = vpack.c.b16 %v1189, %v1188
    %v1490 = vpack.c.b16 %v1191, %v1190
    %v1491 = vpack.c.b16 %v1193, %v1192
    %v1492 = vpack.c.b16 %v1195, %v1194
    %v1493 = vpack.c.b16 %v1197, %v1196
    %v1494 = vpack.c.b16 %v1199, %v1198
    %v1495 = vpack.c.b16 %v1201, %v1200
    %v1496 = vpack.c.b16 %v1203, %v1202
    %v1497 = vpack.c.b16 %v1205, %v1204
    %v1498 = vpack.c.b16 %v1207, %v1206
    %v1499 = vpack.c.b16 %v1209, %v1208
    %v1500 = vpack.c.b16 %v1211, %v1210
    %v1501 = vpack.c.b16 %v1213, %v1212
    %v1502 = vpack.c.b16 %v1215, %v1214
    %v1503 = vpack.c.b16 %v1217, %v1216
    %v1504 = vpack.c.b16 %v1219, %v1218
    %v1505 = vpack.c.b16 %v1221, %v1220
    %v1506 = vpack.c.b16 %v1223, %v1222
    %v1507 = vpack.c.b16 %v1225, %v1224
    %v1508 = vpack.c.b16 %v1227, %v1226
    %v1509 = vpack.c.b16 %v1229, %v1228
    %v1510 = vpack.c.b16 %v1231, %v1230
    %v1511 = vpack.c.b16 %v1233, %v1232
    %v1512 = vpack.c.b16 %v1235, %v1234
    %v1513 = vpack.c.b16 %v1237, %v1236
    %v1514 = vpack.c.b16 %v1239, %v1238
    %v1515 = vpack.c.b16 %v1241, %v1240
    %v1516 = vpack.c.b16 %v1243, %v1242
    %v1517 = vpack.c.b16 %v1245, %v1244
    %v1518 = vpack.c.b16 %v1247, %v1246
    %v1519 = vpack.c.b16 %v1249, %v1248
    %v1520 = vpack.c.b16 %v1251, %v1250
    %v1521 = vpack.c.b16 %v1253, %v1252
    %v1522 = vpack.c.b16 %v1255, %v1254
    %v1523 = vpack.c.b16 %v1257, %v1256
    %v1524 = vpack.c.b16 %v1259, %v1258
    %v1525 = vpack.c.b16 %v1261, %v1260
    %v1526 = vpack.c.b16 %v1263, %v1262
    %v1527 = vpack.c.b16 %v1265, %v1264
    %v1528 = vpack.c.b16 %v1267, %v1266
    %v1529 = vpack.c.b16 %v1269, %v1268
    %v1530 = vpack.c.b16 %v1271, %v1270
    %v1531 = vpack.c.b16 %v1273, %v1272
    %v1532 = vpack.c.b16 %v1275, %v1274
    %v1533 = vpack.c.b16 %v1277, %v1276
    %v1534 = vpack.c.b16 %v1279, %v1278
    %v1535 = vpack.c.b16 %v1281, %v1280
    %v1536 = vpack.c.b16 %v1283, %v1282
    %v1537 = vpack.c.b16 %v1285, %v1284
    %v1538 = vpack.c.b16 %v1287, %v1286
    %v1539 = vpack.c.b16 %v1289, %v1288
    %v1540 = vpack.c.b16 %v1291, %v1290
    %v1541 = vpack.c.b16 %v1293, %v1292
    %v1542 = vpack.c.b16 %v1295, %v1294
    %v1543 = vpack.c.b16 %v1297, %v1296
    %v1544 = vpack.c.b16 %v1299, %v1298
    %v1545 = vpack.c.b16 %v1301, %v1300
    %v1546 = vpack.c.b16 %v1303, %v1302
    %v1547 = vpack.c.b16 %v1305, %v1304
    %v1548 = vpack.c.b16 %v1307, %v1306
    %v1549 = vpack.c.b16 %v1309, %v1308
    %v1550 = vpack.c.b16 %v1311, %v1310
    %v1551 = vpack.c.b16 %v1313, %v1312
    %v1552 = vpack.c.b16 %v1315, %v1314
    %v1553 = vpack.c.b16 %v1317, %v1316
    %v1554 = vpack.c.b16 %v1319, %v1318
    %v1555 = vpack.c.b16 %v1321, %v1320
    %v1556 = vpack.c.b16 %v1323, %v1322
    %v1557 = vpack.c.b16 %v1325, %v1324
    %v1558 = vpack.c.b16 %v1327, %v1326
    %v1559 = vpack.c.b16 %v1329, %v1328
    %v1560 = vpack.c.b16 %v1331, %v1330
    %v1561 = vpack.c.b16 %v1333, %v1332
    %v1562 = vpack.c.b16 %v1335, %v1334
    %v1563 = vpack.c.b16 %v1337, %v1336
    %v1564 = vpack.c.b16 %v1339, %v1338
    %v1565 = vpack.c.b16 %v1341, %v1340
    %v1566 = vpack.c.b16 %v1343, %v1342
    %v1567 = vpack.c.b16 %v1345, %v1344
    %v1568 = vpack.c.b16 %v1347, %v1346
    %v1569 = vpack.c.b16 %v1349, %v1348
    %v1570 = vpack.c.b16 %v1351, %v1350
    %v1571 = vpack.c.b16 %v1353, %v1352
    %v1572 = vpack.c.b16 %v1355, %v1354
    %v1573 = vpack.c.b16 %v1357, %v1356
    %v1574 = vpack.c.b16 %v1359, %v1358
    %v1575 = vpack.c.b16 %v1361, %v1360
    %v1576 = vpack.c.b16 %v1363, %v1362
    %v1577 = vpack.c.b16 %v1365, %v1364
    %v1578 = vpack.c.b16 %v1367, %v1366
    %v1579 = vpack.c.b16 %v1369, %v1368
    %v1580 = vpack.c.b16 %v1371, %v1370
    %v1581 = vpack.c.b16 %v1373, %v1372
    %v1582 = vpack.c.b16 %v1375, %v1374
    %v1583 = vpack.c.b16 %v1377, %v1376
    %v1584 = vpack.c.b16 %v1379, %v1378
    %v1585 = vpack.c.b16 %v1381, %v1380
    %v1586 = vpack.c.b16 %v1383, %v1382
    %v1587 = vpack.c.b16 %v1385, %v1384
    %v1588 = vpack.c.b16 %v1387, %v1386
    %v1589 = vpack.c.b16 %v1389, %v1388
    %v1590 = vpack.c.b16 %v1391, %v1390
    %v1591 = vpack.c.b16 %v1393, %v1392
    %v1592 = vpack.c.b16 %v1395, %v1394
    %v1593 = vpack.c.b16 %v1397, %v1396
    %vm1790 = vcmask 523264
    %v1792 = vsel %vm1790, %v589, 0
    %1794 = vmatprep.subr.bf16.mxu0 0
    %1795 = vmatpush1.bf16.msra.mxu0 %v1398
    %1796 = vmatprep.subr.bf16.mxu0 0
    %1797 = vmatpush1.bf16.msra.mxu0 %v1399
    %1798 = vmatprep.subr.bf16.mxu0 0
    %1799 = vmatpush1.bf16.msra.mxu0 %v1400
    %1800 = vmatprep.subr.bf16.mxu0 0
    %1801 = vmatpush1.bf16.msra.mxu0 %v1401
    %1802 = vmatprep.subr.bf16.mxu0 0
    %1803 = vmatpush1.bf16.msra.mxu0 %v1402
    %1804 = vmatprep.subr.bf16.mxu0 0
    %1805 = vmatpush1.bf16.msra.mxu0 %v1403
    %1806 = vmatprep.subr.bf16.mxu0 0
    %1807 = vmatpush1.bf16.msra.mxu0 %v1404
    %1808 = vmatprep.subr.bf16.mxu0 0
    %1809 = vmatpush1.bf16.msra.mxu0 %v1405
    %1810 = vmatprep.subr.bf16.mxu0 0
    %1811 = vmatpush1.bf16.msra.mxu0 %v1406
    %1812 = vmatprep.subr.bf16.mxu0 0
    %1813 = vmatpush1.bf16.msra.mxu0 %v1407
    %1814 = vmatprep.subr.bf16.mxu0 0
    %1815 = vmatpush1.bf16.msra.mxu0 %v1408
    %1816 = vmatprep.subr.bf16.mxu0 0
    %1817 = vmatpush1.bf16.msra.mxu0 %v1409
    %1818 = vmatprep.subr.bf16.mxu0 0
    %1819 = vmatpush1.bf16.msra.mxu0 %v1410
    %1820 = vmatprep.subr.bf16.mxu0 0
    %1821 = vmatpush1.bf16.msra.mxu0 %v1411
    %1822 = vmatprep.subr.bf16.mxu0 0
    %1823 = vmatpush1.bf16.msra.mxu0 %v1412
    %1824 = vmatprep.subr.bf16.mxu0 0
    %1825 = vmatpush1.bf16.msra.mxu0 %v1413
    %1826 = vmatprep.mubr.bf16.mxu0 %v466
    %1827 = vmatmul.mubr.bf16.gmra.mrb[0].mxu0 %v452
    %v1828 = vpop.f32.mrb[0].mxu0
    %v1829 = vadd.f32 %v423, %v1828
    %v1830 = vpop.f32.mrb[0].mxu0
    %v1831 = vpop.f32.mrb[0].mxu0
    %v1832 = vpop.f32.mrb[0].mxu0
    %1833 = vdwg.mxu0
    %1834 = vmatprep.subr.bf16.mxu0 0
    %1835 = vmatpush1.bf16.msra.mxu0 %v1414
    %1836 = vmatprep.subr.bf16.mxu0 0
    %1837 = vmatpush1.bf16.msra.mxu0 %v1415
    %1838 = vmatprep.subr.bf16.mxu0 0
    %1839 = vmatpush1.bf16.msra.mxu0 %v1416
    %1840 = vmatprep.subr.bf16.mxu0 0
    %1841 = vmatpush1.bf16.msra.mxu0 %v1417
    %1842 = vmatprep.subr.bf16.mxu0 0
    %1843 = vmatpush1.bf16.msra.mxu0 %v1418
    %1844 = vmatprep.subr.bf16.mxu0 0
    %1845 = vmatpush1.bf16.msra.mxu0 %v1419
    %1846 = vmatprep.subr.bf16.mxu0 0
    %1847 = vmatpush1.bf16.msra.mxu0 %v1420
    %1848 = vmatprep.subr.bf16.mxu0 0
    %1849 = vmatpush1.bf16.msra.mxu0 %v1421
    %1850 = vmatprep.subr.bf16.mxu0 0
    %1851 = vmatpush1.bf16.msra.mxu0 %v1422
    %1852 = vmatprep.subr.bf16.mxu0 0
    %1853 = vmatpush1.bf16.msra.mxu0 %v1423
    %1854 = vmatprep.subr.bf16.mxu0 0
    %1855 = vmatpush1.bf16.msra.mxu0 %v1424
    %1856 = vmatprep.subr.bf16.mxu0 0
    %1857 = vmatpush1.bf16.msra.mxu0 %v1425
    %1858 = vmatprep.subr.bf16.mxu0 0
    %1859 = vmatpush1.bf16.msra.mxu0 %v1426
    %1860 = vmatprep.subr.bf16.mxu0 0
    %1861 = vmatpush1.bf16.msra.mxu0 %v1427
    %1862 = vmatprep.subr.bf16.mxu0 0
    %1863 = vmatpush1.bf16.msra.mxu0 %v1428
    %1864 = vmatprep.subr.bf16.mxu0 0
    %1865 = vmatpush1.bf16.msra.mxu0 %v1429
    %1866 = vmatprep.mubr.bf16.mxu0 %v476
    %1867 = vmatmul.mubr.bf16.gmra.mrb[0].mxu0 %v474
    %v1868 = vpop.f32.mrb[0].mxu0
    %v1869 = vadd.f32 %v1829, %v1868
    %v1870 = vpop.f32.mrb[0].mxu0
    %v1871 = vpop.f32.mrb[0].mxu0
    %v1872 = vpop.f32.mrb[0].mxu0
    %1873 = vdwg.mxu0
    %1874 = vmatprep.subr.bf16.mxu0 0
    %1875 = vmatpush1.bf16.msra.mxu0 %v1430
    %1876 = vmatprep.subr.bf16.mxu0 0
    %1877 = vmatpush1.bf16.msra.mxu0 %v1431
    %1878 = vmatprep.subr.bf16.mxu0 0
    %1879 = vmatpush1.bf16.msra.mxu0 %v1432
    %1880 = vmatprep.subr.bf16.mxu0 0
    %1881 = vmatpush1.bf16.msra.mxu0 %v1433
    %1882 = vmatprep.subr.bf16.mxu0 0
    %1883 = vmatpush1.bf16.msra.mxu0 %v1434
    %1884 = vmatprep.subr.bf16.mxu0 0
    %1885 = vmatpush1.bf16.msra.mxu0 %v1435
    %1886 = vmatprep.subr.bf16.mxu0 0
    %1887 = vmatpush1.bf16.msra.mxu0 %v1436
    %1888 = vmatprep.subr.bf16.mxu0 0
    %1889 = vmatpush1.bf16.msra.mxu0 %v1437
    %1890 = vmatprep.subr.bf16.mxu0 0
    %1891 = vmatpush1.bf16.msra.mxu0 %v1438
    %1892 = vmatprep.subr.bf16.mxu0 0
    %1893 = vmatpush1.bf16.msra.mxu0 %v1439
    %1894 = vmatprep.subr.bf16.mxu0 0
    %1895 = vmatpush1.bf16.msra.mxu0 %v1440
    %1896 = vmatprep.subr.bf16.mxu0 0
    %1897 = vmatpush1.bf16.msra.mxu0 %v1441
    %1898 = vmatprep.subr.bf16.mxu0 0
    %1899 = vmatpush1.bf16.msra.mxu0 %v1442
    %1900 = vmatprep.subr.bf16.mxu0 0
    %1901 = vmatpush1.bf16.msra.mxu0 %v1443
    %1902 = vmatprep.subr.bf16.mxu0 0
    %1903 = vmatpush1.bf16.msra.mxu0 %v1444
    %1904 = vmatprep.subr.bf16.mxu0 0
    %1905 = vmatpush1.bf16.msra.mxu0 %v1445
    %1906 = vmatprep.mubr.bf16.mxu0 %v473
    %1907 = vmatmul.mubr.bf16.gmra.mrb[0].mxu0 %v459
    %v1908 = vpop.f32.mrb[0].mxu0
    %v1909 = vadd.f32 %v1869, %v1908
    %v1910 = vpop.f32.mrb[0].mxu0
    %v1911 = vpop.f32.mrb[0].mxu0
    %v1912 = vpop.f32.mrb[0].mxu0
    %1913 = vdwg.mxu0
    %1914 = vmatprep.subr.bf16.mxu0 0
    %1915 = vmatpush1.bf16.msra.mxu0 %v1446
    %1916 = vmatprep.subr.bf16.mxu0 0
    %1917 = vmatpush1.bf16.msra.mxu0 %v1447
    %1918 = vmatprep.subr.bf16.mxu0 0
    %1919 = vmatpush1.bf16.msra.mxu0 %v1448
    %1920 = vmatprep.subr.bf16.mxu0 0
    %1921 = vmatpush1.bf16.msra.mxu0 %v1449
    %1922 = vmatprep.subr.bf16.mxu0 0
    %1923 = vmatpush1.bf16.msra.mxu0 %v1450
    %1924 = vmatprep.subr.bf16.mxu0 0
    %1925 = vmatpush1.bf16.msra.mxu0 %v1451
    %1926 = vmatprep.subr.bf16.mxu0 0
    %1927 = vmatpush1.bf16.msra.mxu0 %v1452
    %1928 = vmatprep.subr.bf16.mxu0 0
    %1929 = vmatpush1.bf16.msra.mxu0 %v1453
    %1930 = vmatprep.subr.bf16.mxu0 0
    %1931 = vmatpush1.bf16.msra.mxu0 %v1454
    %1932 = vmatprep.subr.bf16.mxu0 0
    %1933 = vmatpush1.bf16.msra.mxu0 %v1455
    %1934 = vmatprep.subr.bf16.mxu0 0
    %1935 = vmatpush1.bf16.msra.mxu0 %v1456
    %1936 = vmatprep.subr.bf16.mxu0 0
    %1937 = vmatpush1.bf16.msra.mxu0 %v1457
    %1938 = vmatprep.subr.bf16.mxu0 0
    %1939 = vmatpush1.bf16.msra.mxu0 %v1458
    %1940 = vmatprep.subr.bf16.mxu0 0
    %1941 = vmatpush1.bf16.msra.mxu0 %v1459
    %1942 = vmatprep.subr.bf16.mxu0 0
    %1943 = vmatpush1.bf16.msra.mxu0 %v1460
    %1944 = vmatprep.subr.bf16.mxu0 0
    %1945 = vmatpush1.bf16.msra.mxu0 %v1461
    %1946 = vmatprep.mubr.bf16.mxu0 %v477
    %1947 = vmatmul.mubr.bf16.gmra.mrb[0].mxu0 %v475
    %v1948 = vpop.f32.mrb[0].mxu0
    %v1949 = vadd.f32 %v1909, %v1948
    %v1950 = vpop.f32.mrb[0].mxu0
    %v1951 = vpop.f32.mrb[0].mxu0
    %v1952 = vpop.f32.mrb[0].mxu0
    %1953 = vdwg.mxu0
    %1954 = vmatprep.subr.bf16.mxu0 0
    %1955 = vmatpush1.bf16.msra.mxu0 %v1462
    %1956 = vmatprep.subr.bf16.mxu0 0
    %1957 = vmatpush1.bf16.msra.mxu0 %v1463
    %1958 = vmatprep.subr.bf16.mxu0 0
    %1959 = vmatpush1.bf16.msra.mxu0 %v1464
    %1960 = vmatprep.subr.bf16.mxu0 0
    %1961 = vmatpush1.bf16.msra.mxu0 %v1465
    %1962 = vmatprep.subr.bf16.mxu0 0
    %1963 = vmatpush1.bf16.msra.mxu0 %v1466
    %1964 = vmatprep.subr.bf16.mxu0 0
    %1965 = vmatpush1.bf16.msra.mxu0 %v1467
    %1966 = vmatprep.subr.bf16.mxu0 0
    %1967 = vmatpush1.bf16.msra.mxu0 %v1468
    %1968 = vmatprep.subr.bf16.mxu0 0
    %1969 = vmatpush1.bf16.msra.mxu0 %v1469
    %1970 = vmatprep.subr.bf16.mxu0 0
    %1971 = vmatpush1.bf16.msra.mxu0 %v1470
    %1972 = vmatprep.subr.bf16.mxu0 0
    %1973 = vmatpush1.bf16.msra.mxu0 %v1471
    %1974 = vmatprep.subr.bf16.mxu0 0
    %1975 = vmatpush1.bf16.msra.mxu0 %v1472
    %1976 = vmatprep.subr.bf16.mxu0 0
    %1977 = vmatpush1.bf16.msra.mxu0 %v1473
    %1978 = vmatprep.subr.bf16.mxu0 0
    %1979 = vmatpush1.bf16.msra.mxu0 %v1474
    %1980 = vmatprep.subr.bf16.mxu0 0
    %1981 = vmatpush1.bf16.msra.mxu0 %v1475
    %1982 = vmatprep.subr.bf16.mxu0 0
    %1983 = vmatpush1.bf16.msra.mxu0 %v1476
    %1984 = vmatprep.subr.bf16.mxu0 0
    %1985 = vmatpush1.bf16.msra.mxu0 %v1477
    %1986 = vmatprep.mubr.bf16.mxu0 %v515
    %1987 = vmatmul.mubr.bf16.gmra.mrb[0].mxu0 %v501
    %v1988 = vpop.f32.mrb[0].mxu0
    %v1989 = vadd.f32 %v1949, %v1988
    %v1990 = vpop.f32.mrb[0].mxu0
    %v1991 = vpop.f32.mrb[0].mxu0
    %v1992 = vpop.f32.mrb[0].mxu0
    %1993 = vdwg.mxu0
    %1994 = vmatprep.subr.bf16.mxu0 0
    %1995 = vmatpush1.bf16.msra.mxu0 %v1478
    %1996 = vmatprep.subr.bf16.mxu0 0
    %1997 = vmatpush1.bf16.msra.mxu0 %v1479
    %1998 = vmatprep.subr.bf16.mxu0 0
    %1999 = vmatpush1.bf16.msra.mxu0 %v1480
    %2000 = vmatprep.subr.bf16.mxu0 0
    %2001 = vmatpush1.bf16.msra.mxu0 %v1481
    %2002 = vmatprep.subr.bf16.mxu0 0
    %2003 = vmatpush1.bf16.msra.mxu0 %v1482
    %2004 = vmatprep.subr.bf16.mxu0 0
    %2005 = vmatpush1.bf16.msra.mxu0 %v1483
    %2006 = vmatprep.subr.bf16.mxu0 0
    %2007 = vmatpush1.bf16.msra.mxu0 %v1484
    %2008 = vmatprep.subr.bf16.mxu0 0
    %2009 = vmatpush1.bf16.msra.mxu0 %v1485
    %2010 = vmatprep.subr.bf16.mxu0 0
    %2011 = vmatpush1.bf16.msra.mxu0 %v1486
    %2012 = vmatprep.subr.bf16.mxu0 0
    %2013 = vmatpush1.bf16.msra.mxu0 %v1487
    %2014 = vmatprep.subr.bf16.mxu0 0
    %2015 = vmatpush1.bf16.msra.mxu0 %v1488
    %2016 = vmatprep.subr.bf16.mxu0 0
    %2017 = vmatpush1.bf16.msra.mxu0 %v1489
    %2018 = vmatprep.subr.bf16.mxu0 0
    %2019 = vmatpush1.bf16.msra.mxu0 %v1490
    %2020 = vmatprep.subr.bf16.mxu0 0
    %2021 = vmatpush1.bf16.msra.mxu0 %v1491
    %2022 = vmatprep.subr.bf16.mxu0 0
    %2023 = vmatpush1.bf16.msra.mxu0 %v1492
    %2024 = vmatprep.subr.bf16.mxu0 0
    %2025 = vmatpush1.bf16.msra.mxu0 %v1493
    %2026 = vmatprep.mubr.bf16.mxu0 %v525
    %2027 = vmatmul.mubr.bf16.gmra.mrb[0].mxu0 %v523
    %v2028 = vpop.f32.mrb[0].mxu0
    %v2029 = vadd.f32 %v1989, %v2028
    %v2030 = vpop.f32.mrb[0].mxu0
    %v2031 = vpop.f32.mrb[0].mxu0
    %v2032 = vpop.f32.mrb[0].mxu0
    %2033 = vdwg.mxu0
    %2034 = vmatprep.subr.bf16.mxu0 0
    %2035 = vmatpush1.bf16.msra.mxu0 %v1494
    %2036 = vmatprep.subr.bf16.mxu0 0
    %2037 = vmatpush1.bf16.msra.mxu0 %v1495
    %2038 = vmatprep.subr.bf16.mxu0 0
    %2039 = vmatpush1.bf16.msra.mxu0 %v1496
    %2040 = vmatprep.subr.bf16.mxu0 0
    %2041 = vmatpush1.bf16.msra.mxu0 %v1497
    %2042 = vmatprep.subr.bf16.mxu0 0
    %2043 = vmatpush1.bf16.msra.mxu0 %v1498
    %2044 = vmatprep.subr.bf16.mxu0 0
    %2045 = vmatpush1.bf16.msra.mxu0 %v1499
    %2046 = vmatprep.subr.bf16.mxu0 0
    %2047 = vmatpush1.bf16.msra.mxu0 %v1500
    %2048 = vmatprep.subr.bf16.mxu0 0
    %2049 = vmatpush1.bf16.msra.mxu0 %v1501
    %2050 = vmatprep.subr.bf16.mxu0 0
    %2051 = vmatpush1.bf16.msra.mxu0 %v1502
    %2052 = vmatprep.subr.bf16.mxu0 0
    %2053 = vmatpush1.bf16.msra.mxu0 %v1503
    %2054 = vmatprep.subr.bf16.mxu0 0
    %2055 = vmatpush1.bf16.msra.mxu0 %v1504
    %2056 = vmatprep.subr.bf16.mxu0 0
    %2057 = vmatpush1.bf16.msra.mxu0 %v1505
    %2058 = vmatprep.subr.bf16.mxu0 0
    %2059 = vmatpush1.bf16.msra.mxu0 %v1506
    %2060 = vmatprep.subr.bf16.mxu0 0
    %2061 = vmatpush1.bf16.msra.mxu0 %v1507
    %2062 = vmatprep.subr.bf16.mxu0 0
    %2063 = vmatpush1.bf16.msra.mxu0 %v1508
    %2064 = vmatprep.subr.bf16.mxu0 0
    %2065 = vmatpush1.bf16.msra.mxu0 %v1509
    %2066 = vmatprep.mubr.bf16.mxu0 %v522
    %2067 = vmatmul.mubr.bf16.gmra.mrb[0].mxu0 %v508
    %v2068 = vpop.f32.mrb[0].mxu0
    %v2069 = vadd.f32 %v2029, %v2068
    %v2070 = vpop.f32.mrb[0].mxu0
    %v2071 = vpop.f32.mrb[0].mxu0
    %v2072 = vpop.f32.mrb[0].mxu0
    %2073 = vdwg.mxu0
    %2074 = vmatprep.subr.bf16.mxu0 0
    %2075 = vmatpush1.bf16.msra.mxu0 %v1510
    %2076 = vmatprep.subr.bf16.mxu0 0
    %2077 = vmatpush1.bf16.msra.mxu0 %v1511
    %2078 = vmatprep.subr.bf16.mxu0 0
    %2079 = vmatpush1.bf16.msra.mxu0 %v1512
    %2080 = vmatprep.subr.bf16.mxu0 0
    %2081 = vmatpush1.bf16.msra.mxu0 %v1513
    %2082 = vmatprep.subr.bf16.mxu0 0
    %2083 = vmatpush1.bf16.msra.mxu0 %v1514
    %2084 = vmatprep.subr.bf16.mxu0 0
    %2085 = vmatpush1.bf16.msra.mxu0 %v1515
    %2086 = vmatprep.subr.bf16.mxu0 0
    %2087 = vmatpush1.bf16.msra.mxu0 %v1516
    %2088 = vmatprep.subr.bf16.mxu0 0
    %2089 = vmatpush1.bf16.msra.mxu0 %v1517
    %2090 = vmatprep.subr.bf16.mxu0 0
    %2091 = vmatpush1.bf16.msra.mxu0 %v1518
    %2092 = vmatprep.subr.bf16.mxu0 0
    %2093 = vmatpush1.bf16.msra.mxu0 %v1519
    %2094 = vmatprep.subr.bf16.mxu0 0
    %2095 = vmatpush1.bf16.msra.mxu0 %v1520
    %2096 = vmatprep.subr.bf16.mxu0 0
    %2097 = vmatpush1.bf16.msra.mxu0 %v1521
    %2098 = vmatprep.subr.bf16.mxu0 0
    %2099 = vmatpush1.bf16.msra.mxu0 %v1522
    %2100 = vmatprep.subr.bf16.mxu0 0
    %2101 = vmatpush1.bf16.msra.mxu0 %v1523
    %2102 = vmatprep.subr.bf16.mxu0 0
    %2103 = vmatpush1.bf16.msra.mxu0 %v1524
    %2104 = vmatprep.subr.bf16.mxu0 0
    %2105 = vmatpush1.bf16.msra.mxu0 %v1525
    %2106 = vmatprep.mubr.bf16.mxu0 %v526
    %2107 = vmatmul.mubr.bf16.gmra.mrb[0].mxu0 %v524
    %v2108 = vpop.f32.mrb[0].mxu0
    %v2109 = vadd.f32 %v2069, %v2108
    %v2110 = vpop.f32.mrb[0].mxu0
    %v2111 = vpop.f32.mrb[0].mxu0
    %v2112 = vpop.f32.mrb[0].mxu0
    %2113 = vdwg.mxu0
    %2114 = vmatprep.subr.bf16.mxu0 0
    %2115 = vmatpush1.bf16.msra.mxu0 %v1526
    %2116 = vmatprep.subr.bf16.mxu0 0
    %2117 = vmatpush1.bf16.msra.mxu0 %v1527
    %2118 = vmatprep.subr.bf16.mxu0 0
    %2119 = vmatpush1.bf16.msra.mxu0 %v1528
    %2120 = vmatprep.subr.bf16.mxu0 0
    %2121 = vmatpush1.bf16.msra.mxu0 %v1529
    %2122 = vmatprep.subr.bf16.mxu0 0
    %2123 = vmatpush1.bf16.msra.mxu0 %v1530
    %2124 = vmatprep.subr.bf16.mxu0 0
    %2125 = vmatpush1.bf16.msra.mxu0 %v1531
    %2126 = vmatprep.subr.bf16.mxu0 0
    %2127 = vmatpush1.bf16.msra.mxu0 %v1532
    %2128 = vmatprep.subr.bf16.mxu0 0
    %2129 = vmatpush1.bf16.msra.mxu0 %v1533
    %2130 = vmatprep.subr.bf16.mxu0 0
    %2131 = vmatpush1.bf16.msra.mxu0 %v1534
    %2132 = vmatprep.subr.bf16.mxu0 0
    %2133 = vmatpush1.bf16.msra.mxu0 %v1535
    %2134 = vmatprep.subr.bf16.mxu0 0
    %2135 = vmatpush1.bf16.msra.mxu0 %v1536
    %2136 = vmatprep.subr.bf16.mxu0 0
    %2137 = vmatpush1.bf16.msra.mxu0 %v1537
    %2138 = vmatprep.subr.bf16.mxu0 0
    %2139 = vmatpush1.bf16.msra.mxu0 %v1538
    %2140 = vmatprep.subr.bf16.mxu0 0
    %2141 = vmatpush1.bf16.msra.mxu0 %v1539
    %2142 = vmatprep.subr.bf16.mxu0 0
    %2143 = vmatpush1.bf16.msra.mxu0 %v1540
    %2144 = vmatprep.subr.bf16.mxu0 0
    %2145 = vmatpush1.bf16.msra.mxu0 %v1541
    %2146 = vmatprep.mubr.bf16.mxu0 %v564
    %2147 = vmatmul.mubr.bf16.gmra.mrb[0].mxu0 %v550
    %v2148 = vpop.f32.mrb[0].mxu0
    %v2149 = vadd.f32 %v2109, %v2148
    %v2150 = vpop.f32.mrb[0].mxu0
    %v2151 = vpop.f32.mrb[0].mxu0
    %v2152 = vpop.f32.mrb[0].mxu0
    %2153 = vdwg.mxu0
    %2154 = vmatprep.subr.bf16.mxu0 0
    %2155 = vmatpush1.bf16.msra.mxu0 %v1542
    %2156 = vmatprep.subr.bf16.mxu0 0
    %2157 = vmatpush1.bf16.msra.mxu0 %v1543
    %2158 = vmatprep.subr.bf16.mxu0 0
    %2159 = vmatpush1.bf16.msra.mxu0 %v1544
    %2160 = vmatprep.subr.bf16.mxu0 0
    %2161 = vmatpush1.bf16.msra.mxu0 %v1545
    %2162 = vmatprep.subr.bf16.mxu0 0
    %2163 = vmatpush1.bf16.msra.mxu0 %v1546
    %2164 = vmatprep.subr.bf16.mxu0 0
    %2165 = vmatpush1.bf16.msra.mxu0 %v1547
    %2166 = vmatprep.subr.bf16.mxu0 0
    %2167 = vmatpush1.bf16.msra.mxu0 %v1548
    %2168 = vmatprep.subr.bf16.mxu0 0
    %2169 = vmatpush1.bf16.msra.mxu0 %v1549
    %2170 = vmatprep.subr.bf16.mxu0 0
    %2171 = vmatpush1.bf16.msra.mxu0 %v1550
    %2172 = vmatprep.subr.bf16.mxu0 0
    %2173 = vmatpush1.bf16.msra.mxu0 %v1551
    %2174 = vmatprep.subr.bf16.mxu0 0
    %2175 = vmatpush1.bf16.msra.mxu0 %v1552
    %2176 = vmatprep.subr.bf16.mxu0 0
    %2177 = vmatpush1.bf16.msra.mxu0 %v1553
    %2178 = vmatprep.subr.bf16.mxu0 0
    %2179 = vmatpush1.bf16.msra.mxu0 %v1554
    %2180 = vmatprep.subr.bf16.mxu0 0
    %2181 = vmatpush1.bf16.msra.mxu0 %v1555
    %2182 = vmatprep.subr.bf16.mxu0 0
    %2183 = vmatpush1.bf16.msra.mxu0 %v1556
    %2184 = vmatprep.subr.bf16.mxu0 0
    %2185 = vmatpush1.bf16.msra.mxu0 %v1557
    %2186 = vmatprep.mubr.bf16.mxu0 %v574
    %2187 = vmatmul.mubr.bf16.gmra.mrb[0].mxu0 %v572
    %v2188 = vpop.f32.mrb[0].mxu0
    %v2189 = vadd.f32 %v2149, %v2188
    %v2190 = vpop.f32.mrb[0].mxu0
    %v2191 = vpop.f32.mrb[0].mxu0
    %v2192 = vpop.f32.mrb[0].mxu0
    %2193 = vdwg.mxu0
    %2194 = vmatprep.subr.bf16.mxu0 0
    %2195 = vmatpush1.bf16.msra.mxu0 %v1558
    %2196 = vmatprep.subr.bf16.mxu0 0
    %2197 = vmatpush1.bf16.msra.mxu0 %v1559
    %2198 = vmatprep.subr.bf16.mxu0 0
    %2199 = vmatpush1.bf16.msra.mxu0 %v1560
    %2200 = vmatprep.subr.bf16.mxu0 0
    %2201 = vmatpush1.bf16.msra.mxu0 %v1561
    %2202 = vmatprep.subr.bf16.mxu0 0
    %2203 = vmatpush1.bf16.msra.mxu0 %v1562
    %2204 = vmatprep.subr.bf16.mxu0 0
    %2205 = vmatpush1.bf16.msra.mxu0 %v1563
    %2206 = vmatprep.subr.bf16.mxu0 0
    %2207 = vmatpush1.bf16.msra.mxu0 %v1564
    %2208 = vmatprep.subr.bf16.mxu0 0
    %2209 = vmatpush1.bf16.msra.mxu0 %v1565
    %2210 = vmatprep.subr.bf16.mxu0 0
    %2211 = vmatpush1.bf16.msra.mxu0 %v1566
    %2212 = vmatprep.subr.bf16.mxu0 0
    %2213 = vmatpush1.bf16.msra.mxu0 %v1567
    %2214 = vmatprep.subr.bf16.mxu0 0
    %2215 = vmatpush1.bf16.msra.mxu0 %v1568
    %2216 = vmatprep.subr.bf16.mxu0 0
    %2217 = vmatpush1.bf16.msra.mxu0 %v1569
    %2218 = vmatprep.subr.bf16.mxu0 0
    %2219 = vmatpush1.bf16.msra.mxu0 %v1570
    %2220 = vmatprep.subr.bf16.mxu0 0
    %2221 = vmatpush1.bf16.msra.mxu0 %v1571
    %2222 = vmatprep.subr.bf16.mxu0 0
    %2223 = vmatpush1.bf16.msra.mxu0 %v1572
    %2224 = vmatprep.subr.bf16.mxu0 0
    %2225 = vmatpush1.bf16.msra.mxu0 %v1573
    %2226 = vmatprep.mubr.bf16.mxu0 %v571
    %2227 = vmatmul.mubr.bf16.gmra.mrb[0].mxu0 %v557
    %v2228 = vpop.f32.mrb[0].mxu0
    %v2229 = vadd.f32 %v2189, %v2228
    %v2230 = vpop.f32.mrb[0].mxu0
    %v2231 = vpop.f32.mrb[0].mxu0
    %v2232 = vpop.f32.mrb[0].mxu0
    %2233 = vdwg.mxu0
    %2234 = vmatprep.subr.bf16.mxu0 0
    %2235 = vmatpush1.bf16.msra.mxu0 %v1574
    %2236 = vmatprep.subr.bf16.mxu0 0
    %2237 = vmatpush1.bf16.msra.mxu0 %v1575
    %2238 = vmatprep.subr.bf16.mxu0 0
    %2239 = vmatpush1.bf16.msra.mxu0 %v1576
    %2240 = vmatprep.subr.bf16.mxu0 0
    %2241 = vmatpush1.bf16.msra.mxu0 %v1577
    %2242 = vmatprep.subr.bf16.mxu0 0
    %2243 = vmatpush1.bf16.msra.mxu0 %v1578
    %2244 = vmatprep.subr.bf16.mxu0 0
    %2245 = vmatpush1.bf16.msra.mxu0 %v1579
    %2246 = vmatprep.subr.bf16.mxu0 0
    %2247 = vmatpush1.bf16.msra.mxu0 %v1580
    %2248 = vmatprep.subr.bf16.mxu0 0
    %2249 = vmatpush1.bf16.msra.mxu0 %v1581
    %2250 = vmatprep.subr.bf16.mxu0 0
    %2251 = vmatpush1.bf16.msra.mxu0 %v1582
    %2252 = vmatprep.subr.bf16.mxu0 0
    %2253 = vmatpush1.bf16.msra.mxu0 %v1583
    %2254 = vmatprep.subr.bf16.mxu0 0
    %2255 = vmatpush1.bf16.msra.mxu0 %v1584
    %2256 = vmatprep.subr.bf16.mxu0 0
    %2257 = vmatpush1.bf16.msra.mxu0 %v1585
    %2258 = vmatprep.subr.bf16.mxu0 0
    %2259 = vmatpush1.bf16.msra.mxu0 %v1586
    %2260 = vmatprep.subr.bf16.mxu0 0
    %2261 = vmatpush1.bf16.msra.mxu0 %v1587
    %2262 = vmatprep.subr.bf16.mxu0 0
    %2263 = vmatpush1.bf16.msra.mxu0 %v1588
    %2264 = vmatprep.subr.bf16.mxu0 0
    %2265 = vmatpush1.bf16.msra.mxu0 %v1589
    %2266 = vmatprep.mubr.bf16.mxu0 %v575
    %2267 = vmatmul.mubr.bf16.gmra.mrb[0].mxu0 %v573
    %v2268 = vpop.f32.mrb[0].mxu0
    %v2269 = vadd.f32 %v2229, %v2268
    %v2270 = vpop.f32.mrb[0].mxu0
    %v2271 = vpop.f32.mrb[0].mxu0
    %v2272 = vpop.f32.mrb[0].mxu0
    %2273 = vdwg.mxu0
    %2274 = vmatprep.subr.bf16.mxu0 0
    %2275 = vmatpush1.bf16.msra.mxu0 %v1590
    %2276 = vmatprep.subr.bf16.mxu0 0
    %2277 = vmatpush1.bf16.msra.mxu0 %v1591
    %2278 = vmatprep.subr.bf16.mxu0 0
    %2279 = vmatpush1.bf16.msra.mxu0 %v1592
    %2280 = vmatprep.subr.bf16.mxu0 0
    %2281 = vmatpush1.bf16.msra.mxu0 %v1593
    %2282 = vmatprep.subr.bf16.mxu0 0
    %2283 = vmatpush1.bf16.msra.mxu0 0
    %2284 = vmatprep.subr.bf16.mxu0 0
    %2285 = vmatpush1.bf16.msra.mxu0 0
    %2286 = vmatprep.subr.bf16.mxu0 0
    %2287 = vmatpush1.bf16.msra.mxu0 0
    %2288 = vmatprep.subr.bf16.mxu0 0
    %2289 = vmatpush1.bf16.msra.mxu0 0
    %2290 = vmatprep.subr.bf16.mxu0 0
    %2291 = vmatpush1.bf16.msra.mxu0 0
    %2292 = vmatprep.subr.bf16.mxu0 0
    %2293 = vmatpush1.bf16.msra.mxu0 0
    %2294 = vmatprep.subr.bf16.mxu0 0
    %2295 = vmatpush1.bf16.msra.mxu0 0
    %2296 = vmatprep.subr.bf16.mxu0 0
    %2297 = vmatpush1.bf16.msra.mxu0 0
    %2298 = vmatprep.subr.bf16.mxu0 0
    %2299 = vmatpush1.bf16.msra.mxu0 0
    %2300 = vmatprep.subr.bf16.mxu0 0
    %2301 = vmatpush1.bf16.msra.mxu0 0
    %2302 = vmatprep.subr.bf16.mxu0 0
    %2303 = vmatpush1.bf16.msra.mxu0 0
    %2304 = vmatprep.subr.bf16.mxu0 0
    %2305 = vmatpush1.bf16.msra.mxu0 0
    %2306 = vmatprep.mubr.bf16.mxu0 0
    %2307 = vmatmul.mubr.bf16.gmra.mrb[0].mxu0 %v1792
    %v2308 = vpop.f32.mrb[0].mxu0
    %v2309 = vadd.f32 %v2269, %v2308
    %v2310 = vpop.f32.mrb[0].mxu0
    %v2311 = vpop.f32.mrb[0].mxu0
    %v2312 = vpop.f32.mrb[0].mxu0
    %2313 = vdwg.mxu0
    %v2314 = vmax.f32 %v2309, 0.0
    %v2315 = vpack.c.bf16 %v2314, %v2314
    %v2316 = vld [vmem:[%s3] sm:$0xf]
    %v2317 = vld [vmem:[%s3 + $0x4] sm:$0xf]
    %v2318 = vld [vmem:[%s3 + $0x8] sm:$0xf]
    %v2319 = vld [vmem:[%s3 + $0xc] sm:$0xf]
    %v2320 = vld [vmem:[%s3 + $0x10] sm:$0xf]
    %v2321 = vld [vmem:[%s3 + $0x14] sm:$0xf]
    %v2322 = vld [vmem:[%s3 + $0x18] sm:$0xf]
    %v2323 = vld [vmem:[%s3 + $0x1c] sm:$0xf]
    %v2324 = vld [vmem:[%s3 + $0x20] sm:$0xf]
    %v2325 = vld [vmem:[%s3 + $0x24] sm:$0xf]
    %v2326 = vld [vmem:[%s3 + $0x28] sm:$0xf]
    %v2327 = vld [vmem:[%s3 + $0x2c] sm:$0xf]
    %v2328 = vld [vmem:[%s3 + $0x30] sm:$0xf]
    %v2329 = vld [vmem:[%s3 + $0x34] sm:$0xf]
    %v2330 = vld [vmem:[%s3 + $0x38] sm:$0xf]
    %v2331 = vld [vmem:[%s3 + $0x3c] sm:$0xf]
    %v2332 = vld [vmem:[%s4] sm:$0x1]
    %v2334 = vlaneseq
    %v2335 = vshrl.u32 %v2334, 7
    %v2336 = vsub.s32 0, %v2335
    %v2337 = vrot.slane %v2332, %v2336
    %v2355 = vunpack.c.l.b16 %v2316
    %v2356 = vunpack.c.l.b16 %v2317
    %v2357 = vunpack.c.l.b16 %v2318
    %v2358 = vunpack.c.l.b16 %v2319
    %v2359 = vunpack.c.l.b16 %v2320
    %v2360 = vunpack.c.l.b16 %v2321
    %v2361 = vunpack.c.l.b16 %v2322
    %v2362 = vunpack.c.l.b16 %v2323
    %v2363 = vunpack.c.l.b16 %v2324
    %v2364 = vunpack.c.l.b16 %v2325
    %v2365 = vunpack.c.l.b16 %v2326
    %v2366 = vunpack.c.l.b16 %v2327
    %v2367 = vunpack.c.l.b16 %v2328
    %v2368 = vunpack.c.l.b16 %v2329
    %v2369 = vunpack.c.l.b16 %v2330
    %v2370 = vunpack.c.l.b16 %v2331
    %v2371 = vpack.c.b16 %v2356, %v2355
    %v2372 = vpack.c.b16 %v2358, %v2357
    %v2373 = vpack.c.b16 %v2360, %v2359
    %v2374 = vpack.c.b16 %v2362, %v2361
    %v2375 = vpack.c.b16 %v2364, %v2363
    %v2376 = vpack.c.b16 %v2366, %v2365
    %v2377 = vpack.c.b16 %v2368, %v2367
    %v2378 = vpack.c.b16 %v2370, %v2369
    %2387 = vmatprep.subr.bf16.mxu0 0
    %2388 = vmatpush1.bf16.msra.mxu0 %v2371
    %2389 = vmatprep.subr.bf16.mxu0 0
    %2390 = vmatpush1.bf16.msra.mxu0 %v2372
    %2391 = vmatprep.subr.bf16.mxu0 0
    %2392 = vmatpush1.bf16.msra.mxu0 %v2373
    %2393 = vmatprep.subr.bf16.mxu0 0
    %2394 = vmatpush1.bf16.msra.mxu0 %v2374
    %2395 = vmatprep.subr.bf16.mxu0 0
    %2396 = vmatpush1.bf16.msra.mxu0 %v2375
    %2397 = vmatprep.subr.bf16.mxu0 0
    %2398 = vmatpush1.bf16.msra.mxu0 %v2376
    %2399 = vmatprep.subr.bf16.mxu0 0
    %2400 = vmatpush1.bf16.msra.mxu0 %v2377
    %2401 = vmatprep.subr.bf16.mxu0 0
    %2402 = vmatpush1.bf16.msra.mxu0 %v2378
    %2403 = vmatprep.subr.bf16.mxu0 0
    %2404 = vmatpush1.bf16.msra.mxu0 0
    %2405 = vmatprep.subr.bf16.mxu0 0
    %2406 = vmatpush1.bf16.msra.mxu0 0
    %2407 = vmatprep.subr.bf16.mxu0 0
    %2408 = vmatpush1.bf16.msra.mxu0 0
    %2409 = vmatprep.subr.bf16.mxu0 0
    %2410 = vmatpush1.bf16.msra.mxu0 0
    %2411 = vmatprep.subr.bf16.mxu0 0
    %2412 = vmatpush1.bf16.msra.mxu0 0
    %2413 = vmatprep.subr.bf16.mxu0 0
    %2414 = vmatpush1.bf16.msra.mxu0 0
    %2415 = vmatprep.subr.bf16.mxu0 0
    %2416 = vmatpush1.bf16.msra.mxu0 0
    %2417 = vmatprep.subr.bf16.mxu0 0
    %2418 = vmatpush1.bf16.msra.mxu0 0
    %2419 = vmatprep.mubr.bf16.mxu0 0
    %2420 = vmatmul.mubr.bf16.gmra.mrb[0].mxu0 %v2315
    %v2421 = vpop.f32.mrb[0].mxu0
    %v2422 = vadd.f32 %v2337, %v2421
    %v2423 = vpop.f32.mrb[0].mxu0
    %v2424 = vpop.f32.mrb[0].mxu0
    %v2425 = vpop.f32.mrb[0].mxu0
    %2426 = vdwg.mxu0
    %vm2427 = vcmask 74752
    %2428 = vst.msk [vmem:[#allocation2] sm:$0x3] %vm2427, %v2422
    // Predicated region
    $region22: #{cnn_forward.5} parent=1 // pred_check
      _
    $region23: #{cnn_forward.5} parent=1 // pred_check_branch
      %2430 = sbr.rel (0) target = $region25
    $region24: #{cnn_forward.5} parent=1 // pred_region
      %s2432 = ssub.s32 32, 32
      %2433 = vsyncadd [#allocation3], %s2432
      %s2435 = sshll.u32 [#allocation2], 4
      %s2436 = int_to_ptr.vmem [resolvable:$true] %s2435
      %2438 = dma.vmem_to_hbm [thread:$0]  %s2436, 32, %s5, [#allocation3]
    $region25: #{cnn_forward.5} parent=1 // pred_fallthru
      _
    // Predicated region
    $region26: #{cnn_forward.5} parent=1 // pred_check
      _
    $region27: #{cnn_forward.5} parent=1 // pred_check_branch
      %2440 = sbr.rel (0) target = $region29
    $region28: #{cnn_forward.5} parent=1 // pred_region
      %2441 = dma.done [#allocation3], 32
    $region29: #{cnn_forward.5} parent=1 // pred_fallthru
      _
    %2442 = vsyncpa [#allocation3], 1

</llo_original>
